<compile_context>
chip_gen: v7x
topology: tpu7x:2x2x1
jax: 0.10.0
libtpu: 0.0.40
codegen_flags: <defaults>
</compile_context>

<pallas_src>
import math

import jax
import jax.numpy as jnp
from jax.experimental import pallas as pl
from jax.experimental.pallas import tpu as pltpu

# ----------------------------- config ("opt") -------------------------------
VOCAB = 100
MAX_POS = 64
TEXT_DIM = 32            # synthetic bert hidden size (real bert-base: 768)
TEXT_HEADS = 2
TEXT_LAYERS = 1
IMG_DIM = 32             # synthetic resnet output channels (real resnet-50: 2048)
PATCH = 4                # patchify-conv kernel/stride of the image stand-in
K_CONV = 3 * PATCH * PATCH
TRAN_DIM = 64            # opt.tran_dim
NHEADS = TRAN_DIM // 64  # module's head rule: tran_dim // 64
assert NHEADS >= 1, "opt.tran_dim must be >= 64 (num heads = tran_dim // 64)"
TRAN_LAYERS = 1          # opt.tran_num_layers
IMG_LAYERS = 1           # opt.image_num_layers
ACT = "gelu"             # opt.activate_fun
LN_EPS = 1e-12           # HF BERT/Roberta layer_norm_eps

# packed "proj" weight slab row offsets (all multiples of 8)
_OFF_CONV = 0
_OFF_TC = _OFF_CONV + K_CONV
_OFF_IC = _OFF_TC + TEXT_DIM
_OFF_CC = _OFF_IC + IMG_DIM
_OFF_A1 = _OFF_CC + IMG_DIM
_PROJ_ROWS = _OFF_A1 + TRAN_DIM


# ----------------------------- in-kernel math --------------------------------
def _erf(x):
    # Abramowitz & Stegun 7.1.26 polynomial (|err| < 1.5e-7) -> exact-erf GELU.
    a1, a2, a3, a4, a5 = 0.254829592, -0.284496736, 1.421413741, -1.453152027, 1.061405429
    pp = 0.3275911
    s = jnp.where(x >= 0.0, 1.0, -1.0)
    ax = jnp.abs(x)
    t = 1.0 / (1.0 + pp * ax)
    poly = ((((a5 * t + a4) * t + a3) * t + a2) * t + a1) * t
    return s * (1.0 - poly * jnp.exp(-ax * ax))


def _activate(x, kind):
    if kind == "gelu":
        return x * 0.5 * (1.0 + _erf(x * (1.0 / math.sqrt(2.0))))
    if kind == "relu":
        return jnp.maximum(x, 0.0)
    return x


def _ln(x, g, b, eps=LN_EPS):
    mu = jnp.mean(x, axis=-1, keepdims=True)
    var = jnp.mean(jnp.square(x - mu), axis=-1, keepdims=True)
    return (x - mu) * jax.lax.rsqrt(var + eps) * g + b


def _softmax_last(s):
    # exact division (parity with torch.softmax inside the encoder layers)
    s = s - jnp.max(s, axis=-1, keepdims=True)
    e = jnp.exp(s)
    return e / jnp.sum(e, axis=-1, keepdims=True)


def _mm(x3, w, b=None):
    """(TB, S, D) @ (D, E) [+ (1, E)] -> (TB, S, E); leading dims merged for MXU."""
    tb, s, d = x3.shape
    y = jnp.dot(x3.reshape(tb * s, d), w, preferred_element_type=jnp.float32)
    if b is not None:
        y = y + b
    return y.reshape(tb, s, w.shape[1])


def _encoder_layer(h, ext_mask, mats_ref, vecs_ref, d, nheads):
    """One HF-BERT/Roberta post-LN encoder layer (eval), batched over TB.

    h: (TB, S, d); ext_mask: additive mask broadcastable to (TB, S, S) or None.
    mats_ref: (7d, 4d) packed [qkv_w | ao_w | i_w | fo_w]; vecs_ref: (8, 4d)."""
    f = 4 * d
    qkv_w = mats_ref[0:d, 0:3 * d]
    ao_w = mats_ref[d:2 * d, 0:d]
    i_w = mats_ref[2 * d:3 * d, 0:f]
    fo_w = mats_ref[3 * d:3 * d + f, 0:d]
    qkv_b = vecs_ref[0:1, 0:3 * d]
    ao_b = vecs_ref[1:2, 0:d]
    ln1_g = vecs_ref[2:3, 0:d]
    ln1_b = vecs_ref[3:4, 0:d]
    i_b = vecs_ref[4:5, 0:f]
    fo_b = vecs_ref[5:6, 0:d]
    ln2_g = vecs_ref[6:7, 0:d]
    ln2_b = vecs_ref[7:8, 0:d]

    dh = d // nheads
    scale = 1.0 / math.sqrt(dh)

    qkv = _mm(h, qkv_w, qkv_b)                       # (TB, S, 3d)
    q = qkv[..., 0:d]
    k = qkv[..., d:2 * d]
    v = qkv[..., 2 * d:3 * d]

    ctxs = []
    for hd in range(nheads):
        lo, hi = hd * dh, (hd + 1) * dh
        s = jnp.einsum('bqd,bkd->bqk', q[..., lo:hi], k[..., lo:hi],
                       preferred_element_type=jnp.float32) * scale
        if ext_mask is not None:
            s = s + ext_mask
        p = _softmax_last(s)
        ctxs.append(jnp.einsum('bqk,bkd->bqd', p, v[..., lo:hi],
                               preferred_element_type=jnp.float32))
    ctx = ctxs[0] if nheads == 1 else jnp.concatenate(ctxs, axis=-1)

    attn_out = _mm(ctx, ao_w, ao_b)
    h1 = _ln(attn_out + h, ln1_g, ln1_b)
    inter = _activate(_mm(h1, i_w, i_b), "gelu")     # BERT FFN act
    ffn = _mm(inter, fo_w, fo_b)
    return _ln(ffn + h1, ln2_g, ln2_b)


# ------------------------------- fused kernel ---------------------------------
def _fuse_kernel(emb_ref, patch_ref, mask_ref,
                 tl_mats_ref, tl_vecs_ref, bl_mats_ref, bl_vecs_ref,
                 proj_ref, misc_ref, o_ref):
    """Whole forward (conv stand-in + text/image/fusion encoders + 'att' pool)
    for TB batch elements per grid step."""
    tb, S_t, _ = emb_ref.shape
    n_patch = patch_ref.shape[1]
    S_pad = mask_ref.shape[2]
    S_img = n_patch + 1
    S_img_pad = S_pad - S_t

    # ----- unpack non-layer weights (static ref-view slices) -----
    conv_w = proj_ref[_OFF_CONV:_OFF_CONV + K_CONV, 0:IMG_DIM]
    tc_w = proj_ref[_OFF_TC:_OFF_TC + TEXT_DIM, 0:TRAN_DIM]
    ic_w = proj_ref[_OFF_IC:_OFF_IC + IMG_DIM, 0:TRAN_DIM]
    cc_w = proj_ref[_OFF_CC:_OFF_CC + IMG_DIM, 0:TRAN_DIM]
    a1_w = proj_ref[_OFF_A1:_OFF_A1 + TRAN_DIM, 0:TRAN_DIM // 2]
    conv_b = misc_ref[0:1, 0:IMG_DIM]
    emb_g = misc_ref[1:2, 0:TEXT_DIM]
    emb_b = misc_ref[2:3, 0:TEXT_DIM]
    tc_b = misc_ref[3:4, 0:TRAN_DIM]
    ic_b = misc_ref[4:5, 0:TRAN_DIM]
    cc_b = misc_ref[5:6, 0:TRAN_DIM]
    a1_b = misc_ref[6:7, 0:TRAN_DIM // 2]
    a2_w = misc_ref[7:8, 0:TRAN_DIM // 2]
    a2_b = misc_ref[7:8, TRAN_DIM // 2:TRAN_DIM // 2 + 1]

    # ----- image backbone stand-in: patchify conv + relu + avg-pool cls -----
    feat = jnp.maximum(_mm(patch_ref[...], conv_w, conv_b), 0.0)      # (TB, P, 32)
    img_cls = jnp.mean(feat, axis=1, keepdims=True)                   # (TB, 1, 32)

    # ----- image change projections -> padded 24-row image block -----
    img_c = _activate(_mm(img_cls, cc_w, cc_b), ACT)                  # (TB, 1, 64)
    img_e = _activate(_mm(feat, ic_w, ic_b), ACT)                     # (TB, P, 64)
    pieces = [img_c, img_e]
    if S_img_pad > S_img:
        pieces.append(jnp.zeros((tb, S_img_pad - S_img, TRAN_DIM), jnp.float32))
    img = jnp.concatenate(pieces, axis=1)                             # (TB, 24, 64)

    # image RobertaEncoder: reference runs with attention_mask=None, so only
    # the zero-padded rows are masked (numerically identical for real rows).
    col = jax.lax.broadcasted_iota(jnp.int32, (1, S_img_pad), 1)
    ext_img = jnp.where(col < S_img, 0.0, -10000.0)                   # (1, 24)
    for l in range(IMG_LAYERS):
        img = _encoder_layer(img, ext_img, bl_mats_ref.at[l], bl_vecs_ref.at[l],
                             TRAN_DIM, NHEADS)

    # ----- text branch: embedding LN -> text encoder -> text_change -----
    h = _ln(emb_ref[...], emb_g, emb_b)                               # (TB, S_t, 32)
    ext_t = (1.0 - mask_ref[:, 0:1, 0:S_t]) * -10000.0                # (TB, 1, S_t)
    for l in range(TEXT_LAYERS):
        h = _encoder_layer(h, ext_t, tl_mats_ref.at[l], tl_vecs_ref.at[l],
                           TEXT_DIM, TEXT_HEADS)
    text_init = _activate(_mm(h, tc_w, tc_b), ACT)                    # (TB, S_t, 64)

    # ----- fusion encoder over the concatenated (aligned) sequence -----
    x = jnp.concatenate([text_init, img], axis=1)                     # (TB, 32, 64)
    fm_row = mask_ref[:, 1:2, :]                                      # (TB, 1, 32)
    ext_f = (1.0 - fm_row) * -10000.0
    for l in range(TRAN_LAYERS):
        x = _encoder_layer(x, ext_f, bl_mats_ref.at[IMG_LAYERS + l],
                           bl_vecs_ref.at[IMG_LAYERS + l], TRAN_DIM, NHEADS)

    # ----- fuse_type == 'att': attention head + masked softmax pooling -----
    a1 = _activate(_mm(x, a1_w, a1_b), ACT)                           # (TB, 32, 32)
    a2 = jnp.broadcast_to(a2_w.reshape(1, 1, TRAN_DIM // 2),
                          (tb, 1, TRAN_DIM // 2))
    alpha = jnp.einsum('bqd,bkd->bqk', a2, a1,
                       preferred_element_type=jnp.float32) + a2_b     # (TB, 1, 32)
    alpha = jnp.where(fm_row == 0.0, -1000000000.0, alpha)
    alpha = alpha - jnp.max(alpha, axis=-1, keepdims=True)
    e = jnp.exp(alpha)
    pw = e * pl.reciprocal(jnp.sum(e, axis=-1, keepdims=True), approx=True)
    out = jnp.einsum('bqs,bsd->bqd', pw, x,
                     preferred_element_type=jnp.float32)              # (TB, 1, 64)
    o_ref[...] = out.astype(o_ref.dtype)


# ---------------------------- pallas wrapper ---------------------------------
def _full_spec(w):
    n = w.ndim
    return pl.BlockSpec(w.shape, lambda b, n=n: (0,) * n)


def _choose_tb(B):
    # several batch elements per grid step, but keep >= 2 steps (v7x megacore)
    if B <= 1:
        return 1
    for tb in (8, 4, 2):
        if B % tb == 0 and B // tb >= 2:
            return tb
    return 1


def fused_forward(P, emb, patches, masks):
    B, S_t, _ = emb.shape
    n_patch, k_conv = patches.shape[1], patches.shape[2]
    S_pad = masks.shape[-1]
    tb = _choose_tb(B)
    weight_inputs = [P["text_mats"], P["text_vecs"], P["big_mats"], P["big_vecs"],
                     P["proj_mats"], P["misc_vecs"]]
    in_specs = ([pl.BlockSpec((tb, S_t, TEXT_DIM), lambda b: (b, 0, 0)),
                 pl.BlockSpec((tb, n_patch, k_conv), lambda b: (b, 0, 0)),
                 pl.BlockSpec((tb, 2, S_pad), lambda b: (b, 0, 0))]
                + [_full_spec(w) for w in weight_inputs])
    out = pl.pallas_call(
        _fuse_kernel,
        out_shape=jax.ShapeDtypeStruct((B, 1, TRAN_DIM), jnp.float32),
        grid=(B // tb,),
        in_specs=in_specs,
        out_specs=pl.BlockSpec((tb, 1, TRAN_DIM), lambda b: (b, 0, 0)),
        compiler_params=pltpu.CompilerParams(dimension_semantics=("parallel",)),
    )(emb, patches, masks, *weight_inputs)
    return out[:, 0, :]


# ------------------------------ model forward ---------------------------------
def fuse_model_forward(P, text_inputs, bert_attention_mask, image_inputs, text_image_mask):
    B, S_t = text_inputs.shape

    # text embeddings (gather + pos add stay in XLA; see TODO at top of file)
    emb = P["word_emb"][text_inputs] + P["pos_emb"][:S_t][None, :, :]

    # im2col for the patchify-conv image-backbone stand-in (layout op in XLA)
    _, C, H, W = image_inputs.shape
    Ho, Wo = H // PATCH, W // PATCH
    patches = image_inputs.reshape(B, C, Ho, PATCH, Wo, PATCH).transpose(0, 2, 4, 1, 3, 5)
    patches = patches.reshape(B, Ho * Wo, C * PATCH * PATCH)

    n_patch = Ho * Wo
    S_img = n_patch + 1
    S_img_pad = ((S_img + 7) // 8) * 8
    S_pad = S_t + S_img_pad
    S_total = S_t + S_img

    # one packed mask input: row 0 = bert mask, row 1 = fusion mask (pads = 0)
    tmask = jnp.zeros((B, S_pad), jnp.float32).at[:, :S_t].set(
        bert_attention_mask.astype(jnp.float32))
    fmask = jnp.zeros((B, S_pad), jnp.float32).at[:, :S_total].set(
        text_image_mask.astype(jnp.float32)[:, :S_total])
    masks = jnp.stack([tmask, fmask], axis=1)                 # (B, 2, S_pad)

    out = fused_forward(P, emb, patches, masks)
    return out, None, None


# ------------------------------ parameters ------------------------------------
def _dense(key, din, dout):
    w = jax.random.normal(key, (din, dout), jnp.float32) * 0.02
    b = jnp.zeros((dout,), jnp.float32)
    return w, b


def _enc_layer(key, d):
    f = 4 * d
    ks = jax.random.split(key, 6)
    p = {}
    p["q_w"], p["q_b"] = _dense(ks[0], d, d)
    p["k_w"], p["k_b"] = _dense(ks[1], d, d)
    p["v_w"], p["v_b"] = _dense(ks[2], d, d)
    p["ao_w"], p["ao_b"] = _dense(ks[3], d, d)
    p["i_w"], p["i_b"] = _dense(ks[4], d, f)
    p["fo_w"], p["fo_b"] = _dense(ks[5], f, d)
    p["ln1_g"] = jnp.ones((d,), jnp.float32)
    p["ln1_b"] = jnp.zeros((d,), jnp.float32)
    p["ln2_g"] = jnp.ones((d,), jnp.float32)
    p["ln2_b"] = jnp.zeros((d,), jnp.float32)
    return p


def _pack_layer(p, d):
    """Pack one encoder layer into [mats (7d, 4d), vecs (8, 4d)] slabs."""
    f = 4 * d
    mats = jnp.zeros((3 * d + f, 4 * d), jnp.float32)
    mats = mats.at[0:d, 0:3 * d].set(jnp.concatenate([p["q_w"], p["k_w"], p["v_w"]], axis=1))
    mats = mats.at[d:2 * d, 0:d].set(p["ao_w"])
    mats = mats.at[2 * d:3 * d, 0:f].set(p["i_w"])
    mats = mats.at[3 * d:3 * d + f, 0:d].set(p["fo_w"])
    vecs = jnp.zeros((8, 4 * d), jnp.float32)
    vecs = vecs.at[0, 0:3 * d].set(jnp.concatenate([p["q_b"], p["k_b"], p["v_b"]]))
    vecs = vecs.at[1, 0:d].set(p["ao_b"])
    vecs = vecs.at[2, 0:d].set(p["ln1_g"])
    vecs = vecs.at[3, 0:d].set(p["ln1_b"])
    vecs = vecs.at[4, 0:f].set(p["i_b"])
    vecs = vecs.at[5, 0:d].set(p["fo_b"])
    vecs = vecs.at[6, 0:d].set(p["ln2_g"])
    vecs = vecs.at[7, 0:d].set(p["ln2_b"])
    return mats, vecs


def init_params(key):
    ks = jax.random.split(key, 12)
    word_emb = jax.random.normal(ks[0], (VOCAB, TEXT_DIM), jnp.float32) * 0.02
    pos_emb = jax.random.normal(ks[1], (MAX_POS, TEXT_DIM), jnp.float32) * 0.02
    emb_ln_g = jnp.ones((TEXT_DIM,), jnp.float32)
    emb_ln_b = jnp.zeros((TEXT_DIM,), jnp.float32)
    text_layers = [_enc_layer(k, TEXT_DIM) for k in jax.random.split(ks[2], TEXT_LAYERS)]
    conv_w, conv_b = _dense(ks[3], K_CONV, IMG_DIM)
    tc_w, tc_b = _dense(ks[4], TEXT_DIM, TRAN_DIM)
    ic_w, ic_b = _dense(ks[5], IMG_DIM, TRAN_DIM)
    cc_w, cc_b = _dense(ks[6], IMG_DIM, TRAN_DIM)
    img_layers = [_enc_layer(k, TRAN_DIM) for k in jax.random.split(ks[7], IMG_LAYERS)]
    fuse_layers = [_enc_layer(k, TRAN_DIM) for k in jax.random.split(ks[8], TRAN_LAYERS)]
    a1_w, a1_b = _dense(ks[9], TRAN_DIM, TRAN_DIM // 2)
    a2_w, a2_b = _dense(ks[10], TRAN_DIM // 2, 1)

    # ---- pack everything into a handful of aligned slabs ----
    tm, tv = zip(*[_pack_layer(p, TEXT_DIM) for p in text_layers])
    bm, bv = zip(*[_pack_layer(p, TRAN_DIM) for p in (img_layers + fuse_layers)])

    proj = jnp.zeros((_PROJ_ROWS, TRAN_DIM), jnp.float32)
    proj = proj.at[_OFF_CONV:_OFF_CONV + K_CONV, 0:IMG_DIM].set(conv_w)
    proj = proj.at[_OFF_TC:_OFF_TC + TEXT_DIM, 0:TRAN_DIM].set(tc_w)
    proj = proj.at[_OFF_IC:_OFF_IC + IMG_DIM, 0:TRAN_DIM].set(ic_w)
    proj = proj.at[_OFF_CC:_OFF_CC + IMG_DIM, 0:TRAN_DIM].set(cc_w)
    proj = proj.at[_OFF_A1:_OFF_A1 + TRAN_DIM, 0:TRAN_DIM // 2].set(a1_w)

    misc = jnp.zeros((8, TRAN_DIM), jnp.float32)
    misc = misc.at[0, 0:IMG_DIM].set(conv_b)
    misc = misc.at[1, 0:TEXT_DIM].set(emb_ln_g)
    misc = misc.at[2, 0:TEXT_DIM].set(emb_ln_b)
    misc = misc.at[3, 0:TRAN_DIM].set(tc_b)
    misc = misc.at[4, 0:TRAN_DIM].set(ic_b)
    misc = misc.at[5, 0:TRAN_DIM].set(cc_b)
    misc = misc.at[6, 0:TRAN_DIM // 2].set(a1_b)
    misc = misc.at[7, 0:TRAN_DIM // 2].set(a2_w[:, 0])
    misc = misc.at[7, TRAN_DIM // 2].set(a2_b[0])

    return {
        "word_emb": word_emb, "pos_emb": pos_emb,
        "text_mats": jnp.stack(tm), "text_vecs": jnp.stack(tv),
        "big_mats": jnp.stack(bm), "big_vecs": jnp.stack(bv),
        "proj_mats": proj, "misc_vecs": misc,
    }


# --------------------------------- main ---------------------------------------
if __name__ == "__main__":
    key = jax.random.PRNGKey(0)
    kp, kt, ki = jax.random.split(key, 3)
    params = init_params(kp)

    B, S_T = 2, 8
    N_PATCH = (16 // PATCH) * (16 // PATCH)          # 16 image patches
    S_TOTAL = S_T + 1 + N_PATCH                      # text + image-cls + patches = 25

    text_inputs = jax.random.randint(kt, (B, S_T), 0, VOCAB)
    bert_attention_mask = jnp.ones((B, S_T), jnp.float32)
    image_inputs = jax.random.normal(ki, (B, 3, 16, 16), jnp.float32)
    text_image_mask = jnp.concatenate(
        [jnp.ones((B, S_TOTAL - 2), jnp.float32), jnp.zeros((B, 2), jnp.float32)], axis=1)

    fwd = jax.jit(fuse_model_forward)
    out, _, _ = fwd(params, text_inputs, bert_attention_mask, image_inputs, text_image_mask)
    out = jax.block_until_ready(out)
    assert out.shape == (B, TRAN_DIM) and out.dtype == jnp.float32
    assert bool(jnp.all(jnp.isfinite(out)))
    print("KERNEL_OK")
</pallas_src>

<mosaic_0001>
module attributes {stable_mosaic.version = 11 : i64} {
  func.func @_fuse_kernel(%arg0: i32, %arg1: memref<1x8x32xf32, #tpu.memory_space<vmem>>, %arg2: memref<1x16x48xf32, #tpu.memory_space<vmem>>, %arg3: memref<1x2x32xf32, #tpu.memory_space<vmem>>, %arg4: memref<1x224x128xf32, #tpu.memory_space<vmem>>, %arg5: memref<1x8x128xf32, #tpu.memory_space<vmem>>, %arg6: memref<2x448x256xf32, #tpu.memory_space<vmem>>, %arg7: memref<2x8x256xf32, #tpu.memory_space<vmem>>, %arg8: memref<208x64xf32, #tpu.memory_space<vmem>>, %arg9: memref<8x64xf32, #tpu.memory_space<vmem>>, %arg10: memref<1x1x64xf32, #tpu.memory_space<vmem>>) attributes {dimension_semantics = [#tpu.dimension_semantics<parallel>], iteration_bounds = array<i64: 2>, scalar_prefetch = 0 : i64, scratch_operands = 0 : i64, tpu.core_type = #tpu.core_type<tc>, window_params = [{transform_indices = @transform_0, window_bounds = array<i64: 1, 8, 32>}, {transform_indices = @transform_1, window_bounds = array<i64: 1, 16, 48>}, {transform_indices = @transform_2, window_bounds = array<i64: 1, 2, 32>}, {pipeline_mode = #tpu.pipeline_mode<synchronous>, transform_indices = @transform_3, window_bounds = array<i64: 1, 224, 128>}, {pipeline_mode = #tpu.pipeline_mode<synchronous>, transform_indices = @transform_4, window_bounds = array<i64: 1, 8, 128>}, {pipeline_mode = #tpu.pipeline_mode<synchronous>, transform_indices = @transform_5, window_bounds = array<i64: 2, 448, 256>}, {pipeline_mode = #tpu.pipeline_mode<synchronous>, transform_indices = @transform_6, window_bounds = array<i64: 2, 8, 256>}, {pipeline_mode = #tpu.pipeline_mode<synchronous>, transform_indices = @transform_7, window_bounds = array<i64: 208, 64>}, {pipeline_mode = #tpu.pipeline_mode<synchronous>, transform_indices = @transform_8, window_bounds = array<i64: 8, 64>}, {transform_indices = @transform_9, window_bounds = array<i64: 1, 1, 64>}]} {
    %c0 = arith.constant 0 : index
    %c0_0 = arith.constant 0 : index
    %0 = vector.load %arg8[%c0, %c0_0] : memref<208x64xf32, #tpu.memory_space<vmem>>, vector<48x32xf32>
    %c48 = arith.constant 48 : index
    %c0_1 = arith.constant 0 : index
    %1 = vector.load %arg8[%c48, %c0_1] : memref<208x64xf32, #tpu.memory_space<vmem>>, vector<32x64xf32>
    %c80 = arith.constant 80 : index
    %c0_2 = arith.constant 0 : index
    %2 = vector.load %arg8[%c80, %c0_2] : memref<208x64xf32, #tpu.memory_space<vmem>>, vector<32x64xf32>
    %c112 = arith.constant 112 : index
    %c0_3 = arith.constant 0 : index
    %3 = vector.load %arg8[%c112, %c0_3] : memref<208x64xf32, #tpu.memory_space<vmem>>, vector<32x64xf32>
    %c144 = arith.constant 144 : index
    %c0_4 = arith.constant 0 : index
    %4 = vector.load %arg8[%c144, %c0_4] : memref<208x64xf32, #tpu.memory_space<vmem>>, vector<64x32xf32>
    %c0_5 = arith.constant 0 : index
    %c0_6 = arith.constant 0 : index
    %5 = vector.load %arg9[%c0_5, %c0_6] : memref<8x64xf32, #tpu.memory_space<vmem>>, vector<1x32xf32>
    %c1 = arith.constant 1 : index
    %c0_7 = arith.constant 0 : index
    %6 = vector.load %arg9[%c1, %c0_7] : memref<8x64xf32, #tpu.memory_space<vmem>>, vector<1x32xf32>
    %c2 = arith.constant 2 : index
    %c0_8 = arith.constant 0 : index
    %7 = vector.load %arg9[%c2, %c0_8] : memref<8x64xf32, #tpu.memory_space<vmem>>, vector<1x32xf32>
    %c3 = arith.constant 3 : index
    %c0_9 = arith.constant 0 : index
    %8 = vector.load %arg9[%c3, %c0_9] : memref<8x64xf32, #tpu.memory_space<vmem>>, vector<1x64xf32>
    %c4 = arith.constant 4 : index
    %c0_10 = arith.constant 0 : index
    %9 = vector.load %arg9[%c4, %c0_10] : memref<8x64xf32, #tpu.memory_space<vmem>>, vector<1x64xf32>
    %c5 = arith.constant 5 : index
    %c0_11 = arith.constant 0 : index
    %10 = vector.load %arg9[%c5, %c0_11] : memref<8x64xf32, #tpu.memory_space<vmem>>, vector<1x64xf32>
    %c6 = arith.constant 6 : index
    %c0_12 = arith.constant 0 : index
    %11 = vector.load %arg9[%c6, %c0_12] : memref<8x64xf32, #tpu.memory_space<vmem>>, vector<1x32xf32>
    %c7 = arith.constant 7 : index
    %c0_13 = arith.constant 0 : index
    %12 = vector.load %arg9[%c7, %c0_13] : memref<8x64xf32, #tpu.memory_space<vmem>>, vector<1x32xf32>
    %c7_14 = arith.constant 7 : index
    %c32 = arith.constant 32 : index
    %13 = vector.load %arg9[%c7_14, %c32] : memref<8x64xf32, #tpu.memory_space<vmem>>, vector<1x1xf32>
    %c0_15 = arith.constant 0 : index
    %c0_16 = arith.constant 0 : index
    %c0_17 = arith.constant 0 : index
    %14 = vector.load %arg2[%c0_15, %c0_16, %c0_17] : memref<1x16x48xf32, #tpu.memory_space<vmem>>, vector<1x16x48xf32>
    %15 = vector.shape_cast %14 : vector<1x16x48xf32> to vector<16x48xf32>
    %cst = arith.constant dense<0.000000e+00> : vector<16x32xf32>
    %16 = tpu.matmul %15, %0, %cst {dimension_numbers = #tpu.dot_dimension_numbers<[1], [0], [0], [1], [0, 0, 1, 1], [], []>} : vector<16x48xf32>, vector<48x32xf32>, vector<16x32xf32> -> vector<16x32xf32>
    %17 = vector.broadcast %5 : vector<1x32xf32> to vector<16x32xf32>
    %18 = arith.addf %16, %17 : vector<16x32xf32>
    %19 = vector.shape_cast %18 : vector<16x32xf32> to vector<1x16x32xf32>
    %cst_18 = arith.constant 0.000000e+00 : f32
    %20 = vector.broadcast %cst_18 : f32 to vector<1x16x32xf32>
    %21 = arith.maximumf %19, %20 : vector<1x16x32xf32>
    %cst_19 = arith.constant dense<0.000000e+00> : vector<1x32xf32>
    %22 = vector.multi_reduction <add>, %21, %cst_19 [1] : vector<1x16x32xf32> to vector<1x32xf32>
    %23 = vector.shape_cast %22 : vector<1x32xf32> to vector<1x1x32xf32>
    %cst_20 = arith.constant 1.600000e+01 : f32
    %24 = vector.broadcast %cst_20 : f32 to vector<1x1x32xf32>
    %25 = arith.divf %23, %24 : vector<1x1x32xf32>
    %26 = vector.shape_cast %25 : vector<1x1x32xf32> to vector<1x32xf32>
    %cst_21 = arith.constant dense<0.000000e+00> : vector<1x64xf32>
    %27 = tpu.matmul %26, %3, %cst_21 {dimension_numbers = #tpu.dot_dimension_numbers<[1], [0], [0], [1], [0, 0, 1, 1], [], []>} : vector<1x32xf32>, vector<32x64xf32>, vector<1x64xf32> -> vector<1x64xf32>
    %28 = arith.addf %27, %10 : vector<1x64xf32>
    %29 = vector.shape_cast %28 : vector<1x64xf32> to vector<1x1x64xf32>
    %cst_22 = arith.constant 5.000000e-01 : f32
    %30 = vector.broadcast %cst_22 : f32 to vector<1x1x64xf32>
    %31 = arith.mulf %29, %30 : vector<1x1x64xf32>
    %cst_23 = arith.constant 0.707106769 : f32
    %32 = vector.broadcast %cst_23 : f32 to vector<1x1x64xf32>
    %33 = arith.mulf %29, %32 : vector<1x1x64xf32>
    %cst_24 = arith.constant 0.000000e+00 : f32
    %34 = vector.broadcast %cst_24 : f32 to vector<1x1x64xf32>
    %35 = arith.cmpf oge, %33, %34 : vector<1x1x64xf32>
    %cst_25 = arith.constant 1.000000e+00 : f32
    %cst_26 = arith.constant -1.000000e+00 : f32
    %36 = vector.broadcast %cst_25 : f32 to vector<1x1x64xf32>
    %37 = vector.broadcast %cst_26 : f32 to vector<1x1x64xf32>
    %38 = arith.select %35, %36, %37 : vector<1x1x64xi1>, vector<1x1x64xf32>
    %39 = math.absf %33 : vector<1x1x64xf32>
    %cst_27 = arith.constant 0.327591091 : f32
    %40 = vector.broadcast %cst_27 : f32 to vector<1x1x64xf32>
    %41 = arith.mulf %40, %39 : vector<1x1x64xf32>
    %cst_28 = arith.constant 1.000000e+00 : f32
    %42 = vector.broadcast %cst_28 : f32 to vector<1x1x64xf32>
    %43 = arith.addf %42, %41 : vector<1x1x64xf32>
    %cst_29 = arith.constant 1.000000e+00 : f32
    %44 = vector.broadcast %cst_29 : f32 to vector<1x1x64xf32>
    %45 = arith.divf %44, %43 : vector<1x1x64xf32>
    %cst_30 = arith.constant 1.06140542 : f32
    %46 = vector.broadcast %cst_30 : f32 to vector<1x1x64xf32>
    %47 = arith.mulf %46, %45 : vector<1x1x64xf32>
    %cst_31 = arith.constant -1.45315206 : f32
    %48 = vector.broadcast %cst_31 : f32 to vector<1x1x64xf32>
    %49 = arith.addf %47, %48 : vector<1x1x64xf32>
    %50 = arith.mulf %49, %45 : vector<1x1x64xf32>
    %cst_32 = arith.constant 1.42141378 : f32
    %51 = vector.broadcast %cst_32 : f32 to vector<1x1x64xf32>
    %52 = arith.addf %50, %51 : vector<1x1x64xf32>
    %53 = arith.mulf %52, %45 : vector<1x1x64xf32>
    %cst_33 = arith.constant -0.284496725 : f32
    %54 = vector.broadcast %cst_33 : f32 to vector<1x1x64xf32>
    %55 = arith.addf %53, %54 : vector<1x1x64xf32>
    %56 = arith.mulf %55, %45 : vector<1x1x64xf32>
    %cst_34 = arith.constant 0.254829586 : f32
    %57 = vector.broadcast %cst_34 : f32 to vector<1x1x64xf32>
    %58 = arith.addf %56, %57 : vector<1x1x64xf32>
    %59 = arith.mulf %58, %45 : vector<1x1x64xf32>
    %cst_35 = arith.constant 0.000000e+00 : f32
    %60 = vector.broadcast %cst_35 : f32 to vector<1x1x64xf32>
    %61 = arith.subf %60, %39 : vector<1x1x64xf32>
    %62 = arith.mulf %61, %39 : vector<1x1x64xf32>
    %63 = math.exp %62 : vector<1x1x64xf32>
    %64 = arith.mulf %59, %63 : vector<1x1x64xf32>
    %cst_36 = arith.constant 1.000000e+00 : f32
    %65 = vector.broadcast %cst_36 : f32 to vector<1x1x64xf32>
    %66 = arith.subf %65, %64 : vector<1x1x64xf32>
    %67 = arith.mulf %38, %66 : vector<1x1x64xf32>
    %cst_37 = arith.constant 1.000000e+00 : f32
    %68 = vector.broadcast %cst_37 : f32 to vector<1x1x64xf32>
    %69 = arith.addf %68, %67 : vector<1x1x64xf32>
    %70 = arith.mulf %31, %69 : vector<1x1x64xf32>
    %71 = vector.shape_cast %21 : vector<1x16x32xf32> to vector<16x32xf32>
    %cst_38 = arith.constant dense<0.000000e+00> : vector<16x64xf32>
    %72 = tpu.matmul %71, %2, %cst_38 {dimension_numbers = #tpu.dot_dimension_numbers<[1], [0], [0], [1], [0, 0, 1, 1], [], []>} : vector<16x32xf32>, vector<32x64xf32>, vector<16x64xf32> -> vector<16x64xf32>
    %73 = vector.broadcast %9 : vector<1x64xf32> to vector<16x64xf32>
    %74 = arith.addf %72, %73 : vector<16x64xf32>
    %75 = vector.shape_cast %74 : vector<16x64xf32> to vector<1x16x64xf32>
    %cst_39 = arith.constant 5.000000e-01 : f32
    %76 = vector.broadcast %cst_39 : f32 to vector<1x16x64xf32>
    %77 = arith.mulf %75, %76 : vector<1x16x64xf32>
    %cst_40 = arith.constant 0.707106769 : f32
    %78 = vector.broadcast %cst_40 : f32 to vector<1x16x64xf32>
    %79 = arith.mulf %75, %78 : vector<1x16x64xf32>
    %cst_41 = arith.constant 0.000000e+00 : f32
    %80 = vector.broadcast %cst_41 : f32 to vector<1x16x64xf32>
    %81 = arith.cmpf oge, %79, %80 : vector<1x16x64xf32>
    %cst_42 = arith.constant 1.000000e+00 : f32
    %cst_43 = arith.constant -1.000000e+00 : f32
    %82 = vector.broadcast %cst_42 : f32 to vector<1x16x64xf32>
    %83 = vector.broadcast %cst_43 : f32 to vector<1x16x64xf32>
    %84 = arith.select %81, %82, %83 : vector<1x16x64xi1>, vector<1x16x64xf32>
    %85 = math.absf %79 : vector<1x16x64xf32>
    %cst_44 = arith.constant 0.327591091 : f32
    %86 = vector.broadcast %cst_44 : f32 to vector<1x16x64xf32>
    %87 = arith.mulf %86, %85 : vector<1x16x64xf32>
    %cst_45 = arith.constant 1.000000e+00 : f32
    %88 = vector.broadcast %cst_45 : f32 to vector<1x16x64xf32>
    %89 = arith.addf %88, %87 : vector<1x16x64xf32>
    %cst_46 = arith.constant 1.000000e+00 : f32
    %90 = vector.broadcast %cst_46 : f32 to vector<1x16x64xf32>
    %91 = arith.divf %90, %89 : vector<1x16x64xf32>
    %cst_47 = arith.constant 1.06140542 : f32
    %92 = vector.broadcast %cst_47 : f32 to vector<1x16x64xf32>
    %93 = arith.mulf %92, %91 : vector<1x16x64xf32>
    %cst_48 = arith.constant -1.45315206 : f32
    %94 = vector.broadcast %cst_48 : f32 to vector<1x16x64xf32>
    %95 = arith.addf %93, %94 : vector<1x16x64xf32>
    %96 = arith.mulf %95, %91 : vector<1x16x64xf32>
    %cst_49 = arith.constant 1.42141378 : f32
    %97 = vector.broadcast %cst_49 : f32 to vector<1x16x64xf32>
    %98 = arith.addf %96, %97 : vector<1x16x64xf32>
    %99 = arith.mulf %98, %91 : vector<1x16x64xf32>
    %cst_50 = arith.constant -0.284496725 : f32
    %100 = vector.broadcast %cst_50 : f32 to vector<1x16x64xf32>
    %101 = arith.addf %99, %100 : vector<1x16x64xf32>
    %102 = arith.mulf %101, %91 : vector<1x16x64xf32>
    %cst_51 = arith.constant 0.254829586 : f32
    %103 = vector.broadcast %cst_51 : f32 to vector<1x16x64xf32>
    %104 = arith.addf %102, %103 : vector<1x16x64xf32>
    %105 = arith.mulf %104, %91 : vector<1x16x64xf32>
    %cst_52 = arith.constant 0.000000e+00 : f32
    %106 = vector.broadcast %cst_52 : f32 to vector<1x16x64xf32>
    %107 = arith.subf %106, %85 : vector<1x16x64xf32>
    %108 = arith.mulf %107, %85 : vector<1x16x64xf32>
    %109 = math.exp %108 : vector<1x16x64xf32>
    %110 = arith.mulf %105, %109 : vector<1x16x64xf32>
    %cst_53 = arith.constant 1.000000e+00 : f32
    %111 = vector.broadcast %cst_53 : f32 to vector<1x16x64xf32>
    %112 = arith.subf %111, %110 : vector<1x16x64xf32>
    %113 = arith.mulf %84, %112 : vector<1x16x64xf32>
    %cst_54 = arith.constant 1.000000e+00 : f32
    %114 = vector.broadcast %cst_54 : f32 to vector<1x16x64xf32>
    %115 = arith.addf %114, %113 : vector<1x16x64xf32>
    %116 = arith.mulf %77, %115 : vector<1x16x64xf32>
    %cst_55 = arith.constant 0.000000e+00 : f32
    %117 = vector.broadcast %cst_55 : f32 to vector<1x7x64xf32>
    %118 = tpu.concatenate %70, %116, %117 in 1 : vector<1x1x64xf32>, vector<1x16x64xf32>, vector<1x7x64xf32> -> vector<1x24x64xf32>
    %119 = tpu.iota {dimensions = array<i32: 1>} : vector<1x24xi32>
    %c17_i32 = arith.constant 17 : i32
    %120 = vector.broadcast %c17_i32 : i32 to vector<1x24xi32>
    %121 = arith.cmpi slt, %119, %120 : vector<1x24xi32>
    %cst_56 = arith.constant 0.000000e+00 : f32
    %cst_57 = arith.constant -1.000000e+04 : f32
    %122 = vector.broadcast %cst_56 : f32 to vector<1x24xf32>
    %123 = vector.broadcast %cst_57 : f32 to vector<1x24xf32>
    %124 = arith.select %121, %122, %123 : vector<1x24xi1>, vector<1x24xf32>
    %c0_i32 = arith.constant 0 : i32
    %c0_i32_58 = arith.constant 0 : i32
    %c0_i32_59 = arith.constant 0 : i32
    %125 = tpu.memref_slice %arg6[%c0_i32, %c0_i32_58, %c0_i32_59] : memref<2x448x256xf32, #tpu.memory_space<vmem>> -> memref<1x448x256xf32, #tpu.memory_space<vmem>>
    %126 = tpu.memref_squeeze %125 : memref<1x448x256xf32, #tpu.memory_space<vmem>> -> memref<448x256xf32, #tpu.memory_space<vmem>>
    %c0_60 = arith.constant 0 : index
    %c0_61 = arith.constant 0 : index
    %127 = vector.load %126[%c0_60, %c0_61] : memref<448x256xf32, #tpu.memory_space<vmem>>, vector<64x192xf32>
    %c0_i32_62 = arith.constant 0 : i32
    %c0_i32_63 = arith.constant 0 : i32
    %c0_i32_64 = arith.constant 0 : i32
    %128 = tpu.memref_slice %arg6[%c0_i32_62, %c0_i32_63, %c0_i32_64] : memref<2x448x256xf32, #tpu.memory_space<vmem>> -> memref<1x448x256xf32, #tpu.memory_space<vmem>>
    %129 = tpu.memref_squeeze %128 : memref<1x448x256xf32, #tpu.memory_space<vmem>> -> memref<448x256xf32, #tpu.memory_space<vmem>>
    %c64 = arith.constant 64 : index
    %c0_65 = arith.constant 0 : index
    %130 = vector.load %129[%c64, %c0_65] : memref<448x256xf32, #tpu.memory_space<vmem>>, vector<64x64xf32>
    %c0_i32_66 = arith.constant 0 : i32
    %c0_i32_67 = arith.constant 0 : i32
    %c0_i32_68 = arith.constant 0 : i32
    %131 = tpu.memref_slice %arg6[%c0_i32_66, %c0_i32_67, %c0_i32_68] : memref<2x448x256xf32, #tpu.memory_space<vmem>> -> memref<1x448x256xf32, #tpu.memory_space<vmem>>
    %132 = tpu.memref_squeeze %131 : memref<1x448x256xf32, #tpu.memory_space<vmem>> -> memref<448x256xf32, #tpu.memory_space<vmem>>
    %c128 = arith.constant 128 : index
    %c0_69 = arith.constant 0 : index
    %133 = vector.load %132[%c128, %c0_69] : memref<448x256xf32, #tpu.memory_space<vmem>>, vector<64x256xf32>
    %c0_i32_70 = arith.constant 0 : i32
    %c0_i32_71 = arith.constant 0 : i32
    %c0_i32_72 = arith.constant 0 : i32
    %134 = tpu.memref_slice %arg6[%c0_i32_70, %c0_i32_71, %c0_i32_72] : memref<2x448x256xf32, #tpu.memory_space<vmem>> -> memref<1x448x256xf32, #tpu.memory_space<vmem>>
    %135 = tpu.memref_squeeze %134 : memref<1x448x256xf32, #tpu.memory_space<vmem>> -> memref<448x256xf32, #tpu.memory_space<vmem>>
    %c192 = arith.constant 192 : index
    %c0_73 = arith.constant 0 : index
    %136 = vector.load %135[%c192, %c0_73] : memref<448x256xf32, #tpu.memory_space<vmem>>, vector<256x64xf32>
    %c0_i32_74 = arith.constant 0 : i32
    %c0_i32_75 = arith.constant 0 : i32
    %c0_i32_76 = arith.constant 0 : i32
    %137 = tpu.memref_slice %arg7[%c0_i32_74, %c0_i32_75, %c0_i32_76] : memref<2x8x256xf32, #tpu.memory_space<vmem>> -> memref<1x8x256xf32, #tpu.memory_space<vmem>>
    %138 = tpu.memref_squeeze %137 : memref<1x8x256xf32, #tpu.memory_space<vmem>> -> memref<8x256xf32, #tpu.memory_space<vmem>>
    %c0_77 = arith.constant 0 : index
    %c0_78 = arith.constant 0 : index
    %139 = vector.load %138[%c0_77, %c0_78] : memref<8x256xf32, #tpu.memory_space<vmem>>, vector<1x192xf32>
    %c0_i32_79 = arith.constant 0 : i32
    %c0_i32_80 = arith.constant 0 : i32
    %c0_i32_81 = arith.constant 0 : i32
    %140 = tpu.memref_slice %arg7[%c0_i32_79, %c0_i32_80, %c0_i32_81] : memref<2x8x256xf32, #tpu.memory_space<vmem>> -> memref<1x8x256xf32, #tpu.memory_space<vmem>>
    %141 = tpu.memref_squeeze %140 : memref<1x8x256xf32, #tpu.memory_space<vmem>> -> memref<8x256xf32, #tpu.memory_space<vmem>>
    %c1_82 = arith.constant 1 : index
    %c0_83 = arith.constant 0 : index
    %142 = vector.load %141[%c1_82, %c0_83] : memref<8x256xf32, #tpu.memory_space<vmem>>, vector<1x64xf32>
    %c0_i32_84 = arith.constant 0 : i32
    %c0_i32_85 = arith.constant 0 : i32
    %c0_i32_86 = arith.constant 0 : i32
    %143 = tpu.memref_slice %arg7[%c0_i32_84, %c0_i32_85, %c0_i32_86] : memref<2x8x256xf32, #tpu.memory_space<vmem>> -> memref<1x8x256xf32, #tpu.memory_space<vmem>>
    %144 = tpu.memref_squeeze %143 : memref<1x8x256xf32, #tpu.memory_space<vmem>> -> memref<8x256xf32, #tpu.memory_space<vmem>>
    %c2_87 = arith.constant 2 : index
    %c0_88 = arith.constant 0 : index
    %145 = vector.load %144[%c2_87, %c0_88] : memref<8x256xf32, #tpu.memory_space<vmem>>, vector<1x64xf32>
    %c0_i32_89 = arith.constant 0 : i32
    %c0_i32_90 = arith.constant 0 : i32
    %c0_i32_91 = arith.constant 0 : i32
    %146 = tpu.memref_slice %arg7[%c0_i32_89, %c0_i32_90, %c0_i32_91] : memref<2x8x256xf32, #tpu.memory_space<vmem>> -> memref<1x8x256xf32, #tpu.memory_space<vmem>>
    %147 = tpu.memref_squeeze %146 : memref<1x8x256xf32, #tpu.memory_space<vmem>> -> memref<8x256xf32, #tpu.memory_space<vmem>>
    %c3_92 = arith.constant 3 : index
    %c0_93 = arith.constant 0 : index
    %148 = vector.load %147[%c3_92, %c0_93] : memref<8x256xf32, #tpu.memory_space<vmem>>, vector<1x64xf32>
    %c0_i32_94 = arith.constant 0 : i32
    %c0_i32_95 = arith.constant 0 : i32
    %c0_i32_96 = arith.constant 0 : i32
    %149 = tpu.memref_slice %arg7[%c0_i32_94, %c0_i32_95, %c0_i32_96] : memref<2x8x256xf32, #tpu.memory_space<vmem>> -> memref<1x8x256xf32, #tpu.memory_space<vmem>>
    %150 = tpu.memref_squeeze %149 : memref<1x8x256xf32, #tpu.memory_space<vmem>> -> memref<8x256xf32, #tpu.memory_space<vmem>>
    %c4_97 = arith.constant 4 : index
    %c0_98 = arith.constant 0 : index
    %151 = vector.load %150[%c4_97, %c0_98] : memref<8x256xf32, #tpu.memory_space<vmem>>, vector<1x256xf32>
    %c0_i32_99 = arith.constant 0 : i32
    %c0_i32_100 = arith.constant 0 : i32
    %c0_i32_101 = arith.constant 0 : i32
    %152 = tpu.memref_slice %arg7[%c0_i32_99, %c0_i32_100, %c0_i32_101] : memref<2x8x256xf32, #tpu.memory_space<vmem>> -> memref<1x8x256xf32, #tpu.memory_space<vmem>>
    %153 = tpu.memref_squeeze %152 : memref<1x8x256xf32, #tpu.memory_space<vmem>> -> memref<8x256xf32, #tpu.memory_space<vmem>>
    %c5_102 = arith.constant 5 : index
    %c0_103 = arith.constant 0 : index
    %154 = vector.load %153[%c5_102, %c0_103] : memref<8x256xf32, #tpu.memory_space<vmem>>, vector<1x64xf32>
    %c0_i32_104 = arith.constant 0 : i32
    %c0_i32_105 = arith.constant 0 : i32
    %c0_i32_106 = arith.constant 0 : i32
    %155 = tpu.memref_slice %arg7[%c0_i32_104, %c0_i32_105, %c0_i32_106] : memref<2x8x256xf32, #tpu.memory_space<vmem>> -> memref<1x8x256xf32, #tpu.memory_space<vmem>>
    %156 = tpu.memref_squeeze %155 : memref<1x8x256xf32, #tpu.memory_space<vmem>> -> memref<8x256xf32, #tpu.memory_space<vmem>>
    %c6_107 = arith.constant 6 : index
    %c0_108 = arith.constant 0 : index
    %157 = vector.load %156[%c6_107, %c0_108] : memref<8x256xf32, #tpu.memory_space<vmem>>, vector<1x64xf32>
    %c0_i32_109 = arith.constant 0 : i32
    %c0_i32_110 = arith.constant 0 : i32
    %c0_i32_111 = arith.constant 0 : i32
    %158 = tpu.memref_slice %arg7[%c0_i32_109, %c0_i32_110, %c0_i32_111] : memref<2x8x256xf32, #tpu.memory_space<vmem>> -> memref<1x8x256xf32, #tpu.memory_space<vmem>>
    %159 = tpu.memref_squeeze %158 : memref<1x8x256xf32, #tpu.memory_space<vmem>> -> memref<8x256xf32, #tpu.memory_space<vmem>>
    %c7_112 = arith.constant 7 : index
    %c0_113 = arith.constant 0 : index
    %160 = vector.load %159[%c7_112, %c0_113] : memref<8x256xf32, #tpu.memory_space<vmem>>, vector<1x64xf32>
    %161 = vector.shape_cast %118 : vector<1x24x64xf32> to vector<24x64xf32>
    %cst_114 = arith.constant dense<0.000000e+00> : vector<24x192xf32>
    %162 = tpu.matmul %161, %127, %cst_114 {dimension_numbers = #tpu.dot_dimension_numbers<[1], [0], [0], [1], [0, 0, 1, 1], [], []>} : vector<24x64xf32>, vector<64x192xf32>, vector<24x192xf32> -> vector<24x192xf32>
    %163 = vector.broadcast %139 : vector<1x192xf32> to vector<24x192xf32>
    %164 = arith.addf %162, %163 : vector<24x192xf32>
    %165 = vector.shape_cast %164 : vector<24x192xf32> to vector<1x24x192xf32>
    %166 = vector.extract_strided_slice %165 {offsets = [0, 0, 0], sizes = [1, 24, 64], strides = [1, 1, 1]} : vector<1x24x192xf32> to vector<1x24x64xf32>
    %167 = vector.extract_strided_slice %165 {offsets = [0, 0, 64], sizes = [1, 24, 64], strides = [1, 1, 1]} : vector<1x24x192xf32> to vector<1x24x64xf32>
    %168 = vector.extract_strided_slice %165 {offsets = [0, 0, 128], sizes = [1, 24, 64], strides = [1, 1, 1]} : vector<1x24x192xf32> to vector<1x24x64xf32>
    "tpu.trace_start"() <{level = 10 : i32, message = "bqd,bkd->bqk"}> : () -> ()
    %cst_115 = arith.constant dense<0.000000e+00> : vector<1x24x24xf32>
    %169 = tpu.matmul %166, %167, %cst_115 {dimension_numbers = #tpu.dot_dimension_numbers<[2], [2], [1], [1], [0, 0, 0, 1, 1, 1], [0], [0]>} : vector<1x24x64xf32>, vector<1x24x64xf32>, vector<1x24x24xf32> -> vector<1x24x24xf32>
    "tpu.trace_stop"() : () -> ()
    %cst_116 = arith.constant 1.250000e-01 : f32
    %170 = vector.broadcast %cst_116 : f32 to vector<1x24x24xf32>
    %171 = arith.mulf %169, %170 : vector<1x24x24xf32>
    %172 = vector.shape_cast %124 : vector<1x24xf32> to vector<1x1x24xf32>
    %173 = vector.broadcast %172 : vector<1x1x24xf32> to vector<1x24x24xf32>
    %174 = arith.addf %171, %173 : vector<1x24x24xf32>
    %cst_117 = arith.constant dense<0xFF800000> : vector<1x24xf32>
    %175 = vector.multi_reduction <maximumf>, %174, %cst_117 [2] : vector<1x24x24xf32> to vector<1x24xf32>
    %176 = vector.shape_cast %175 : vector<1x24xf32> to vector<1x24x1xf32>
    %177 = vector.broadcast %176 : vector<1x24x1xf32> to vector<1x24x24xf32>
    %178 = arith.subf %174, %177 : vector<1x24x24xf32>
    %179 = math.exp %178 : vector<1x24x24xf32>
    %cst_118 = arith.constant dense<0.000000e+00> : vector<1x24xf32>
    %180 = vector.multi_reduction <add>, %179, %cst_118 [2] : vector<1x24x24xf32> to vector<1x24xf32>
    %181 = vector.shape_cast %180 : vector<1x24xf32> to vector<1x24x1xf32>
    %182 = vector.broadcast %181 : vector<1x24x1xf32> to vector<1x24x24xf32>
    %183 = arith.divf %179, %182 : vector<1x24x24xf32>
    "tpu.trace_start"() <{level = 10 : i32, message = "bqk,bkd->bqd"}> : () -> ()
    %cst_119 = arith.constant dense<0.000000e+00> : vector<1x24x64xf32>
    %184 = tpu.matmul %183, %168, %cst_119 {dimension_numbers = #tpu.dot_dimension_numbers<[2], [1], [1], [2], [0, 0, 0, 1, 1, 2], [0], [0]>} : vector<1x24x24xf32>, vector<1x24x64xf32>, vector<1x24x64xf32> -> vector<1x24x64xf32>
    "tpu.trace_stop"() : () -> ()
    %185 = vector.shape_cast %184 : vector<1x24x64xf32> to vector<24x64xf32>
    %cst_120 = arith.constant dense<0.000000e+00> : vector<24x64xf32>
    %186 = tpu.matmul %185, %130, %cst_120 {dimension_numbers = #tpu.dot_dimension_numbers<[1], [0], [0], [1], [0, 0, 1, 1], [], []>} : vector<24x64xf32>, vector<64x64xf32>, vector<24x64xf32> -> vector<24x64xf32>
    %187 = vector.broadcast %142 : vector<1x64xf32> to vector<24x64xf32>
    %188 = arith.addf %186, %187 : vector<24x64xf32>
    %189 = vector.shape_cast %188 : vector<24x64xf32> to vector<1x24x64xf32>
    %190 = arith.addf %189, %118 : vector<1x24x64xf32>
    %cst_121 = arith.constant dense<0.000000e+00> : vector<1x24xf32>
    %191 = vector.multi_reduction <add>, %190, %cst_121 [2] : vector<1x24x64xf32> to vector<1x24xf32>
    %192 = vector.shape_cast %191 : vector<1x24xf32> to vector<1x24x1xf32>
    %cst_122 = arith.constant 6.400000e+01 : f32
    %193 = vector.broadcast %cst_122 : f32 to vector<1x24x1xf32>
    %194 = arith.divf %192, %193 : vector<1x24x1xf32>
    %195 = vector.broadcast %194 : vector<1x24x1xf32> to vector<1x24x64xf32>
    %196 = arith.subf %190, %195 : vector<1x24x64xf32>
    %197 = arith.mulf %196, %196 : vector<1x24x64xf32>
    %cst_123 = arith.constant dense<0.000000e+00> : vector<1x24xf32>
    %198 = vector.multi_reduction <add>, %197, %cst_123 [2] : vector<1x24x64xf32> to vector<1x24xf32>
    %199 = vector.shape_cast %198 : vector<1x24xf32> to vector<1x24x1xf32>
    %cst_124 = arith.constant 6.400000e+01 : f32
    %200 = vector.broadcast %cst_124 : f32 to vector<1x24x1xf32>
    %201 = arith.divf %199, %200 : vector<1x24x1xf32>
    %202 = vector.broadcast %194 : vector<1x24x1xf32> to vector<1x24x64xf32>
    %203 = arith.subf %190, %202 : vector<1x24x64xf32>
    %cst_125 = arith.constant 9.99999996E-13 : f32
    %204 = vector.broadcast %cst_125 : f32 to vector<1x24x1xf32>
    %205 = arith.addf %201, %204 : vector<1x24x1xf32>
    %206 = math.rsqrt %205 : vector<1x24x1xf32>
    %207 = vector.broadcast %206 : vector<1x24x1xf32> to vector<1x24x64xf32>
    %208 = arith.mulf %203, %207 : vector<1x24x64xf32>
    %209 = vector.shape_cast %145 : vector<1x64xf32> to vector<1x1x64xf32>
    %210 = vector.broadcast %209 : vector<1x1x64xf32> to vector<1x24x64xf32>
    %211 = arith.mulf %208, %210 : vector<1x24x64xf32>
    %212 = vector.shape_cast %148 : vector<1x64xf32> to vector<1x1x64xf32>
    %213 = vector.broadcast %212 : vector<1x1x64xf32> to vector<1x24x64xf32>
    %214 = arith.addf %211, %213 : vector<1x24x64xf32>
    %215 = vector.shape_cast %214 : vector<1x24x64xf32> to vector<24x64xf32>
    %cst_126 = arith.constant dense<0.000000e+00> : vector<24x256xf32>
    %216 = tpu.matmul %215, %133, %cst_126 {dimension_numbers = #tpu.dot_dimension_numbers<[1], [0], [0], [1], [0, 0, 1, 1], [], []>} : vector<24x64xf32>, vector<64x256xf32>, vector<24x256xf32> -> vector<24x256xf32>
    %217 = vector.broadcast %151 : vector<1x256xf32> to vector<24x256xf32>
    %218 = arith.addf %216, %217 : vector<24x256xf32>
    %219 = vector.shape_cast %218 : vector<24x256xf32> to vector<1x24x256xf32>
    %cst_127 = arith.constant 5.000000e-01 : f32
    %220 = vector.broadcast %cst_127 : f32 to vector<1x24x256xf32>
    %221 = arith.mulf %219, %220 : vector<1x24x256xf32>
    %cst_128 = arith.constant 0.707106769 : f32
    %222 = vector.broadcast %cst_128 : f32 to vector<1x24x256xf32>
    %223 = arith.mulf %219, %222 : vector<1x24x256xf32>
    %cst_129 = arith.constant 0.000000e+00 : f32
    %224 = vector.broadcast %cst_129 : f32 to vector<1x24x256xf32>
    %225 = arith.cmpf oge, %223, %224 : vector<1x24x256xf32>
    %cst_130 = arith.constant 1.000000e+00 : f32
    %cst_131 = arith.constant -1.000000e+00 : f32
    %226 = vector.broadcast %cst_130 : f32 to vector<1x24x256xf32>
    %227 = vector.broadcast %cst_131 : f32 to vector<1x24x256xf32>
    %228 = arith.select %225, %226, %227 : vector<1x24x256xi1>, vector<1x24x256xf32>
    %229 = math.absf %223 : vector<1x24x256xf32>
    %cst_132 = arith.constant 0.327591091 : f32
    %230 = vector.broadcast %cst_132 : f32 to vector<1x24x256xf32>
    %231 = arith.mulf %230, %229 : vector<1x24x256xf32>
    %cst_133 = arith.constant 1.000000e+00 : f32
    %232 = vector.broadcast %cst_133 : f32 to vector<1x24x256xf32>
    %233 = arith.addf %232, %231 : vector<1x24x256xf32>
    %cst_134 = arith.constant 1.000000e+00 : f32
    %234 = vector.broadcast %cst_134 : f32 to vector<1x24x256xf32>
    %235 = arith.divf %234, %233 : vector<1x24x256xf32>
    %cst_135 = arith.constant 1.06140542 : f32
    %236 = vector.broadcast %cst_135 : f32 to vector<1x24x256xf32>
    %237 = arith.mulf %236, %235 : vector<1x24x256xf32>
    %cst_136 = arith.constant -1.45315206 : f32
    %238 = vector.broadcast %cst_136 : f32 to vector<1x24x256xf32>
    %239 = arith.addf %237, %238 : vector<1x24x256xf32>
    %240 = arith.mulf %239, %235 : vector<1x24x256xf32>
    %cst_137 = arith.constant 1.42141378 : f32
    %241 = vector.broadcast %cst_137 : f32 to vector<1x24x256xf32>
    %242 = arith.addf %240, %241 : vector<1x24x256xf32>
    %243 = arith.mulf %242, %235 : vector<1x24x256xf32>
    %cst_138 = arith.constant -0.284496725 : f32
    %244 = vector.broadcast %cst_138 : f32 to vector<1x24x256xf32>
    %245 = arith.addf %243, %244 : vector<1x24x256xf32>
    %246 = arith.mulf %245, %235 : vector<1x24x256xf32>
    %cst_139 = arith.constant 0.254829586 : f32
    %247 = vector.broadcast %cst_139 : f32 to vector<1x24x256xf32>
    %248 = arith.addf %246, %247 : vector<1x24x256xf32>
    %249 = arith.mulf %248, %235 : vector<1x24x256xf32>
    %cst_140 = arith.constant 0.000000e+00 : f32
    %250 = vector.broadcast %cst_140 : f32 to vector<1x24x256xf32>
    %251 = arith.subf %250, %229 : vector<1x24x256xf32>
    %252 = arith.mulf %251, %229 : vector<1x24x256xf32>
    %253 = math.exp %252 : vector<1x24x256xf32>
    %254 = arith.mulf %249, %253 : vector<1x24x256xf32>
    %cst_141 = arith.constant 1.000000e+00 : f32
    %255 = vector.broadcast %cst_141 : f32 to vector<1x24x256xf32>
    %256 = arith.subf %255, %254 : vector<1x24x256xf32>
    %257 = arith.mulf %228, %256 : vector<1x24x256xf32>
    %cst_142 = arith.constant 1.000000e+00 : f32
    %258 = vector.broadcast %cst_142 : f32 to vector<1x24x256xf32>
    %259 = arith.addf %258, %257 : vector<1x24x256xf32>
    %260 = arith.mulf %221, %259 : vector<1x24x256xf32>
    %261 = vector.shape_cast %260 : vector<1x24x256xf32> to vector<24x256xf32>
    %cst_143 = arith.constant dense<0.000000e+00> : vector<24x64xf32>
    %262 = tpu.matmul %261, %136, %cst_143 {dimension_numbers = #tpu.dot_dimension_numbers<[1], [0], [0], [1], [0, 0, 1, 1], [], []>} : vector<24x256xf32>, vector<256x64xf32>, vector<24x64xf32> -> vector<24x64xf32>
    %263 = vector.broadcast %154 : vector<1x64xf32> to vector<24x64xf32>
    %264 = arith.addf %262, %263 : vector<24x64xf32>
    %265 = vector.shape_cast %264 : vector<24x64xf32> to vector<1x24x64xf32>
    %266 = arith.addf %265, %214 : vector<1x24x64xf32>
    %cst_144 = arith.constant dense<0.000000e+00> : vector<1x24xf32>
    %267 = vector.multi_reduction <add>, %266, %cst_144 [2] : vector<1x24x64xf32> to vector<1x24xf32>
    %268 = vector.shape_cast %267 : vector<1x24xf32> to vector<1x24x1xf32>
    %cst_145 = arith.constant 6.400000e+01 : f32
    %269 = vector.broadcast %cst_145 : f32 to vector<1x24x1xf32>
    %270 = arith.divf %268, %269 : vector<1x24x1xf32>
    %271 = vector.broadcast %270 : vector<1x24x1xf32> to vector<1x24x64xf32>
    %272 = arith.subf %266, %271 : vector<1x24x64xf32>
    %273 = arith.mulf %272, %272 : vector<1x24x64xf32>
    %cst_146 = arith.constant dense<0.000000e+00> : vector<1x24xf32>
    %274 = vector.multi_reduction <add>, %273, %cst_146 [2] : vector<1x24x64xf32> to vector<1x24xf32>
    %275 = vector.shape_cast %274 : vector<1x24xf32> to vector<1x24x1xf32>
    %cst_147 = arith.constant 6.400000e+01 : f32
    %276 = vector.broadcast %cst_147 : f32 to vector<1x24x1xf32>
    %277 = arith.divf %275, %276 : vector<1x24x1xf32>
    %278 = vector.broadcast %270 : vector<1x24x1xf32> to vector<1x24x64xf32>
    %279 = arith.subf %266, %278 : vector<1x24x64xf32>
    %cst_148 = arith.constant 9.99999996E-13 : f32
    %280 = vector.broadcast %cst_148 : f32 to vector<1x24x1xf32>
    %281 = arith.addf %277, %280 : vector<1x24x1xf32>
    %282 = math.rsqrt %281 : vector<1x24x1xf32>
    %283 = vector.broadcast %282 : vector<1x24x1xf32> to vector<1x24x64xf32>
    %284 = arith.mulf %279, %283 : vector<1x24x64xf32>
    %285 = vector.shape_cast %157 : vector<1x64xf32> to vector<1x1x64xf32>
    %286 = vector.broadcast %285 : vector<1x1x64xf32> to vector<1x24x64xf32>
    %287 = arith.mulf %284, %286 : vector<1x24x64xf32>
    %288 = vector.shape_cast %160 : vector<1x64xf32> to vector<1x1x64xf32>
    %289 = vector.broadcast %288 : vector<1x1x64xf32> to vector<1x24x64xf32>
    %290 = arith.addf %287, %289 : vector<1x24x64xf32>
    %c0_149 = arith.constant 0 : index
    %c0_150 = arith.constant 0 : index
    %c0_151 = arith.constant 0 : index
    %291 = vector.load %arg1[%c0_149, %c0_150, %c0_151] : memref<1x8x32xf32, #tpu.memory_space<vmem>>, vector<1x8x32xf32>
    %cst_152 = arith.constant dense<0.000000e+00> : vector<1x8xf32>
    %292 = vector.multi_reduction <add>, %291, %cst_152 [2] : vector<1x8x32xf32> to vector<1x8xf32>
    %293 = vector.shape_cast %292 : vector<1x8xf32> to vector<1x8x1xf32>
    %cst_153 = arith.constant 3.200000e+01 : f32
    %294 = vector.broadcast %cst_153 : f32 to vector<1x8x1xf32>
    %295 = arith.divf %293, %294 : vector<1x8x1xf32>
    %296 = vector.broadcast %295 : vector<1x8x1xf32> to vector<1x8x32xf32>
    %297 = arith.subf %291, %296 : vector<1x8x32xf32>
    %298 = arith.mulf %297, %297 : vector<1x8x32xf32>
    %cst_154 = arith.constant dense<0.000000e+00> : vector<1x8xf32>
    %299 = vector.multi_reduction <add>, %298, %cst_154 [2] : vector<1x8x32xf32> to vector<1x8xf32>
    %300 = vector.shape_cast %299 : vector<1x8xf32> to vector<1x8x1xf32>
    %cst_155 = arith.constant 3.200000e+01 : f32
    %301 = vector.broadcast %cst_155 : f32 to vector<1x8x1xf32>
    %302 = arith.divf %300, %301 : vector<1x8x1xf32>
    %303 = vector.broadcast %295 : vector<1x8x1xf32> to vector<1x8x32xf32>
    %304 = arith.subf %291, %303 : vector<1x8x32xf32>
    %cst_156 = arith.constant 9.99999996E-13 : f32
    %305 = vector.broadcast %cst_156 : f32 to vector<1x8x1xf32>
    %306 = arith.addf %302, %305 : vector<1x8x1xf32>
    %307 = math.rsqrt %306 : vector<1x8x1xf32>
    %308 = vector.broadcast %307 : vector<1x8x1xf32> to vector<1x8x32xf32>
    %309 = arith.mulf %304, %308 : vector<1x8x32xf32>
    %310 = vector.shape_cast %6 : vector<1x32xf32> to vector<1x1x32xf32>
    %311 = vector.broadcast %310 : vector<1x1x32xf32> to vector<1x8x32xf32>
    %312 = arith.mulf %309, %311 : vector<1x8x32xf32>
    %313 = vector.shape_cast %7 : vector<1x32xf32> to vector<1x1x32xf32>
    %314 = vector.broadcast %313 : vector<1x1x32xf32> to vector<1x8x32xf32>
    %315 = arith.addf %312, %314 : vector<1x8x32xf32>
    %c0_157 = arith.constant 0 : index
    %c0_158 = arith.constant 0 : index
    %c0_159 = arith.constant 0 : index
    %316 = vector.load %arg3[%c0_157, %c0_158, %c0_159] : memref<1x2x32xf32, #tpu.memory_space<vmem>>, vector<1x1x8xf32>
    %cst_160 = arith.constant 1.000000e+00 : f32
    %317 = vector.broadcast %cst_160 : f32 to vector<1x1x8xf32>
    %318 = arith.subf %317, %316 : vector<1x1x8xf32>
    %cst_161 = arith.constant -1.000000e+04 : f32
    %319 = vector.broadcast %cst_161 : f32 to vector<1x1x8xf32>
    %320 = arith.mulf %318, %319 : vector<1x1x8xf32>
    %c0_i32_162 = arith.constant 0 : i32
    %c0_i32_163 = arith.constant 0 : i32
    %c0_i32_164 = arith.constant 0 : i32
    %321 = tpu.memref_slice %arg4[%c0_i32_162, %c0_i32_163, %c0_i32_164] : memref<1x224x128xf32, #tpu.memory_space<vmem>> -> memref<1x224x128xf32, #tpu.memory_space<vmem>>
    %322 = tpu.memref_squeeze %321 : memref<1x224x128xf32, #tpu.memory_space<vmem>> -> memref<224x128xf32, #tpu.memory_space<vmem>>
    %c0_165 = arith.constant 0 : index
    %c0_166 = arith.constant 0 : index
    %323 = vector.load %322[%c0_165, %c0_166] : memref<224x128xf32, #tpu.memory_space<vmem>>, vector<32x96xf32>
    %c0_i32_167 = arith.constant 0 : i32
    %c0_i32_168 = arith.constant 0 : i32
    %c0_i32_169 = arith.constant 0 : i32
    %324 = tpu.memref_slice %arg4[%c0_i32_167, %c0_i32_168, %c0_i32_169] : memref<1x224x128xf32, #tpu.memory_space<vmem>> -> memref<1x224x128xf32, #tpu.memory_space<vmem>>
    %325 = tpu.memref_squeeze %324 : memref<1x224x128xf32, #tpu.memory_space<vmem>> -> memref<224x128xf32, #tpu.memory_space<vmem>>
    %c32_170 = arith.constant 32 : index
    %c0_171 = arith.constant 0 : index
    %326 = vector.load %325[%c32_170, %c0_171] : memref<224x128xf32, #tpu.memory_space<vmem>>, vector<32x32xf32>
    %c0_i32_172 = arith.constant 0 : i32
    %c0_i32_173 = arith.constant 0 : i32
    %c0_i32_174 = arith.constant 0 : i32
    %327 = tpu.memref_slice %arg4[%c0_i32_172, %c0_i32_173, %c0_i32_174] : memref<1x224x128xf32, #tpu.memory_space<vmem>> -> memref<1x224x128xf32, #tpu.memory_space<vmem>>
    %328 = tpu.memref_squeeze %327 : memref<1x224x128xf32, #tpu.memory_space<vmem>> -> memref<224x128xf32, #tpu.memory_space<vmem>>
    %c64_175 = arith.constant 64 : index
    %c0_176 = arith.constant 0 : index
    %329 = vector.load %328[%c64_175, %c0_176] : memref<224x128xf32, #tpu.memory_space<vmem>>, vector<32x128xf32>
    %c0_i32_177 = arith.constant 0 : i32
    %c0_i32_178 = arith.constant 0 : i32
    %c0_i32_179 = arith.constant 0 : i32
    %330 = tpu.memref_slice %arg4[%c0_i32_177, %c0_i32_178, %c0_i32_179] : memref<1x224x128xf32, #tpu.memory_space<vmem>> -> memref<1x224x128xf32, #tpu.memory_space<vmem>>
    %331 = tpu.memref_squeeze %330 : memref<1x224x128xf32, #tpu.memory_space<vmem>> -> memref<224x128xf32, #tpu.memory_space<vmem>>
    %c96 = arith.constant 96 : index
    %c0_180 = arith.constant 0 : index
    %332 = vector.load %331[%c96, %c0_180] : memref<224x128xf32, #tpu.memory_space<vmem>>, vector<128x32xf32>
    %c0_i32_181 = arith.constant 0 : i32
    %c0_i32_182 = arith.constant 0 : i32
    %c0_i32_183 = arith.constant 0 : i32
    %333 = tpu.memref_slice %arg5[%c0_i32_181, %c0_i32_182, %c0_i32_183] : memref<1x8x128xf32, #tpu.memory_space<vmem>> -> memref<1x8x128xf32, #tpu.memory_space<vmem>>
    %334 = tpu.memref_squeeze %333 : memref<1x8x128xf32, #tpu.memory_space<vmem>> -> memref<8x128xf32, #tpu.memory_space<vmem>>
    %c0_184 = arith.constant 0 : index
    %c0_185 = arith.constant 0 : index
    %335 = vector.load %334[%c0_184, %c0_185] : memref<8x128xf32, #tpu.memory_space<vmem>>, vector<1x96xf32>
    %c0_i32_186 = arith.constant 0 : i32
    %c0_i32_187 = arith.constant 0 : i32
    %c0_i32_188 = arith.constant 0 : i32
    %336 = tpu.memref_slice %arg5[%c0_i32_186, %c0_i32_187, %c0_i32_188] : memref<1x8x128xf32, #tpu.memory_space<vmem>> -> memref<1x8x128xf32, #tpu.memory_space<vmem>>
    %337 = tpu.memref_squeeze %336 : memref<1x8x128xf32, #tpu.memory_space<vmem>> -> memref<8x128xf32, #tpu.memory_space<vmem>>
    %c1_189 = arith.constant 1 : index
    %c0_190 = arith.constant 0 : index
    %338 = vector.load %337[%c1_189, %c0_190] : memref<8x128xf32, #tpu.memory_space<vmem>>, vector<1x32xf32>
    %c0_i32_191 = arith.constant 0 : i32
    %c0_i32_192 = arith.constant 0 : i32
    %c0_i32_193 = arith.constant 0 : i32
    %339 = tpu.memref_slice %arg5[%c0_i32_191, %c0_i32_192, %c0_i32_193] : memref<1x8x128xf32, #tpu.memory_space<vmem>> -> memref<1x8x128xf32, #tpu.memory_space<vmem>>
    %340 = tpu.memref_squeeze %339 : memref<1x8x128xf32, #tpu.memory_space<vmem>> -> memref<8x128xf32, #tpu.memory_space<vmem>>
    %c2_194 = arith.constant 2 : index
    %c0_195 = arith.constant 0 : index
    %341 = vector.load %340[%c2_194, %c0_195] : memref<8x128xf32, #tpu.memory_space<vmem>>, vector<1x32xf32>
    %c0_i32_196 = arith.constant 0 : i32
    %c0_i32_197 = arith.constant 0 : i32
    %c0_i32_198 = arith.constant 0 : i32
    %342 = tpu.memref_slice %arg5[%c0_i32_196, %c0_i32_197, %c0_i32_198] : memref<1x8x128xf32, #tpu.memory_space<vmem>> -> memref<1x8x128xf32, #tpu.memory_space<vmem>>
    %343 = tpu.memref_squeeze %342 : memref<1x8x128xf32, #tpu.memory_space<vmem>> -> memref<8x128xf32, #tpu.memory_space<vmem>>
    %c3_199 = arith.constant 3 : index
    %c0_200 = arith.constant 0 : index
    %344 = vector.load %343[%c3_199, %c0_200] : memref<8x128xf32, #tpu.memory_space<vmem>>, vector<1x32xf32>
    %c0_i32_201 = arith.constant 0 : i32
    %c0_i32_202 = arith.constant 0 : i32
    %c0_i32_203 = arith.constant 0 : i32
    %345 = tpu.memref_slice %arg5[%c0_i32_201, %c0_i32_202, %c0_i32_203] : memref<1x8x128xf32, #tpu.memory_space<vmem>> -> memref<1x8x128xf32, #tpu.memory_space<vmem>>
    %346 = tpu.memref_squeeze %345 : memref<1x8x128xf32, #tpu.memory_space<vmem>> -> memref<8x128xf32, #tpu.memory_space<vmem>>
    %c4_204 = arith.constant 4 : index
    %c0_205 = arith.constant 0 : index
    %347 = vector.load %346[%c4_204, %c0_205] : memref<8x128xf32, #tpu.memory_space<vmem>>, vector<1x128xf32>
    %c0_i32_206 = arith.constant 0 : i32
    %c0_i32_207 = arith.constant 0 : i32
    %c0_i32_208 = arith.constant 0 : i32
    %348 = tpu.memref_slice %arg5[%c0_i32_206, %c0_i32_207, %c0_i32_208] : memref<1x8x128xf32, #tpu.memory_space<vmem>> -> memref<1x8x128xf32, #tpu.memory_space<vmem>>
    %349 = tpu.memref_squeeze %348 : memref<1x8x128xf32, #tpu.memory_space<vmem>> -> memref<8x128xf32, #tpu.memory_space<vmem>>
    %c5_209 = arith.constant 5 : index
    %c0_210 = arith.constant 0 : index
    %350 = vector.load %349[%c5_209, %c0_210] : memref<8x128xf32, #tpu.memory_space<vmem>>, vector<1x32xf32>
    %c0_i32_211 = arith.constant 0 : i32
    %c0_i32_212 = arith.constant 0 : i32
    %c0_i32_213 = arith.constant 0 : i32
    %351 = tpu.memref_slice %arg5[%c0_i32_211, %c0_i32_212, %c0_i32_213] : memref<1x8x128xf32, #tpu.memory_space<vmem>> -> memref<1x8x128xf32, #tpu.memory_space<vmem>>
    %352 = tpu.memref_squeeze %351 : memref<1x8x128xf32, #tpu.memory_space<vmem>> -> memref<8x128xf32, #tpu.memory_space<vmem>>
    %c6_214 = arith.constant 6 : index
    %c0_215 = arith.constant 0 : index
    %353 = vector.load %352[%c6_214, %c0_215] : memref<8x128xf32, #tpu.memory_space<vmem>>, vector<1x32xf32>
    %c0_i32_216 = arith.constant 0 : i32
    %c0_i32_217 = arith.constant 0 : i32
    %c0_i32_218 = arith.constant 0 : i32
    %354 = tpu.memref_slice %arg5[%c0_i32_216, %c0_i32_217, %c0_i32_218] : memref<1x8x128xf32, #tpu.memory_space<vmem>> -> memref<1x8x128xf32, #tpu.memory_space<vmem>>
    %355 = tpu.memref_squeeze %354 : memref<1x8x128xf32, #tpu.memory_space<vmem>> -> memref<8x128xf32, #tpu.memory_space<vmem>>
    %c7_219 = arith.constant 7 : index
    %c0_220 = arith.constant 0 : index
    %356 = vector.load %355[%c7_219, %c0_220] : memref<8x128xf32, #tpu.memory_space<vmem>>, vector<1x32xf32>
    %357 = vector.shape_cast %315 : vector<1x8x32xf32> to vector<8x32xf32>
    %cst_221 = arith.constant dense<0.000000e+00> : vector<8x96xf32>
    %358 = tpu.matmul %357, %323, %cst_221 {dimension_numbers = #tpu.dot_dimension_numbers<[1], [0], [0], [1], [0, 0, 1, 1], [], []>} : vector<8x32xf32>, vector<32x96xf32>, vector<8x96xf32> -> vector<8x96xf32>
    %359 = vector.broadcast %335 : vector<1x96xf32> to vector<8x96xf32>
    %360 = arith.addf %358, %359 : vector<8x96xf32>
    %361 = vector.shape_cast %360 : vector<8x96xf32> to vector<1x8x96xf32>
    %362 = vector.extract_strided_slice %361 {offsets = [0, 0, 0], sizes = [1, 8, 32], strides = [1, 1, 1]} : vector<1x8x96xf32> to vector<1x8x32xf32>
    %363 = vector.extract_strided_slice %361 {offsets = [0, 0, 32], sizes = [1, 8, 32], strides = [1, 1, 1]} : vector<1x8x96xf32> to vector<1x8x32xf32>
    %364 = vector.extract_strided_slice %361 {offsets = [0, 0, 64], sizes = [1, 8, 32], strides = [1, 1, 1]} : vector<1x8x96xf32> to vector<1x8x32xf32>
    %365 = vector.extract_strided_slice %362 {offsets = [0, 0, 0], sizes = [1, 8, 16], strides = [1, 1, 1]} : vector<1x8x32xf32> to vector<1x8x16xf32>
    %366 = vector.extract_strided_slice %363 {offsets = [0, 0, 0], sizes = [1, 8, 16], strides = [1, 1, 1]} : vector<1x8x32xf32> to vector<1x8x16xf32>
    "tpu.trace_start"() <{level = 10 : i32, message = "bqd,bkd->bqk"}> : () -> ()
    %cst_222 = arith.constant dense<0.000000e+00> : vector<1x8x8xf32>
    %367 = tpu.matmul %365, %366, %cst_222 {dimension_numbers = #tpu.dot_dimension_numbers<[2], [2], [1], [1], [0, 0, 0, 1, 1, 1], [0], [0]>} : vector<1x8x16xf32>, vector<1x8x16xf32>, vector<1x8x8xf32> -> vector<1x8x8xf32>
    "tpu.trace_stop"() : () -> ()
    %cst_223 = arith.constant 2.500000e-01 : f32
    %368 = vector.broadcast %cst_223 : f32 to vector<1x8x8xf32>
    %369 = arith.mulf %367, %368 : vector<1x8x8xf32>
    %370 = vector.broadcast %320 : vector<1x1x8xf32> to vector<1x8x8xf32>
    %371 = arith.addf %369, %370 : vector<1x8x8xf32>
    %cst_224 = arith.constant dense<0xFF800000> : vector<1x8xf32>
    %372 = vector.multi_reduction <maximumf>, %371, %cst_224 [2] : vector<1x8x8xf32> to vector<1x8xf32>
    %373 = vector.shape_cast %372 : vector<1x8xf32> to vector<1x8x1xf32>
    %374 = vector.broadcast %373 : vector<1x8x1xf32> to vector<1x8x8xf32>
    %375 = arith.subf %371, %374 : vector<1x8x8xf32>
    %376 = math.exp %375 : vector<1x8x8xf32>
    %cst_225 = arith.constant dense<0.000000e+00> : vector<1x8xf32>
    %377 = vector.multi_reduction <add>, %376, %cst_225 [2] : vector<1x8x8xf32> to vector<1x8xf32>
    %378 = vector.shape_cast %377 : vector<1x8xf32> to vector<1x8x1xf32>
    %379 = vector.broadcast %378 : vector<1x8x1xf32> to vector<1x8x8xf32>
    %380 = arith.divf %376, %379 : vector<1x8x8xf32>
    %381 = vector.extract_strided_slice %364 {offsets = [0, 0, 0], sizes = [1, 8, 16], strides = [1, 1, 1]} : vector<1x8x32xf32> to vector<1x8x16xf32>
    "tpu.trace_start"() <{level = 10 : i32, message = "bqk,bkd->bqd"}> : () -> ()
    %cst_226 = arith.constant dense<0.000000e+00> : vector<1x8x16xf32>
    %382 = tpu.matmul %380, %381, %cst_226 {dimension_numbers = #tpu.dot_dimension_numbers<[2], [1], [1], [2], [0, 0, 0, 1, 1, 2], [0], [0]>} : vector<1x8x8xf32>, vector<1x8x16xf32>, vector<1x8x16xf32> -> vector<1x8x16xf32>
    "tpu.trace_stop"() : () -> ()
    %383 = vector.extract_strided_slice %362 {offsets = [0, 0, 16], sizes = [1, 8, 16], strides = [1, 1, 1]} : vector<1x8x32xf32> to vector<1x8x16xf32>
    %384 = vector.extract_strided_slice %363 {offsets = [0, 0, 16], sizes = [1, 8, 16], strides = [1, 1, 1]} : vector<1x8x32xf32> to vector<1x8x16xf32>
    "tpu.trace_start"() <{level = 10 : i32, message = "bqd,bkd->bqk"}> : () -> ()
    %cst_227 = arith.constant dense<0.000000e+00> : vector<1x8x8xf32>
    %385 = tpu.matmul %383, %384, %cst_227 {dimension_numbers = #tpu.dot_dimension_numbers<[2], [2], [1], [1], [0, 0, 0, 1, 1, 1], [0], [0]>} : vector<1x8x16xf32>, vector<1x8x16xf32>, vector<1x8x8xf32> -> vector<1x8x8xf32>
    "tpu.trace_stop"() : () -> ()
    %cst_228 = arith.constant 2.500000e-01 : f32
    %386 = vector.broadcast %cst_228 : f32 to vector<1x8x8xf32>
    %387 = arith.mulf %385, %386 : vector<1x8x8xf32>
    %388 = vector.broadcast %320 : vector<1x1x8xf32> to vector<1x8x8xf32>
    %389 = arith.addf %387, %388 : vector<1x8x8xf32>
    %cst_229 = arith.constant dense<0xFF800000> : vector<1x8xf32>
    %390 = vector.multi_reduction <maximumf>, %389, %cst_229 [2] : vector<1x8x8xf32> to vector<1x8xf32>
    %391 = vector.shape_cast %390 : vector<1x8xf32> to vector<1x8x1xf32>
    %392 = vector.broadcast %391 : vector<1x8x1xf32> to vector<1x8x8xf32>
    %393 = arith.subf %389, %392 : vector<1x8x8xf32>
    %394 = math.exp %393 : vector<1x8x8xf32>
    %cst_230 = arith.constant dense<0.000000e+00> : vector<1x8xf32>
    %395 = vector.multi_reduction <add>, %394, %cst_230 [2] : vector<1x8x8xf32> to vector<1x8xf32>
    %396 = vector.shape_cast %395 : vector<1x8xf32> to vector<1x8x1xf32>
    %397 = vector.broadcast %396 : vector<1x8x1xf32> to vector<1x8x8xf32>
    %398 = arith.divf %394, %397 : vector<1x8x8xf32>
    %399 = vector.extract_strided_slice %364 {offsets = [0, 0, 16], sizes = [1, 8, 16], strides = [1, 1, 1]} : vector<1x8x32xf32> to vector<1x8x16xf32>
    "tpu.trace_start"() <{level = 10 : i32, message = "bqk,bkd->bqd"}> : () -> ()
    %cst_231 = arith.constant dense<0.000000e+00> : vector<1x8x16xf32>
    %400 = tpu.matmul %398, %399, %cst_231 {dimension_numbers = #tpu.dot_dimension_numbers<[2], [1], [1], [2], [0, 0, 0, 1, 1, 2], [0], [0]>} : vector<1x8x8xf32>, vector<1x8x16xf32>, vector<1x8x16xf32> -> vector<1x8x16xf32>
    "tpu.trace_stop"() : () -> ()
    %401 = tpu.concatenate %382, %400 in 2 : vector<1x8x16xf32>, vector<1x8x16xf32> -> vector<1x8x32xf32>
    %402 = vector.shape_cast %401 : vector<1x8x32xf32> to vector<8x32xf32>
    %cst_232 = arith.constant dense<0.000000e+00> : vector<8x32xf32>
    %403 = tpu.matmul %402, %326, %cst_232 {dimension_numbers = #tpu.dot_dimension_numbers<[1], [0], [0], [1], [0, 0, 1, 1], [], []>} : vector<8x32xf32>, vector<32x32xf32>, vector<8x32xf32> -> vector<8x32xf32>
    %404 = vector.broadcast %338 : vector<1x32xf32> to vector<8x32xf32>
    %405 = arith.addf %403, %404 : vector<8x32xf32>
    %406 = vector.shape_cast %405 : vector<8x32xf32> to vector<1x8x32xf32>
    %407 = arith.addf %406, %315 : vector<1x8x32xf32>
    %cst_233 = arith.constant dense<0.000000e+00> : vector<1x8xf32>
    %408 = vector.multi_reduction <add>, %407, %cst_233 [2] : vector<1x8x32xf32> to vector<1x8xf32>
    %409 = vector.shape_cast %408 : vector<1x8xf32> to vector<1x8x1xf32>
    %cst_234 = arith.constant 3.200000e+01 : f32
    %410 = vector.broadcast %cst_234 : f32 to vector<1x8x1xf32>
    %411 = arith.divf %409, %410 : vector<1x8x1xf32>
    %412 = vector.broadcast %411 : vector<1x8x1xf32> to vector<1x8x32xf32>
    %413 = arith.subf %407, %412 : vector<1x8x32xf32>
    %414 = arith.mulf %413, %413 : vector<1x8x32xf32>
    %cst_235 = arith.constant dense<0.000000e+00> : vector<1x8xf32>
    %415 = vector.multi_reduction <add>, %414, %cst_235 [2] : vector<1x8x32xf32> to vector<1x8xf32>
    %416 = vector.shape_cast %415 : vector<1x8xf32> to vector<1x8x1xf32>
    %cst_236 = arith.constant 3.200000e+01 : f32
    %417 = vector.broadcast %cst_236 : f32 to vector<1x8x1xf32>
    %418 = arith.divf %416, %417 : vector<1x8x1xf32>
    %419 = vector.broadcast %411 : vector<1x8x1xf32> to vector<1x8x32xf32>
    %420 = arith.subf %407, %419 : vector<1x8x32xf32>
    %cst_237 = arith.constant 9.99999996E-13 : f32
    %421 = vector.broadcast %cst_237 : f32 to vector<1x8x1xf32>
    %422 = arith.addf %418, %421 : vector<1x8x1xf32>
    %423 = math.rsqrt %422 : vector<1x8x1xf32>
    %424 = vector.broadcast %423 : vector<1x8x1xf32> to vector<1x8x32xf32>
    %425 = arith.mulf %420, %424 : vector<1x8x32xf32>
    %426 = vector.shape_cast %341 : vector<1x32xf32> to vector<1x1x32xf32>
    %427 = vector.broadcast %426 : vector<1x1x32xf32> to vector<1x8x32xf32>
    %428 = arith.mulf %425, %427 : vector<1x8x32xf32>
    %429 = vector.shape_cast %344 : vector<1x32xf32> to vector<1x1x32xf32>
    %430 = vector.broadcast %429 : vector<1x1x32xf32> to vector<1x8x32xf32>
    %431 = arith.addf %428, %430 : vector<1x8x32xf32>
    %432 = vector.shape_cast %431 : vector<1x8x32xf32> to vector<8x32xf32>
    %cst_238 = arith.constant dense<0.000000e+00> : vector<8x128xf32>
    %433 = tpu.matmul %432, %329, %cst_238 {dimension_numbers = #tpu.dot_dimension_numbers<[1], [0], [0], [1], [0, 0, 1, 1], [], []>} : vector<8x32xf32>, vector<32x128xf32>, vector<8x128xf32> -> vector<8x128xf32>
    %434 = vector.broadcast %347 : vector<1x128xf32> to vector<8x128xf32>
    %435 = arith.addf %433, %434 : vector<8x128xf32>
    %436 = vector.shape_cast %435 : vector<8x128xf32> to vector<1x8x128xf32>
    %cst_239 = arith.constant 5.000000e-01 : f32
    %437 = vector.broadcast %cst_239 : f32 to vector<1x8x128xf32>
    %438 = arith.mulf %436, %437 : vector<1x8x128xf32>
    %cst_240 = arith.constant 0.707106769 : f32
    %439 = vector.broadcast %cst_240 : f32 to vector<1x8x128xf32>
    %440 = arith.mulf %436, %439 : vector<1x8x128xf32>
    %cst_241 = arith.constant 0.000000e+00 : f32
    %441 = vector.broadcast %cst_241 : f32 to vector<1x8x128xf32>
    %442 = arith.cmpf oge, %440, %441 : vector<1x8x128xf32>
    %cst_242 = arith.constant 1.000000e+00 : f32
    %cst_243 = arith.constant -1.000000e+00 : f32
    %443 = vector.broadcast %cst_242 : f32 to vector<1x8x128xf32>
    %444 = vector.broadcast %cst_243 : f32 to vector<1x8x128xf32>
    %445 = arith.select %442, %443, %444 : vector<1x8x128xi1>, vector<1x8x128xf32>
    %446 = math.absf %440 : vector<1x8x128xf32>
    %cst_244 = arith.constant 0.327591091 : f32
    %447 = vector.broadcast %cst_244 : f32 to vector<1x8x128xf32>
    %448 = arith.mulf %447, %446 : vector<1x8x128xf32>
    %cst_245 = arith.constant 1.000000e+00 : f32
    %449 = vector.broadcast %cst_245 : f32 to vector<1x8x128xf32>
    %450 = arith.addf %449, %448 : vector<1x8x128xf32>
    %cst_246 = arith.constant 1.000000e+00 : f32
    %451 = vector.broadcast %cst_246 : f32 to vector<1x8x128xf32>
    %452 = arith.divf %451, %450 : vector<1x8x128xf32>
    %cst_247 = arith.constant 1.06140542 : f32
    %453 = vector.broadcast %cst_247 : f32 to vector<1x8x128xf32>
    %454 = arith.mulf %453, %452 : vector<1x8x128xf32>
    %cst_248 = arith.constant -1.45315206 : f32
    %455 = vector.broadcast %cst_248 : f32 to vector<1x8x128xf32>
    %456 = arith.addf %454, %455 : vector<1x8x128xf32>
    %457 = arith.mulf %456, %452 : vector<1x8x128xf32>
    %cst_249 = arith.constant 1.42141378 : f32
    %458 = vector.broadcast %cst_249 : f32 to vector<1x8x128xf32>
    %459 = arith.addf %457, %458 : vector<1x8x128xf32>
    %460 = arith.mulf %459, %452 : vector<1x8x128xf32>
    %cst_250 = arith.constant -0.284496725 : f32
    %461 = vector.broadcast %cst_250 : f32 to vector<1x8x128xf32>
    %462 = arith.addf %460, %461 : vector<1x8x128xf32>
    %463 = arith.mulf %462, %452 : vector<1x8x128xf32>
    %cst_251 = arith.constant 0.254829586 : f32
    %464 = vector.broadcast %cst_251 : f32 to vector<1x8x128xf32>
    %465 = arith.addf %463, %464 : vector<1x8x128xf32>
    %466 = arith.mulf %465, %452 : vector<1x8x128xf32>
    %cst_252 = arith.constant 0.000000e+00 : f32
    %467 = vector.broadcast %cst_252 : f32 to vector<1x8x128xf32>
    %468 = arith.subf %467, %446 : vector<1x8x128xf32>
    %469 = arith.mulf %468, %446 : vector<1x8x128xf32>
    %470 = math.exp %469 : vector<1x8x128xf32>
    %471 = arith.mulf %466, %470 : vector<1x8x128xf32>
    %cst_253 = arith.constant 1.000000e+00 : f32
    %472 = vector.broadcast %cst_253 : f32 to vector<1x8x128xf32>
    %473 = arith.subf %472, %471 : vector<1x8x128xf32>
    %474 = arith.mulf %445, %473 : vector<1x8x128xf32>
    %cst_254 = arith.constant 1.000000e+00 : f32
    %475 = vector.broadcast %cst_254 : f32 to vector<1x8x128xf32>
    %476 = arith.addf %475, %474 : vector<1x8x128xf32>
    %477 = arith.mulf %438, %476 : vector<1x8x128xf32>
    %478 = vector.shape_cast %477 : vector<1x8x128xf32> to vector<8x128xf32>
    %cst_255 = arith.constant dense<0.000000e+00> : vector<8x32xf32>
    %479 = tpu.matmul %478, %332, %cst_255 {dimension_numbers = #tpu.dot_dimension_numbers<[1], [0], [0], [1], [0, 0, 1, 1], [], []>} : vector<8x128xf32>, vector<128x32xf32>, vector<8x32xf32> -> vector<8x32xf32>
    %480 = vector.broadcast %350 : vector<1x32xf32> to vector<8x32xf32>
    %481 = arith.addf %479, %480 : vector<8x32xf32>
    %482 = vector.shape_cast %481 : vector<8x32xf32> to vector<1x8x32xf32>
    %483 = arith.addf %482, %431 : vector<1x8x32xf32>
    %cst_256 = arith.constant dense<0.000000e+00> : vector<1x8xf32>
    %484 = vector.multi_reduction <add>, %483, %cst_256 [2] : vector<1x8x32xf32> to vector<1x8xf32>
    %485 = vector.shape_cast %484 : vector<1x8xf32> to vector<1x8x1xf32>
    %cst_257 = arith.constant 3.200000e+01 : f32
    %486 = vector.broadcast %cst_257 : f32 to vector<1x8x1xf32>
    %487 = arith.divf %485, %486 : vector<1x8x1xf32>
    %488 = vector.broadcast %487 : vector<1x8x1xf32> to vector<1x8x32xf32>
    %489 = arith.subf %483, %488 : vector<1x8x32xf32>
    %490 = arith.mulf %489, %489 : vector<1x8x32xf32>
    %cst_258 = arith.constant dense<0.000000e+00> : vector<1x8xf32>
    %491 = vector.multi_reduction <add>, %490, %cst_258 [2] : vector<1x8x32xf32> to vector<1x8xf32>
    %492 = vector.shape_cast %491 : vector<1x8xf32> to vector<1x8x1xf32>
    %cst_259 = arith.constant 3.200000e+01 : f32
    %493 = vector.broadcast %cst_259 : f32 to vector<1x8x1xf32>
    %494 = arith.divf %492, %493 : vector<1x8x1xf32>
    %495 = vector.broadcast %487 : vector<1x8x1xf32> to vector<1x8x32xf32>
    %496 = arith.subf %483, %495 : vector<1x8x32xf32>
    %cst_260 = arith.constant 9.99999996E-13 : f32
    %497 = vector.broadcast %cst_260 : f32 to vector<1x8x1xf32>
    %498 = arith.addf %494, %497 : vector<1x8x1xf32>
    %499 = math.rsqrt %498 : vector<1x8x1xf32>
    %500 = vector.broadcast %499 : vector<1x8x1xf32> to vector<1x8x32xf32>
    %501 = arith.mulf %496, %500 : vector<1x8x32xf32>
    %502 = vector.shape_cast %353 : vector<1x32xf32> to vector<1x1x32xf32>
    %503 = vector.broadcast %502 : vector<1x1x32xf32> to vector<1x8x32xf32>
    %504 = arith.mulf %501, %503 : vector<1x8x32xf32>
    %505 = vector.shape_cast %356 : vector<1x32xf32> to vector<1x1x32xf32>
    %506 = vector.broadcast %505 : vector<1x1x32xf32> to vector<1x8x32xf32>
    %507 = arith.addf %504, %506 : vector<1x8x32xf32>
    %508 = vector.shape_cast %507 : vector<1x8x32xf32> to vector<8x32xf32>
    %cst_261 = arith.constant dense<0.000000e+00> : vector<8x64xf32>
    %509 = tpu.matmul %508, %1, %cst_261 {dimension_numbers = #tpu.dot_dimension_numbers<[1], [0], [0], [1], [0, 0, 1, 1], [], []>} : vector<8x32xf32>, vector<32x64xf32>, vector<8x64xf32> -> vector<8x64xf32>
    %510 = vector.broadcast %8 : vector<1x64xf32> to vector<8x64xf32>
    %511 = arith.addf %509, %510 : vector<8x64xf32>
    %512 = vector.shape_cast %511 : vector<8x64xf32> to vector<1x8x64xf32>
    %cst_262 = arith.constant 5.000000e-01 : f32
    %513 = vector.broadcast %cst_262 : f32 to vector<1x8x64xf32>
    %514 = arith.mulf %512, %513 : vector<1x8x64xf32>
    %cst_263 = arith.constant 0.707106769 : f32
    %515 = vector.broadcast %cst_263 : f32 to vector<1x8x64xf32>
    %516 = arith.mulf %512, %515 : vector<1x8x64xf32>
    %cst_264 = arith.constant 0.000000e+00 : f32
    %517 = vector.broadcast %cst_264 : f32 to vector<1x8x64xf32>
    %518 = arith.cmpf oge, %516, %517 : vector<1x8x64xf32>
    %cst_265 = arith.constant 1.000000e+00 : f32
    %cst_266 = arith.constant -1.000000e+00 : f32
    %519 = vector.broadcast %cst_265 : f32 to vector<1x8x64xf32>
    %520 = vector.broadcast %cst_266 : f32 to vector<1x8x64xf32>
    %521 = arith.select %518, %519, %520 : vector<1x8x64xi1>, vector<1x8x64xf32>
    %522 = math.absf %516 : vector<1x8x64xf32>
    %cst_267 = arith.constant 0.327591091 : f32
    %523 = vector.broadcast %cst_267 : f32 to vector<1x8x64xf32>
    %524 = arith.mulf %523, %522 : vector<1x8x64xf32>
    %cst_268 = arith.constant 1.000000e+00 : f32
    %525 = vector.broadcast %cst_268 : f32 to vector<1x8x64xf32>
    %526 = arith.addf %525, %524 : vector<1x8x64xf32>
    %cst_269 = arith.constant 1.000000e+00 : f32
    %527 = vector.broadcast %cst_269 : f32 to vector<1x8x64xf32>
    %528 = arith.divf %527, %526 : vector<1x8x64xf32>
    %cst_270 = arith.constant 1.06140542 : f32
    %529 = vector.broadcast %cst_270 : f32 to vector<1x8x64xf32>
    %530 = arith.mulf %529, %528 : vector<1x8x64xf32>
    %cst_271 = arith.constant -1.45315206 : f32
    %531 = vector.broadcast %cst_271 : f32 to vector<1x8x64xf32>
    %532 = arith.addf %530, %531 : vector<1x8x64xf32>
    %533 = arith.mulf %532, %528 : vector<1x8x64xf32>
    %cst_272 = arith.constant 1.42141378 : f32
    %534 = vector.broadcast %cst_272 : f32 to vector<1x8x64xf32>
    %535 = arith.addf %533, %534 : vector<1x8x64xf32>
    %536 = arith.mulf %535, %528 : vector<1x8x64xf32>
    %cst_273 = arith.constant -0.284496725 : f32
    %537 = vector.broadcast %cst_273 : f32 to vector<1x8x64xf32>
    %538 = arith.addf %536, %537 : vector<1x8x64xf32>
    %539 = arith.mulf %538, %528 : vector<1x8x64xf32>
    %cst_274 = arith.constant 0.254829586 : f32
    %540 = vector.broadcast %cst_274 : f32 to vector<1x8x64xf32>
    %541 = arith.addf %539, %540 : vector<1x8x64xf32>
    %542 = arith.mulf %541, %528 : vector<1x8x64xf32>
    %cst_275 = arith.constant 0.000000e+00 : f32
    %543 = vector.broadcast %cst_275 : f32 to vector<1x8x64xf32>
    %544 = arith.subf %543, %522 : vector<1x8x64xf32>
    %545 = arith.mulf %544, %522 : vector<1x8x64xf32>
    %546 = math.exp %545 : vector<1x8x64xf32>
    %547 = arith.mulf %542, %546 : vector<1x8x64xf32>
    %cst_276 = arith.constant 1.000000e+00 : f32
    %548 = vector.broadcast %cst_276 : f32 to vector<1x8x64xf32>
    %549 = arith.subf %548, %547 : vector<1x8x64xf32>
    %550 = arith.mulf %521, %549 : vector<1x8x64xf32>
    %cst_277 = arith.constant 1.000000e+00 : f32
    %551 = vector.broadcast %cst_277 : f32 to vector<1x8x64xf32>
    %552 = arith.addf %551, %550 : vector<1x8x64xf32>
    %553 = arith.mulf %514, %552 : vector<1x8x64xf32>
    %554 = tpu.concatenate %553, %290 in 1 : vector<1x8x64xf32>, vector<1x24x64xf32> -> vector<1x32x64xf32>
    %c0_278 = arith.constant 0 : index
    %c1_279 = arith.constant 1 : index
    %c0_280 = arith.constant 0 : index
    %555 = vector.load %arg3[%c0_278, %c1_279, %c0_280] : memref<1x2x32xf32, #tpu.memory_space<vmem>>, vector<1x1x32xf32>
    %cst_281 = arith.constant 1.000000e+00 : f32
    %556 = vector.broadcast %cst_281 : f32 to vector<1x1x32xf32>
    %557 = arith.subf %556, %555 : vector<1x1x32xf32>
    %cst_282 = arith.constant -1.000000e+04 : f32
    %558 = vector.broadcast %cst_282 : f32 to vector<1x1x32xf32>
    %559 = arith.mulf %557, %558 : vector<1x1x32xf32>
    %c1_i32 = arith.constant 1 : i32
    %c0_i32_283 = arith.constant 0 : i32
    %c0_i32_284 = arith.constant 0 : i32
    %560 = tpu.memref_slice %arg6[%c1_i32, %c0_i32_283, %c0_i32_284] : memref<2x448x256xf32, #tpu.memory_space<vmem>> -> memref<1x448x256xf32, #tpu.memory_space<vmem>>
    %561 = tpu.memref_squeeze %560 : memref<1x448x256xf32, #tpu.memory_space<vmem>> -> memref<448x256xf32, #tpu.memory_space<vmem>>
    %c0_285 = arith.constant 0 : index
    %c0_286 = arith.constant 0 : index
    %562 = vector.load %561[%c0_285, %c0_286] : memref<448x256xf32, #tpu.memory_space<vmem>>, vector<64x192xf32>
    %c1_i32_287 = arith.constant 1 : i32
    %c0_i32_288 = arith.constant 0 : i32
    %c0_i32_289 = arith.constant 0 : i32
    %563 = tpu.memref_slice %arg6[%c1_i32_287, %c0_i32_288, %c0_i32_289] : memref<2x448x256xf32, #tpu.memory_space<vmem>> -> memref<1x448x256xf32, #tpu.memory_space<vmem>>
    %564 = tpu.memref_squeeze %563 : memref<1x448x256xf32, #tpu.memory_space<vmem>> -> memref<448x256xf32, #tpu.memory_space<vmem>>
    %c64_290 = arith.constant 64 : index
    %c0_291 = arith.constant 0 : index
    %565 = vector.load %564[%c64_290, %c0_291] : memref<448x256xf32, #tpu.memory_space<vmem>>, vector<64x64xf32>
    %c1_i32_292 = arith.constant 1 : i32
    %c0_i32_293 = arith.constant 0 : i32
    %c0_i32_294 = arith.constant 0 : i32
    %566 = tpu.memref_slice %arg6[%c1_i32_292, %c0_i32_293, %c0_i32_294] : memref<2x448x256xf32, #tpu.memory_space<vmem>> -> memref<1x448x256xf32, #tpu.memory_space<vmem>>
    %567 = tpu.memref_squeeze %566 : memref<1x448x256xf32, #tpu.memory_space<vmem>> -> memref<448x256xf32, #tpu.memory_space<vmem>>
    %c128_295 = arith.constant 128 : index
    %c0_296 = arith.constant 0 : index
    %568 = vector.load %567[%c128_295, %c0_296] : memref<448x256xf32, #tpu.memory_space<vmem>>, vector<64x256xf32>
    %c1_i32_297 = arith.constant 1 : i32
    %c0_i32_298 = arith.constant 0 : i32
    %c0_i32_299 = arith.constant 0 : i32
    %569 = tpu.memref_slice %arg6[%c1_i32_297, %c0_i32_298, %c0_i32_299] : memref<2x448x256xf32, #tpu.memory_space<vmem>> -> memref<1x448x256xf32, #tpu.memory_space<vmem>>
    %570 = tpu.memref_squeeze %569 : memref<1x448x256xf32, #tpu.memory_space<vmem>> -> memref<448x256xf32, #tpu.memory_space<vmem>>
    %c192_300 = arith.constant 192 : index
    %c0_301 = arith.constant 0 : index
    %571 = vector.load %570[%c192_300, %c0_301] : memref<448x256xf32, #tpu.memory_space<vmem>>, vector<256x64xf32>
    %c1_i32_302 = arith.constant 1 : i32
    %c0_i32_303 = arith.constant 0 : i32
    %c0_i32_304 = arith.constant 0 : i32
    %572 = tpu.memref_slice %arg7[%c1_i32_302, %c0_i32_303, %c0_i32_304] : memref<2x8x256xf32, #tpu.memory_space<vmem>> -> memref<1x8x256xf32, #tpu.memory_space<vmem>>
    %573 = tpu.memref_squeeze %572 : memref<1x8x256xf32, #tpu.memory_space<vmem>> -> memref<8x256xf32, #tpu.memory_space<vmem>>
    %c0_305 = arith.constant 0 : index
    %c0_306 = arith.constant 0 : index
    %574 = vector.load %573[%c0_305, %c0_306] : memref<8x256xf32, #tpu.memory_space<vmem>>, vector<1x192xf32>
    %c1_i32_307 = arith.constant 1 : i32
    %c0_i32_308 = arith.constant 0 : i32
    %c0_i32_309 = arith.constant 0 : i32
    %575 = tpu.memref_slice %arg7[%c1_i32_307, %c0_i32_308, %c0_i32_309] : memref<2x8x256xf32, #tpu.memory_space<vmem>> -> memref<1x8x256xf32, #tpu.memory_space<vmem>>
    %576 = tpu.memref_squeeze %575 : memref<1x8x256xf32, #tpu.memory_space<vmem>> -> memref<8x256xf32, #tpu.memory_space<vmem>>
    %c1_310 = arith.constant 1 : index
    %c0_311 = arith.constant 0 : index
    %577 = vector.load %576[%c1_310, %c0_311] : memref<8x256xf32, #tpu.memory_space<vmem>>, vector<1x64xf32>
    %c1_i32_312 = arith.constant 1 : i32
    %c0_i32_313 = arith.constant 0 : i32
    %c0_i32_314 = arith.constant 0 : i32
    %578 = tpu.memref_slice %arg7[%c1_i32_312, %c0_i32_313, %c0_i32_314] : memref<2x8x256xf32, #tpu.memory_space<vmem>> -> memref<1x8x256xf32, #tpu.memory_space<vmem>>
    %579 = tpu.memref_squeeze %578 : memref<1x8x256xf32, #tpu.memory_space<vmem>> -> memref<8x256xf32, #tpu.memory_space<vmem>>
    %c2_315 = arith.constant 2 : index
    %c0_316 = arith.constant 0 : index
    %580 = vector.load %579[%c2_315, %c0_316] : memref<8x256xf32, #tpu.memory_space<vmem>>, vector<1x64xf32>
    %c1_i32_317 = arith.constant 1 : i32
    %c0_i32_318 = arith.constant 0 : i32
    %c0_i32_319 = arith.constant 0 : i32
    %581 = tpu.memref_slice %arg7[%c1_i32_317, %c0_i32_318, %c0_i32_319] : memref<2x8x256xf32, #tpu.memory_space<vmem>> -> memref<1x8x256xf32, #tpu.memory_space<vmem>>
    %582 = tpu.memref_squeeze %581 : memref<1x8x256xf32, #tpu.memory_space<vmem>> -> memref<8x256xf32, #tpu.memory_space<vmem>>
    %c3_320 = arith.constant 3 : index
    %c0_321 = arith.constant 0 : index
    %583 = vector.load %582[%c3_320, %c0_321] : memref<8x256xf32, #tpu.memory_space<vmem>>, vector<1x64xf32>
    %c1_i32_322 = arith.constant 1 : i32
    %c0_i32_323 = arith.constant 0 : i32
    %c0_i32_324 = arith.constant 0 : i32
    %584 = tpu.memref_slice %arg7[%c1_i32_322, %c0_i32_323, %c0_i32_324] : memref<2x8x256xf32, #tpu.memory_space<vmem>> -> memref<1x8x256xf32, #tpu.memory_space<vmem>>
    %585 = tpu.memref_squeeze %584 : memref<1x8x256xf32, #tpu.memory_space<vmem>> -> memref<8x256xf32, #tpu.memory_space<vmem>>
    %c4_325 = arith.constant 4 : index
    %c0_326 = arith.constant 0 : index
    %586 = vector.load %585[%c4_325, %c0_326] : memref<8x256xf32, #tpu.memory_space<vmem>>, vector<1x256xf32>
    %c1_i32_327 = arith.constant 1 : i32
    %c0_i32_328 = arith.constant 0 : i32
    %c0_i32_329 = arith.constant 0 : i32
    %587 = tpu.memref_slice %arg7[%c1_i32_327, %c0_i32_328, %c0_i32_329] : memref<2x8x256xf32, #tpu.memory_space<vmem>> -> memref<1x8x256xf32, #tpu.memory_space<vmem>>
    %588 = tpu.memref_squeeze %587 : memref<1x8x256xf32, #tpu.memory_space<vmem>> -> memref<8x256xf32, #tpu.memory_space<vmem>>
    %c5_330 = arith.constant 5 : index
    %c0_331 = arith.constant 0 : index
    %589 = vector.load %588[%c5_330, %c0_331] : memref<8x256xf32, #tpu.memory_space<vmem>>, vector<1x64xf32>
    %c1_i32_332 = arith.constant 1 : i32
    %c0_i32_333 = arith.constant 0 : i32
    %c0_i32_334 = arith.constant 0 : i32
    %590 = tpu.memref_slice %arg7[%c1_i32_332, %c0_i32_333, %c0_i32_334] : memref<2x8x256xf32, #tpu.memory_space<vmem>> -> memref<1x8x256xf32, #tpu.memory_space<vmem>>
    %591 = tpu.memref_squeeze %590 : memref<1x8x256xf32, #tpu.memory_space<vmem>> -> memref<8x256xf32, #tpu.memory_space<vmem>>
    %c6_335 = arith.constant 6 : index
    %c0_336 = arith.constant 0 : index
    %592 = vector.load %591[%c6_335, %c0_336] : memref<8x256xf32, #tpu.memory_space<vmem>>, vector<1x64xf32>
    %c1_i32_337 = arith.constant 1 : i32
    %c0_i32_338 = arith.constant 0 : i32
    %c0_i32_339 = arith.constant 0 : i32
    %593 = tpu.memref_slice %arg7[%c1_i32_337, %c0_i32_338, %c0_i32_339] : memref<2x8x256xf32, #tpu.memory_space<vmem>> -> memref<1x8x256xf32, #tpu.memory_space<vmem>>
    %594 = tpu.memref_squeeze %593 : memref<1x8x256xf32, #tpu.memory_space<vmem>> -> memref<8x256xf32, #tpu.memory_space<vmem>>
    %c7_340 = arith.constant 7 : index
    %c0_341 = arith.constant 0 : index
    %595 = vector.load %594[%c7_340, %c0_341] : memref<8x256xf32, #tpu.memory_space<vmem>>, vector<1x64xf32>
    %596 = vector.shape_cast %554 : vector<1x32x64xf32> to vector<32x64xf32>
    %cst_342 = arith.constant dense<0.000000e+00> : vector<32x192xf32>
    %597 = tpu.matmul %596, %562, %cst_342 {dimension_numbers = #tpu.dot_dimension_numbers<[1], [0], [0], [1], [0, 0, 1, 1], [], []>} : vector<32x64xf32>, vector<64x192xf32>, vector<32x192xf32> -> vector<32x192xf32>
    %598 = vector.broadcast %574 : vector<1x192xf32> to vector<32x192xf32>
    %599 = arith.addf %597, %598 : vector<32x192xf32>
    %600 = vector.shape_cast %599 : vector<32x192xf32> to vector<1x32x192xf32>
    %601 = vector.extract_strided_slice %600 {offsets = [0, 0, 0], sizes = [1, 32, 64], strides = [1, 1, 1]} : vector<1x32x192xf32> to vector<1x32x64xf32>
    %602 = vector.extract_strided_slice %600 {offsets = [0, 0, 64], sizes = [1, 32, 64], strides = [1, 1, 1]} : vector<1x32x192xf32> to vector<1x32x64xf32>
    %603 = vector.extract_strided_slice %600 {offsets = [0, 0, 128], sizes = [1, 32, 64], strides = [1, 1, 1]} : vector<1x32x192xf32> to vector<1x32x64xf32>
    "tpu.trace_start"() <{level = 10 : i32, message = "bqd,bkd->bqk"}> : () -> ()
    %cst_343 = arith.constant dense<0.000000e+00> : vector<1x32x32xf32>
    %604 = tpu.matmul %601, %602, %cst_343 {dimension_numbers = #tpu.dot_dimension_numbers<[2], [2], [1], [1], [0, 0, 0, 1, 1, 1], [0], [0]>} : vector<1x32x64xf32>, vector<1x32x64xf32>, vector<1x32x32xf32> -> vector<1x32x32xf32>
    "tpu.trace_stop"() : () -> ()
    %cst_344 = arith.constant 1.250000e-01 : f32
    %605 = vector.broadcast %cst_344 : f32 to vector<1x32x32xf32>
    %606 = arith.mulf %604, %605 : vector<1x32x32xf32>
    %607 = vector.broadcast %559 : vector<1x1x32xf32> to vector<1x32x32xf32>
    %608 = arith.addf %606, %607 : vector<1x32x32xf32>
    %cst_345 = arith.constant dense<0xFF800000> : vector<1x32xf32>
    %609 = vector.multi_reduction <maximumf>, %608, %cst_345 [2] : vector<1x32x32xf32> to vector<1x32xf32>
    %610 = vector.shape_cast %609 : vector<1x32xf32> to vector<1x32x1xf32>
    %611 = vector.broadcast %610 : vector<1x32x1xf32> to vector<1x32x32xf32>
    %612 = arith.subf %608, %611 : vector<1x32x32xf32>
    %613 = math.exp %612 : vector<1x32x32xf32>
    %cst_346 = arith.constant dense<0.000000e+00> : vector<1x32xf32>
    %614 = vector.multi_reduction <add>, %613, %cst_346 [2] : vector<1x32x32xf32> to vector<1x32xf32>
    %615 = vector.shape_cast %614 : vector<1x32xf32> to vector<1x32x1xf32>
    %616 = vector.broadcast %615 : vector<1x32x1xf32> to vector<1x32x32xf32>
    %617 = arith.divf %613, %616 : vector<1x32x32xf32>
    "tpu.trace_start"() <{level = 10 : i32, message = "bqk,bkd->bqd"}> : () -> ()
    %cst_347 = arith.constant dense<0.000000e+00> : vector<1x32x64xf32>
    %618 = tpu.matmul %617, %603, %cst_347 {dimension_numbers = #tpu.dot_dimension_numbers<[2], [1], [1], [2], [0, 0, 0, 1, 1, 2], [0], [0]>} : vector<1x32x32xf32>, vector<1x32x64xf32>, vector<1x32x64xf32> -> vector<1x32x64xf32>
    "tpu.trace_stop"() : () -> ()
    %619 = vector.shape_cast %618 : vector<1x32x64xf32> to vector<32x64xf32>
    %cst_348 = arith.constant dense<0.000000e+00> : vector<32x64xf32>
    %620 = tpu.matmul %619, %565, %cst_348 {dimension_numbers = #tpu.dot_dimension_numbers<[1], [0], [0], [1], [0, 0, 1, 1], [], []>} : vector<32x64xf32>, vector<64x64xf32>, vector<32x64xf32> -> vector<32x64xf32>
    %621 = vector.broadcast %577 : vector<1x64xf32> to vector<32x64xf32>
    %622 = arith.addf %620, %621 : vector<32x64xf32>
    %623 = vector.shape_cast %622 : vector<32x64xf32> to vector<1x32x64xf32>
    %624 = arith.addf %623, %554 : vector<1x32x64xf32>
    %cst_349 = arith.constant dense<0.000000e+00> : vector<1x32xf32>
    %625 = vector.multi_reduction <add>, %624, %cst_349 [2] : vector<1x32x64xf32> to vector<1x32xf32>
    %626 = vector.shape_cast %625 : vector<1x32xf32> to vector<1x32x1xf32>
    %cst_350 = arith.constant 6.400000e+01 : f32
    %627 = vector.broadcast %cst_350 : f32 to vector<1x32x1xf32>
    %628 = arith.divf %626, %627 : vector<1x32x1xf32>
    %629 = vector.broadcast %628 : vector<1x32x1xf32> to vector<1x32x64xf32>
    %630 = arith.subf %624, %629 : vector<1x32x64xf32>
    %631 = arith.mulf %630, %630 : vector<1x32x64xf32>
    %cst_351 = arith.constant dense<0.000000e+00> : vector<1x32xf32>
    %632 = vector.multi_reduction <add>, %631, %cst_351 [2] : vector<1x32x64xf32> to vector<1x32xf32>
    %633 = vector.shape_cast %632 : vector<1x32xf32> to vector<1x32x1xf32>
    %cst_352 = arith.constant 6.400000e+01 : f32
    %634 = vector.broadcast %cst_352 : f32 to vector<1x32x1xf32>
    %635 = arith.divf %633, %634 : vector<1x32x1xf32>
    %636 = vector.broadcast %628 : vector<1x32x1xf32> to vector<1x32x64xf32>
    %637 = arith.subf %624, %636 : vector<1x32x64xf32>
    %cst_353 = arith.constant 9.99999996E-13 : f32
    %638 = vector.broadcast %cst_353 : f32 to vector<1x32x1xf32>
    %639 = arith.addf %635, %638 : vector<1x32x1xf32>
    %640 = math.rsqrt %639 : vector<1x32x1xf32>
    %641 = vector.broadcast %640 : vector<1x32x1xf32> to vector<1x32x64xf32>
    %642 = arith.mulf %637, %641 : vector<1x32x64xf32>
    %643 = vector.shape_cast %580 : vector<1x64xf32> to vector<1x1x64xf32>
    %644 = vector.broadcast %643 : vector<1x1x64xf32> to vector<1x32x64xf32>
    %645 = arith.mulf %642, %644 : vector<1x32x64xf32>
    %646 = vector.shape_cast %583 : vector<1x64xf32> to vector<1x1x64xf32>
    %647 = vector.broadcast %646 : vector<1x1x64xf32> to vector<1x32x64xf32>
    %648 = arith.addf %645, %647 : vector<1x32x64xf32>
    %649 = vector.shape_cast %648 : vector<1x32x64xf32> to vector<32x64xf32>
    %cst_354 = arith.constant dense<0.000000e+00> : vector<32x256xf32>
    %650 = tpu.matmul %649, %568, %cst_354 {dimension_numbers = #tpu.dot_dimension_numbers<[1], [0], [0], [1], [0, 0, 1, 1], [], []>} : vector<32x64xf32>, vector<64x256xf32>, vector<32x256xf32> -> vector<32x256xf32>
    %651 = vector.broadcast %586 : vector<1x256xf32> to vector<32x256xf32>
    %652 = arith.addf %650, %651 : vector<32x256xf32>
    %653 = vector.shape_cast %652 : vector<32x256xf32> to vector<1x32x256xf32>
    %cst_355 = arith.constant 5.000000e-01 : f32
    %654 = vector.broadcast %cst_355 : f32 to vector<1x32x256xf32>
    %655 = arith.mulf %653, %654 : vector<1x32x256xf32>
    %cst_356 = arith.constant 0.707106769 : f32
    %656 = vector.broadcast %cst_356 : f32 to vector<1x32x256xf32>
    %657 = arith.mulf %653, %656 : vector<1x32x256xf32>
    %cst_357 = arith.constant 0.000000e+00 : f32
    %658 = vector.broadcast %cst_357 : f32 to vector<1x32x256xf32>
    %659 = arith.cmpf oge, %657, %658 : vector<1x32x256xf32>
    %cst_358 = arith.constant 1.000000e+00 : f32
    %cst_359 = arith.constant -1.000000e+00 : f32
    %660 = vector.broadcast %cst_358 : f32 to vector<1x32x256xf32>
    %661 = vector.broadcast %cst_359 : f32 to vector<1x32x256xf32>
    %662 = arith.select %659, %660, %661 : vector<1x32x256xi1>, vector<1x32x256xf32>
    %663 = math.absf %657 : vector<1x32x256xf32>
    %cst_360 = arith.constant 0.327591091 : f32
    %664 = vector.broadcast %cst_360 : f32 to vector<1x32x256xf32>
    %665 = arith.mulf %664, %663 : vector<1x32x256xf32>
    %cst_361 = arith.constant 1.000000e+00 : f32
    %666 = vector.broadcast %cst_361 : f32 to vector<1x32x256xf32>
    %667 = arith.addf %666, %665 : vector<1x32x256xf32>
    %cst_362 = arith.constant 1.000000e+00 : f32
    %668 = vector.broadcast %cst_362 : f32 to vector<1x32x256xf32>
    %669 = arith.divf %668, %667 : vector<1x32x256xf32>
    %cst_363 = arith.constant 1.06140542 : f32
    %670 = vector.broadcast %cst_363 : f32 to vector<1x32x256xf32>
    %671 = arith.mulf %670, %669 : vector<1x32x256xf32>
    %cst_364 = arith.constant -1.45315206 : f32
    %672 = vector.broadcast %cst_364 : f32 to vector<1x32x256xf32>
    %673 = arith.addf %671, %672 : vector<1x32x256xf32>
    %674 = arith.mulf %673, %669 : vector<1x32x256xf32>
    %cst_365 = arith.constant 1.42141378 : f32
    %675 = vector.broadcast %cst_365 : f32 to vector<1x32x256xf32>
    %676 = arith.addf %674, %675 : vector<1x32x256xf32>
    %677 = arith.mulf %676, %669 : vector<1x32x256xf32>
    %cst_366 = arith.constant -0.284496725 : f32
    %678 = vector.broadcast %cst_366 : f32 to vector<1x32x256xf32>
    %679 = arith.addf %677, %678 : vector<1x32x256xf32>
    %680 = arith.mulf %679, %669 : vector<1x32x256xf32>
    %cst_367 = arith.constant 0.254829586 : f32
    %681 = vector.broadcast %cst_367 : f32 to vector<1x32x256xf32>
    %682 = arith.addf %680, %681 : vector<1x32x256xf32>
    %683 = arith.mulf %682, %669 : vector<1x32x256xf32>
    %cst_368 = arith.constant 0.000000e+00 : f32
    %684 = vector.broadcast %cst_368 : f32 to vector<1x32x256xf32>
    %685 = arith.subf %684, %663 : vector<1x32x256xf32>
    %686 = arith.mulf %685, %663 : vector<1x32x256xf32>
    %687 = math.exp %686 : vector<1x32x256xf32>
    %688 = arith.mulf %683, %687 : vector<1x32x256xf32>
    %cst_369 = arith.constant 1.000000e+00 : f32
    %689 = vector.broadcast %cst_369 : f32 to vector<1x32x256xf32>
    %690 = arith.subf %689, %688 : vector<1x32x256xf32>
    %691 = arith.mulf %662, %690 : vector<1x32x256xf32>
    %cst_370 = arith.constant 1.000000e+00 : f32
    %692 = vector.broadcast %cst_370 : f32 to vector<1x32x256xf32>
    %693 = arith.addf %692, %691 : vector<1x32x256xf32>
    %694 = arith.mulf %655, %693 : vector<1x32x256xf32>
    %695 = vector.shape_cast %694 : vector<1x32x256xf32> to vector<32x256xf32>
    %cst_371 = arith.constant dense<0.000000e+00> : vector<32x64xf32>
    %696 = tpu.matmul %695, %571, %cst_371 {dimension_numbers = #tpu.dot_dimension_numbers<[1], [0], [0], [1], [0, 0, 1, 1], [], []>} : vector<32x256xf32>, vector<256x64xf32>, vector<32x64xf32> -> vector<32x64xf32>
    %697 = vector.broadcast %589 : vector<1x64xf32> to vector<32x64xf32>
    %698 = arith.addf %696, %697 : vector<32x64xf32>
    %699 = vector.shape_cast %698 : vector<32x64xf32> to vector<1x32x64xf32>
    %700 = arith.addf %699, %648 : vector<1x32x64xf32>
    %cst_372 = arith.constant dense<0.000000e+00> : vector<1x32xf32>
    %701 = vector.multi_reduction <add>, %700, %cst_372 [2] : vector<1x32x64xf32> to vector<1x32xf32>
    %702 = vector.shape_cast %701 : vector<1x32xf32> to vector<1x32x1xf32>
    %cst_373 = arith.constant 6.400000e+01 : f32
    %703 = vector.broadcast %cst_373 : f32 to vector<1x32x1xf32>
    %704 = arith.divf %702, %703 : vector<1x32x1xf32>
    %705 = vector.broadcast %704 : vector<1x32x1xf32> to vector<1x32x64xf32>
    %706 = arith.subf %700, %705 : vector<1x32x64xf32>
    %707 = arith.mulf %706, %706 : vector<1x32x64xf32>
    %cst_374 = arith.constant dense<0.000000e+00> : vector<1x32xf32>
    %708 = vector.multi_reduction <add>, %707, %cst_374 [2] : vector<1x32x64xf32> to vector<1x32xf32>
    %709 = vector.shape_cast %708 : vector<1x32xf32> to vector<1x32x1xf32>
    %cst_375 = arith.constant 6.400000e+01 : f32
    %710 = vector.broadcast %cst_375 : f32 to vector<1x32x1xf32>
    %711 = arith.divf %709, %710 : vector<1x32x1xf32>
    %712 = vector.broadcast %704 : vector<1x32x1xf32> to vector<1x32x64xf32>
    %713 = arith.subf %700, %712 : vector<1x32x64xf32>
    %cst_376 = arith.constant 9.99999996E-13 : f32
    %714 = vector.broadcast %cst_376 : f32 to vector<1x32x1xf32>
    %715 = arith.addf %711, %714 : vector<1x32x1xf32>
    %716 = math.rsqrt %715 : vector<1x32x1xf32>
    %717 = vector.broadcast %716 : vector<1x32x1xf32> to vector<1x32x64xf32>
    %718 = arith.mulf %713, %717 : vector<1x32x64xf32>
    %719 = vector.shape_cast %592 : vector<1x64xf32> to vector<1x1x64xf32>
    %720 = vector.broadcast %719 : vector<1x1x64xf32> to vector<1x32x64xf32>
    %721 = arith.mulf %718, %720 : vector<1x32x64xf32>
    %722 = vector.shape_cast %595 : vector<1x64xf32> to vector<1x1x64xf32>
    %723 = vector.broadcast %722 : vector<1x1x64xf32> to vector<1x32x64xf32>
    %724 = arith.addf %721, %723 : vector<1x32x64xf32>
    %725 = vector.shape_cast %724 : vector<1x32x64xf32> to vector<32x64xf32>
    %cst_377 = arith.constant dense<0.000000e+00> : vector<32x32xf32>
    %726 = tpu.matmul %725, %4, %cst_377 {dimension_numbers = #tpu.dot_dimension_numbers<[1], [0], [0], [1], [0, 0, 1, 1], [], []>} : vector<32x64xf32>, vector<64x32xf32>, vector<32x32xf32> -> vector<32x32xf32>
    %727 = vector.broadcast %11 : vector<1x32xf32> to vector<32x32xf32>
    %728 = arith.addf %726, %727 : vector<32x32xf32>
    %729 = vector.shape_cast %728 : vector<32x32xf32> to vector<1x32x32xf32>
    %cst_378 = arith.constant 5.000000e-01 : f32
    %730 = vector.broadcast %cst_378 : f32 to vector<1x32x32xf32>
    %731 = arith.mulf %729, %730 : vector<1x32x32xf32>
    %cst_379 = arith.constant 0.707106769 : f32
    %732 = vector.broadcast %cst_379 : f32 to vector<1x32x32xf32>
    %733 = arith.mulf %729, %732 : vector<1x32x32xf32>
    %cst_380 = arith.constant 0.000000e+00 : f32
    %734 = vector.broadcast %cst_380 : f32 to vector<1x32x32xf32>
    %735 = arith.cmpf oge, %733, %734 : vector<1x32x32xf32>
    %cst_381 = arith.constant 1.000000e+00 : f32
    %cst_382 = arith.constant -1.000000e+00 : f32
    %736 = vector.broadcast %cst_381 : f32 to vector<1x32x32xf32>
    %737 = vector.broadcast %cst_382 : f32 to vector<1x32x32xf32>
    %738 = arith.select %735, %736, %737 : vector<1x32x32xi1>, vector<1x32x32xf32>
    %739 = math.absf %733 : vector<1x32x32xf32>
    %cst_383 = arith.constant 0.327591091 : f32
    %740 = vector.broadcast %cst_383 : f32 to vector<1x32x32xf32>
    %741 = arith.mulf %740, %739 : vector<1x32x32xf32>
    %cst_384 = arith.constant 1.000000e+00 : f32
    %742 = vector.broadcast %cst_384 : f32 to vector<1x32x32xf32>
    %743 = arith.addf %742, %741 : vector<1x32x32xf32>
    %cst_385 = arith.constant 1.000000e+00 : f32
    %744 = vector.broadcast %cst_385 : f32 to vector<1x32x32xf32>
    %745 = arith.divf %744, %743 : vector<1x32x32xf32>
    %cst_386 = arith.constant 1.06140542 : f32
    %746 = vector.broadcast %cst_386 : f32 to vector<1x32x32xf32>
    %747 = arith.mulf %746, %745 : vector<1x32x32xf32>
    %cst_387 = arith.constant -1.45315206 : f32
    %748 = vector.broadcast %cst_387 : f32 to vector<1x32x32xf32>
    %749 = arith.addf %747, %748 : vector<1x32x32xf32>
    %750 = arith.mulf %749, %745 : vector<1x32x32xf32>
    %cst_388 = arith.constant 1.42141378 : f32
    %751 = vector.broadcast %cst_388 : f32 to vector<1x32x32xf32>
    %752 = arith.addf %750, %751 : vector<1x32x32xf32>
    %753 = arith.mulf %752, %745 : vector<1x32x32xf32>
    %cst_389 = arith.constant -0.284496725 : f32
    %754 = vector.broadcast %cst_389 : f32 to vector<1x32x32xf32>
    %755 = arith.addf %753, %754 : vector<1x32x32xf32>
    %756 = arith.mulf %755, %745 : vector<1x32x32xf32>
    %cst_390 = arith.constant 0.254829586 : f32
    %757 = vector.broadcast %cst_390 : f32 to vector<1x32x32xf32>
    %758 = arith.addf %756, %757 : vector<1x32x32xf32>
    %759 = arith.mulf %758, %745 : vector<1x32x32xf32>
    %cst_391 = arith.constant 0.000000e+00 : f32
    %760 = vector.broadcast %cst_391 : f32 to vector<1x32x32xf32>
    %761 = arith.subf %760, %739 : vector<1x32x32xf32>
    %762 = arith.mulf %761, %739 : vector<1x32x32xf32>
    %763 = math.exp %762 : vector<1x32x32xf32>
    %764 = arith.mulf %759, %763 : vector<1x32x32xf32>
    %cst_392 = arith.constant 1.000000e+00 : f32
    %765 = vector.broadcast %cst_392 : f32 to vector<1x32x32xf32>
    %766 = arith.subf %765, %764 : vector<1x32x32xf32>
    %767 = arith.mulf %738, %766 : vector<1x32x32xf32>
    %cst_393 = arith.constant 1.000000e+00 : f32
    %768 = vector.broadcast %cst_393 : f32 to vector<1x32x32xf32>
    %769 = arith.addf %768, %767 : vector<1x32x32xf32>
    %770 = arith.mulf %731, %769 : vector<1x32x32xf32>
    %771 = vector.shape_cast %12 : vector<1x32xf32> to vector<1x1x32xf32>
    "tpu.trace_start"() <{level = 10 : i32, message = "bqd,bkd->bqk"}> : () -> ()
    %cst_394 = arith.constant dense<0.000000e+00> : vector<1x1x32xf32>
    %772 = tpu.matmul %771, %770, %cst_394 {dimension_numbers = #tpu.dot_dimension_numbers<[2], [2], [1], [1], [0, 0, 0, 1, 1, 1], [0], [0]>} : vector<1x1x32xf32>, vector<1x32x32xf32>, vector<1x1x32xf32> -> vector<1x1x32xf32>
    "tpu.trace_stop"() : () -> ()
    %773 = vector.shape_cast %13 : vector<1x1xf32> to vector<1x1x1xf32>
    %774 = vector.broadcast %773 : vector<1x1x1xf32> to vector<1x1x32xf32>
    %775 = arith.addf %772, %774 : vector<1x1x32xf32>
    %cst_395 = arith.constant 0.000000e+00 : f32
    %776 = vector.broadcast %cst_395 : f32 to vector<1x1x32xf32>
    %777 = arith.cmpf oeq, %555, %776 : vector<1x1x32xf32>
    %cst_396 = arith.constant -1.000000e+09 : f32
    %778 = vector.broadcast %cst_396 : f32 to vector<1x1x32xf32>
    %779 = arith.select %777, %778, %775 : vector<1x1x32xi1>, vector<1x1x32xf32>
    %cst_397 = arith.constant dense<0xFF800000> : vector<1x1xf32>
    %780 = vector.multi_reduction <maximumf>, %779, %cst_397 [2] : vector<1x1x32xf32> to vector<1x1xf32>
    %781 = vector.shape_cast %780 : vector<1x1xf32> to vector<1x1x1xf32>
    %782 = vector.broadcast %781 : vector<1x1x1xf32> to vector<1x1x32xf32>
    %783 = arith.subf %779, %782 : vector<1x1x32xf32>
    %784 = math.exp %783 : vector<1x1x32xf32>
    %cst_398 = arith.constant dense<0.000000e+00> : vector<1x1xf32>
    %785 = vector.multi_reduction <add>, %784, %cst_398 [2] : vector<1x1x32xf32> to vector<1x1xf32>
    %786 = vector.shape_cast %785 : vector<1x1xf32> to vector<1x1x1xf32>
    %787 = tpu.reciprocal %786 {approx = true} : vector<1x1x1xf32> -> vector<1x1x1xf32>
    %788 = vector.broadcast %787 : vector<1x1x1xf32> to vector<1x1x32xf32>
    %789 = arith.mulf %784, %788 : vector<1x1x32xf32>
    "tpu.trace_start"() <{level = 10 : i32, message = "bqs,bsd->bqd"}> : () -> ()
    %cst_399 = arith.constant dense<0.000000e+00> : vector<1x1x64xf32>
    %790 = tpu.matmul %789, %724, %cst_399 {dimension_numbers = #tpu.dot_dimension_numbers<[2], [1], [1], [2], [0, 0, 0, 1, 1, 2], [0], [0]>} : vector<1x1x32xf32>, vector<1x32x64xf32>, vector<1x1x64xf32> -> vector<1x1x64xf32>
    "tpu.trace_stop"() : () -> ()
    %c0_400 = arith.constant 0 : index
    %c0_401 = arith.constant 0 : index
    %c0_402 = arith.constant 0 : index
    %791 = vector.load %arg10[%c0_400, %c0_401, %c0_402] : memref<1x1x64xf32, #tpu.memory_space<vmem>>, vector<1x1x64xf32>
    tpu.vector_store %arg10[%c0_400, %c0_401, %c0_402], %790 {strides = array<i32>} : memref<1x1x64xf32, #tpu.memory_space<vmem>>, vector<1x1x64xf32>,
    return
  }
  func.func @transform_0(%arg0: i32) -> (i32, i32, i32) {
    %c0_i32 = arith.constant 0 : i32
    %c0_i32_0 = arith.constant 0 : i32
    %c0_i32_1 = arith.constant 0 : i32
    return %arg0, %c0_i32, %c0_i32_0 : i32, i32, i32
  }
  func.func @transform_1(%arg0: i32) -> (i32, i32, i32) {
    %c0_i32 = arith.constant 0 : i32
    %c0_i32_0 = arith.constant 0 : i32
    %c0_i32_1 = arith.constant 0 : i32
    return %arg0, %c0_i32, %c0_i32_0 : i32, i32, i32
  }
  func.func @transform_2(%arg0: i32) -> (i32, i32, i32) {
    %c0_i32 = arith.constant 0 : i32
    %c0_i32_0 = arith.constant 0 : i32
    %c0_i32_1 = arith.constant 0 : i32
    return %arg0, %c0_i32, %c0_i32_0 : i32, i32, i32
  }
  func.func @transform_3(%arg0: i32) -> (i32, i32, i32) {
    %c0_i32 = arith.constant 0 : i32
    %c0_i32_0 = arith.constant 0 : i32
    %c0_i32_1 = arith.constant 0 : i32
    %c0_i32_2 = arith.constant 0 : i32
    return %c0_i32, %c0_i32_0, %c0_i32_1 : i32, i32, i32
  }
  func.func @transform_4(%arg0: i32) -> (i32, i32, i32) {
    %c0_i32 = arith.constant 0 : i32
    %c0_i32_0 = arith.constant 0 : i32
    %c0_i32_1 = arith.constant 0 : i32
    %c0_i32_2 = arith.constant 0 : i32
    return %c0_i32, %c0_i32_0, %c0_i32_1 : i32, i32, i32
  }
  func.func @transform_5(%arg0: i32) -> (i32, i32, i32) {
    %c0_i32 = arith.constant 0 : i32
    %c0_i32_0 = arith.constant 0 : i32
    %c0_i32_1 = arith.constant 0 : i32
    %c0_i32_2 = arith.constant 0 : i32
    return %c0_i32, %c0_i32_0, %c0_i32_1 : i32, i32, i32
  }
  func.func @transform_6(%arg0: i32) -> (i32, i32, i32) {
    %c0_i32 = arith.constant 0 : i32
    %c0_i32_0 = arith.constant 0 : i32
    %c0_i32_1 = arith.constant 0 : i32
    %c0_i32_2 = arith.constant 0 : i32
    return %c0_i32, %c0_i32_0, %c0_i32_1 : i32, i32, i32
  }
  func.func @transform_7(%arg0: i32) -> (i32, i32) {
    %c0_i32 = arith.constant 0 : i32
    %c0_i32_0 = arith.constant 0 : i32
    %c0_i32_1 = arith.constant 0 : i32
    return %c0_i32, %c0_i32_0 : i32, i32
  }
  func.func @transform_8(%arg0: i32) -> (i32, i32) {
    %c0_i32 = arith.constant 0 : i32
    %c0_i32_0 = arith.constant 0 : i32
    %c0_i32_1 = arith.constant 0 : i32
    return %c0_i32, %c0_i32_0 : i32, i32
  }
  func.func @transform_9(%arg0: i32) -> (i32, i32, i32) {
    %c0_i32 = arith.constant 0 : i32
    %c0_i32_0 = arith.constant 0 : i32
    %c0_i32_1 = arith.constant 0 : i32
    return %arg0, %c0_i32, %c0_i32_0 : i32, i32, i32
  }
}

</mosaic_0001>

<llo_original>
// kernel: fuse_model_forward.1
$region0: #{fuse_model_forward.1}
  #allocation0 [shape = 'u32[]', space=smem, size = 0x4, offset = 0x4, fixed_abs, tag = 'smem constant byte address 0x4 - core index']
  #allocation1 [shape = 'u32[144,128]{1,0:T(1,128)}', space=vmem, size = 0x12000, scoped, tag = 'internal scratch']
  %s0 = inlined_call_operand.vmem [shape: f32[2,8,32], index: 0, kind: input, shape index: {}]
  %s1 = inlined_call_operand.vmem [shape: f32[2,16,48], index: 1, kind: input, shape index: {}]
  %s2 = inlined_call_operand.vmem [shape: f32[2,2,32], index: 2, kind: input, shape index: {}]
  %s3 = inlined_call_operand.vmem [shape: f32[1,224,128], index: 3, kind: input, shape index: {}]
  %s4 = inlined_call_operand.vmem [shape: f32[1,8,128], index: 4, kind: input, shape index: {}]
  %s5 = inlined_call_operand.vmem [shape: f32[2,448,256], index: 5, kind: input, shape index: {}]
  %s6 = inlined_call_operand.vmem [shape: f32[2,8,256], index: 6, kind: input, shape index: {}]
  %s7 = inlined_call_operand.vmem [shape: f32[208,64], index: 7, kind: input, shape index: {}]
  %s8 = inlined_call_operand.vmem [shape: f32[8,64], index: 8, kind: input, shape index: {}]
  %s9 = inlined_call_operand.hbm [shape: f32[2,1,64], index: 9, kind: output, shape index: {}]
  %s10 = sld [smem:[#allocation0]]
  $region69: #{fuse_model_forward.1} parent=0
    _
  %s12 = ssub.s32 1, %s10
  %s13 = scalar_select 0, %s12, %s10
  $region1: #{fuse_model_forward.1} parent=0
    #allocation2 [shape = 'u8[1024]{0}', space=vmem, size = 0x400, scoped, tag = 'output window, operand 0']
    #allocation3 [shape = 's32[2]{0}', space=sflag, size = 0x8, scoped, tag = 'scoped memory for fuse_model_forward.1']
    %14 = vsyncpa [#allocation3], 0
    %s15 = scalar_lea.sflag [#allocation3], 1
    %16 = vsyncpa %s15, 0
    loop: start=0, step=1, limit=4
    $region2: #{fuse_model_forward.1} parent=1 // loop_pre_header
      _
    $region3: #{fuse_model_forward.1} parent=1 // loop_header
      %s18 = sphi 0, %s22
      %p19 = scmp.ge.s32.totalorder %s18, 4
      %s28 = sphi 0, %s30
      %s31 = sphi 0, %s28
      %s32 = sphi 0, %s31
      %s48 = sphi 0, %s32
      %s54 = sphi 0, %s56
      %s57 = sphi 0, %s54
      %s58 = sphi 0, %s57
      %s74 = sphi 0, %s58
      %s80 = sphi 0, %s82
      %s83 = sphi 0, %s80
      %s84 = sphi 0, %s83
      %s100 = sphi 0, %s84
      %s104 = sphi 0, %s104
      %s106 = sphi 0, %s104
      %s107 = sphi 0, %s106
      %s121 = sphi 0, %s107
      %s125 = sphi 0, %s125
      %s127 = sphi 0, %s125
      %s128 = sphi 0, %s127
      %s142 = sphi 0, %s128
      %s146 = sphi 0, %s146
      %s148 = sphi 0, %s146
      %s149 = sphi 0, %s148
      %s163 = sphi 0, %s149
      %s167 = sphi 0, %s167
      %s169 = sphi 0, %s167
      %s170 = sphi 0, %s169
      %s184 = sphi 0, %s170
      %s188 = sphi 0, %s188
      %s190 = sphi 0, %s188
      %s191 = sphi 0, %s190
      %s205 = sphi 0, %s191
      %s209 = sphi 0, %s209
      %s211 = sphi 0, %s209
      %s212 = sphi 0, %s211
      %s226 = sphi 0, %s212
      %s232 = sphi 0, %s234
      %s235 = sphi 0, %s232
      %s236 = sphi 0, %s235
      %s252 = sphi 0, %s236
    $region4: #{fuse_model_forward.1} parent=1 // loop_header_branch
      %21 = sbr.rel (%p19) target = $region8
    $region5: #{fuse_model_forward.1} parent=1 // loop_body
      %s23 = ssub.s32 %s18, 1
      %s24 = ssub.s32 %s18, 2
      %s25 = sadd.s32 %s18, 1
      %s26 = ssub.s32 %s18, %s25
      %p27 = scmp.eq.s32.totalorder %s26, 0
      %s29 = sadd.s32 %s28, 1
      %s30 = scalar_select %p27, %s28, %s29
      %p33 = pneg %p27
      %p34 = scmp.eq.s32.totalorder %s18, 1
      %p35 = por %p33, %p34
      %p36 = scmp.ne.s32.totalorder %s28, %s31
      %p37 = scmp.eq.s32.totalorder %s18, 0
      %p38 = por %p36, %p37
      %p39 = scmp.ne.s32.totalorder %s28, %s31
      %p40 = scmp.eq.s32.totalorder %s23, 1
      %p41 = por %p39, %p40
      %p42 = scmp.ne.s32.totalorder %s31, %s32
      %p43 = scmp.eq.s32.totalorder %s23, 0
      %p44 = por %p42, %p43
      %p45 = scmp.ne.s32.totalorder %s31, %s32
      %p46 = scmp.eq.s32.totalorder %s24, 1
      %p47 = por %p45, %p46
      %p49 = scmp.ne.s32.totalorder %s32, %s48
      %p50 = scmp.eq.s32.totalorder %s24, 0
      %p51 = por %p49, %p50
      %s52 = ssub.s32 %s18, %s25
      %p53 = scmp.eq.s32.totalorder %s52, 0
      %s55 = sadd.s32 %s54, 1
      %s56 = scalar_select %p53, %s54, %s55
      %p59 = pneg %p53
      %p60 = scmp.eq.s32.totalorder %s18, 1
      %p61 = por %p59, %p60
      %p62 = scmp.ne.s32.totalorder %s54, %s57
      %p63 = scmp.eq.s32.totalorder %s18, 0
      %p64 = por %p62, %p63
      %p65 = scmp.ne.s32.totalorder %s54, %s57
      %p66 = scmp.eq.s32.totalorder %s23, 1
      %p67 = por %p65, %p66
      %p68 = scmp.ne.s32.totalorder %s57, %s58
      %p69 = scmp.eq.s32.totalorder %s23, 0
      %p70 = por %p68, %p69
      %p71 = scmp.ne.s32.totalorder %s57, %s58
      %p72 = scmp.eq.s32.totalorder %s24, 1
      %p73 = por %p71, %p72
      %p75 = scmp.ne.s32.totalorder %s58, %s74
      %p76 = scmp.eq.s32.totalorder %s24, 0
      %p77 = por %p75, %p76
      %s78 = ssub.s32 %s18, %s25
      %p79 = scmp.eq.s32.totalorder %s78, 0
      %s81 = sadd.s32 %s80, 1
      %s82 = scalar_select %p79, %s80, %s81
      %p85 = pneg %p79
      %p86 = scmp.eq.s32.totalorder %s18, 1
      %p87 = por %p85, %p86
      %p88 = scmp.ne.s32.totalorder %s80, %s83
      %p89 = scmp.eq.s32.totalorder %s18, 0
      %p90 = por %p88, %p89
      %p91 = scmp.ne.s32.totalorder %s80, %s83
      %p92 = scmp.eq.s32.totalorder %s23, 1
      %p93 = por %p91, %p92
      %p94 = scmp.ne.s32.totalorder %s83, %s84
      %p95 = scmp.eq.s32.totalorder %s23, 0
      %p96 = por %p94, %p95
      %p97 = scmp.ne.s32.totalorder %s83, %s84
      %p98 = scmp.eq.s32.totalorder %s24, 1
      %p99 = por %p97, %p98
      %p101 = scmp.ne.s32.totalorder %s84, %s100
      %p102 = scmp.eq.s32.totalorder %s24, 0
      %p103 = por %p101, %p102
      %s105 = sadd.s32 %s104, 1
      %p108 = scmp.eq.s32.totalorder %s18, 1
      %p109 = scmp.ne.s32.totalorder %s104, %s106
      %p110 = scmp.eq.s32.totalorder %s18, 0
      %p111 = por %p109, %p110
      %p112 = scmp.ne.s32.totalorder %s104, %s106
      %p113 = scmp.eq.s32.totalorder %s23, 1
      %p114 = por %p112, %p113
      %p115 = scmp.ne.s32.totalorder %s106, %s107
      %p116 = scmp.eq.s32.totalorder %s23, 0
      %p117 = por %p115, %p116
      %p118 = scmp.ne.s32.totalorder %s106, %s107
      %p119 = scmp.eq.s32.totalorder %s24, 1
      %p120 = por %p118, %p119
      %p122 = scmp.ne.s32.totalorder %s107, %s121
      %p123 = scmp.eq.s32.totalorder %s24, 0
      %p124 = por %p122, %p123
      %s126 = sadd.s32 %s125, 1
      %p129 = scmp.eq.s32.totalorder %s18, 1
      %p130 = scmp.ne.s32.totalorder %s125, %s127
      %p131 = scmp.eq.s32.totalorder %s18, 0
      %p132 = por %p130, %p131
      %p133 = scmp.ne.s32.totalorder %s125, %s127
      %p134 = scmp.eq.s32.totalorder %s23, 1
      %p135 = por %p133, %p134
      %p136 = scmp.ne.s32.totalorder %s127, %s128
      %p137 = scmp.eq.s32.totalorder %s23, 0
      %p138 = por %p136, %p137
      %p139 = scmp.ne.s32.totalorder %s127, %s128
      %p140 = scmp.eq.s32.totalorder %s24, 1
      %p141 = por %p139, %p140
      %p143 = scmp.ne.s32.totalorder %s128, %s142
      %p144 = scmp.eq.s32.totalorder %s24, 0
      %p145 = por %p143, %p144
      %s147 = sadd.s32 %s146, 1
      %p150 = scmp.eq.s32.totalorder %s18, 1
      %p151 = scmp.ne.s32.totalorder %s146, %s148
      %p152 = scmp.eq.s32.totalorder %s18, 0
      %p153 = por %p151, %p152
      %p154 = scmp.ne.s32.totalorder %s146, %s148
      %p155 = scmp.eq.s32.totalorder %s23, 1
      %p156 = por %p154, %p155
      %p157 = scmp.ne.s32.totalorder %s148, %s149
      %p158 = scmp.eq.s32.totalorder %s23, 0
      %p159 = por %p157, %p158
      %p160 = scmp.ne.s32.totalorder %s148, %s149
      %p161 = scmp.eq.s32.totalorder %s24, 1
      %p162 = por %p160, %p161
      %p164 = scmp.ne.s32.totalorder %s149, %s163
      %p165 = scmp.eq.s32.totalorder %s24, 0
      %p166 = por %p164, %p165
      %s168 = sadd.s32 %s167, 1
      %p171 = scmp.eq.s32.totalorder %s18, 1
      %p172 = scmp.ne.s32.totalorder %s167, %s169
      %p173 = scmp.eq.s32.totalorder %s18, 0
      %p174 = por %p172, %p173
      %p175 = scmp.ne.s32.totalorder %s167, %s169
      %p176 = scmp.eq.s32.totalorder %s23, 1
      %p177 = por %p175, %p176
      %p178 = scmp.ne.s32.totalorder %s169, %s170
      %p179 = scmp.eq.s32.totalorder %s23, 0
      %p180 = por %p178, %p179
      %p181 = scmp.ne.s32.totalorder %s169, %s170
      %p182 = scmp.eq.s32.totalorder %s24, 1
      %p183 = por %p181, %p182
      %p185 = scmp.ne.s32.totalorder %s170, %s184
      %p186 = scmp.eq.s32.totalorder %s24, 0
      %p187 = por %p185, %p186
      %s189 = sadd.s32 %s188, 1
      %p192 = scmp.eq.s32.totalorder %s18, 1
      %p193 = scmp.ne.s32.totalorder %s188, %s190
      %p194 = scmp.eq.s32.totalorder %s18, 0
      %p195 = por %p193, %p194
      %p196 = scmp.ne.s32.totalorder %s188, %s190
      %p197 = scmp.eq.s32.totalorder %s23, 1
      %p198 = por %p196, %p197
      %p199 = scmp.ne.s32.totalorder %s190, %s191
      %p200 = scmp.eq.s32.totalorder %s23, 0
      %p201 = por %p199, %p200
      %p202 = scmp.ne.s32.totalorder %s190, %s191
      %p203 = scmp.eq.s32.totalorder %s24, 1
      %p204 = por %p202, %p203
      %p206 = scmp.ne.s32.totalorder %s191, %s205
      %p207 = scmp.eq.s32.totalorder %s24, 0
      %p208 = por %p206, %p207
      %s210 = sadd.s32 %s209, 1
      %p213 = scmp.eq.s32.totalorder %s18, 1
      %p214 = scmp.ne.s32.totalorder %s209, %s211
      %p215 = scmp.eq.s32.totalorder %s18, 0
      %p216 = por %p214, %p215
      %p217 = scmp.ne.s32.totalorder %s209, %s211
      %p218 = scmp.eq.s32.totalorder %s23, 1
      %p219 = por %p217, %p218
      %p220 = scmp.ne.s32.totalorder %s211, %s212
      %p221 = scmp.eq.s32.totalorder %s23, 0
      %p222 = por %p220, %p221
      %p223 = scmp.ne.s32.totalorder %s211, %s212
      %p224 = scmp.eq.s32.totalorder %s24, 1
      %p225 = por %p223, %p224
      %p227 = scmp.ne.s32.totalorder %s212, %s226
      %p228 = scmp.eq.s32.totalorder %s24, 0
      %p229 = por %p227, %p228
      %s230 = ssub.s32 %s18, %s25
      %p231 = scmp.eq.s32.totalorder %s230, 0
      %s233 = sadd.s32 %s232, 1
      %s234 = scalar_select %p231, %s232, %s233
      %p237 = pneg %p231
      %p238 = scmp.eq.s32.totalorder %s18, 1
      %p239 = por %p237, %p238
      %p240 = scmp.ne.s32.totalorder %s232, %s235
      %p241 = scmp.eq.s32.totalorder %s18, 0
      %p242 = por %p240, %p241
      %p243 = scmp.ne.s32.totalorder %s232, %s235
      %p244 = scmp.eq.s32.totalorder %s23, 1
      %p245 = por %p243, %p244
      %p246 = scmp.ne.s32.totalorder %s235, %s236
      %p247 = scmp.eq.s32.totalorder %s23, 0
      %p248 = por %p246, %p247
      %p249 = scmp.ne.s32.totalorder %s235, %s236
      %p250 = scmp.eq.s32.totalorder %s24, 1
      %p251 = por %p249, %p250
      %p253 = scmp.ne.s32.totalorder %s236, %s252
      %p254 = scmp.eq.s32.totalorder %s24, 0
      %p255 = por %p253, %p254
      %p256 = scmp.le.s32.totalorder 1, %s18
      %p257 = scmp.lt.s32.totalorder %s18, 3
      %p258 = pnand %p256, %p257
      %p259 = pneg %p258
      // Predicated region
      $region9: #{fuse_model_forward.1} parent=5 // pred_check
        _
      $region10: #{fuse_model_forward.1} parent=5 // pred_check_branch
        %261 = sbr.rel (%p258) target = $region12
      $region11: #{fuse_model_forward.1} parent=5 // pred_region
        %s262 = ssub.s32 %s18, 1
        // Predicated region
        $region13: #{fuse_model_forward.1} parent=11 // pred_check
          %p263 = pneg %p117
        $region14: #{fuse_model_forward.1} parent=11 // pred_check_branch
          %265 = sbr.rel (%p263) target = $region16
        $region15: #{fuse_model_forward.1} parent=11 // pred_region
          _
        $region16: #{fuse_model_forward.1} parent=11 // pred_fallthru
          _
        // Predicated region
        $region17: #{fuse_model_forward.1} parent=11 // pred_check
          %p266 = pneg %p138
        $region18: #{fuse_model_forward.1} parent=11 // pred_check_branch
          %268 = sbr.rel (%p266) target = $region20
        $region19: #{fuse_model_forward.1} parent=11 // pred_region
          _
        $region20: #{fuse_model_forward.1} parent=11 // pred_fallthru
          _
        // Predicated region
        $region21: #{fuse_model_forward.1} parent=11 // pred_check
          %p269 = pneg %p159
        $region22: #{fuse_model_forward.1} parent=11 // pred_check_branch
          %271 = sbr.rel (%p269) target = $region24
        $region23: #{fuse_model_forward.1} parent=11 // pred_region
          _
        $region24: #{fuse_model_forward.1} parent=11 // pred_fallthru
          _
        // Predicated region
        $region25: #{fuse_model_forward.1} parent=11 // pred_check
          %p272 = pneg %p180
        $region26: #{fuse_model_forward.1} parent=11 // pred_check_branch
          %274 = sbr.rel (%p272) target = $region28
        $region27: #{fuse_model_forward.1} parent=11 // pred_region
          _
        $region28: #{fuse_model_forward.1} parent=11 // pred_fallthru
          _
        // Predicated region
        $region29: #{fuse_model_forward.1} parent=11 // pred_check
          %p275 = pneg %p201
        $region30: #{fuse_model_forward.1} parent=11 // pred_check_branch
          %277 = sbr.rel (%p275) target = $region32
        $region31: #{fuse_model_forward.1} parent=11 // pred_region
          _
        $region32: #{fuse_model_forward.1} parent=11 // pred_fallthru
          _
        // Predicated region
        $region33: #{fuse_model_forward.1} parent=11 // pred_check
          %p278 = pneg %p222
        $region34: #{fuse_model_forward.1} parent=11 // pred_check_branch
          %280 = sbr.rel (%p278) target = $region36
        $region35: #{fuse_model_forward.1} parent=11 // pred_region
          _
        $region36: #{fuse_model_forward.1} parent=11 // pred_fallthru
          _
      $region12: #{fuse_model_forward.1} parent=5 // pred_fallthru
        _
      %p281 = scmp.lt.s32.totalorder %s18, 2
      // Predicated region
      $region37: #{fuse_model_forward.1} parent=5 // pred_check
        %p282 = pneg %p281
      $region38: #{fuse_model_forward.1} parent=5 // pred_check_branch
        %284 = sbr.rel (%p282) target = $region40
      $region39: #{fuse_model_forward.1} parent=5 // pred_region
        // Predicated region
        $region41: #{fuse_model_forward.1} parent=39 // pred_check
          %p285 = pneg %p38
        $region42: #{fuse_model_forward.1} parent=39 // pred_check_branch
          %287 = sbr.rel (%p285) target = $region44
        $region43: #{fuse_model_forward.1} parent=39 // pred_region
          %p288 = scmp.lt.s32.totalorder %s18, 1
          %s289 = scalar_select %p288, %s18, 1
          %s290 = smul.addr %s289, 8
          %s291 = scalar_lea.vmem %s0, %s290
        $region44: #{fuse_model_forward.1} parent=39 // pred_fallthru
          _
        // Predicated region
        $region45: #{fuse_model_forward.1} parent=39 // pred_check
          %p292 = pneg %p64
        $region46: #{fuse_model_forward.1} parent=39 // pred_check_branch
          %294 = sbr.rel (%p292) target = $region48
        $region47: #{fuse_model_forward.1} parent=39 // pred_region
          %p295 = scmp.lt.s32.totalorder %s18, 1
          %s296 = scalar_select %p295, %s18, 1
          %s297 = smul.addr %s296, 2
          %s298 = smul.addr %s297, 8
          %s299 = scalar_lea.vmem %s1, %s298
        $region48: #{fuse_model_forward.1} parent=39 // pred_fallthru
          _
        // Predicated region
        $region49: #{fuse_model_forward.1} parent=39 // pred_check
          %p300 = pneg %p90
        $region50: #{fuse_model_forward.1} parent=39 // pred_check_branch
          %302 = sbr.rel (%p300) target = $region52
        $region51: #{fuse_model_forward.1} parent=39 // pred_region
          %p303 = scmp.lt.s32.totalorder %s18, 1
          %s304 = scalar_select %p303, %s18, 1
          %s305 = smul.addr %s304, 2
          %s306 = scalar_lea.vmem %s2, %s305
        $region52: #{fuse_model_forward.1} parent=39 // pred_fallthru
          _
      $region40: #{fuse_model_forward.1} parent=5 // pred_fallthru
        _
      %p307 = scmp.le.s32.totalorder 1, %s18
      %p308 = scmp.lt.s32.totalorder %s18, 3
      %p309 = pnand %p307, %p308
      %p310 = pneg %p309
      // Predicated region
      $region53: #{fuse_model_forward.1} parent=5 // pred_check
        _
      $region54: #{fuse_model_forward.1} parent=5 // pred_check_branch
        %312 = sbr.rel (%p309) target = $region56
      $region55: #{fuse_model_forward.1} parent=5 // pred_region
        %s313 = ssub.s32 %s18, 1
        %p314 = scmp.lt.s32.totalorder %s23, 1
        %s315 = scalar_select %p314, %s23, 1
        %s316 = smul.addr %s315, 8
        %s317 = scalar_lea.vmem %s0, %s316
        %p318 = pneg %p44
        %p319 = pneg %p41
        %p320 = scmp.lt.s32.totalorder %s23, 1
        %s321 = scalar_select %p320, %s23, 1
        %s322 = smul.addr %s321, 2
        %s323 = smul.addr %s322, 8
        %s324 = scalar_lea.vmem %s1, %s323
        %p325 = pneg %p70
        %p326 = pneg %p67
        %p327 = scmp.lt.s32.totalorder %s23, 1
        %s328 = scalar_select %p327, %s23, 1
        %s329 = smul.addr %s328, 2
        %s330 = scalar_lea.vmem %s2, %s329
        %p331 = pneg %p96
        %p332 = pneg %p93
        %p333 = pneg %p117
        %p334 = pneg %p114
        %p335 = pneg %p138
        %p336 = pneg %p135
        %p337 = pneg %p159
        %p338 = pneg %p156
        %p339 = pneg %p180
        %p340 = pneg %p177
        %p341 = pneg %p201
        %p342 = pneg %p198
        %p343 = pneg %p222
        %p344 = pneg %p219
        %p345 = pneg %p248
        %p346 = pneg %p245
        %s347 = sand.u32 %s235, 1
        %s348 = scalar_lea.sflag [#allocation3], %s347
        %s349 = sand.u32 %s235, 1
        %s350 = scalar_lea.vmem [#allocation2], %s349
        %p351 = scmp.lt.s32.totalorder %s23, 1
        %s352 = scalar_select %p351, %s23, 1
        %s353 = smul.addr %s352, 8
        %s354 = scalar_lea.vmem %s0, %s353
        %p355 = scmp.lt.s32.totalorder %s23, 1
        %s356 = scalar_select %p355, %s23, 1
        %s357 = smul.addr %s356, 2
        %s358 = smul.addr %s357, 8
        %s359 = scalar_lea.vmem %s1, %s358
        %p360 = scmp.lt.s32.totalorder %s23, 1
        %s361 = scalar_select %p360, %s23, 1
        %s362 = smul.addr %s361, 2
        %s363 = scalar_lea.vmem %s2, %s362
        %v364 = vld [vmem:[%s7] sm:$0xff]
        %v365 = vld [vmem:[%s7 + $0x8] sm:$0xff]
        %v366 = vld [vmem:[%s7 + $0x10] sm:$0xff]
        %v367 = vld [vmem:[%s7 + $0x18] sm:$0xff]
        %v368 = vld [vmem:[%s7 + $0x20] sm:$0xff]
        %v369 = vld [vmem:[%s7 + $0x28] sm:$0xff]
        %v370 = vld [vmem:[%s7 + $0x30] sm:$0xff]
        %v371 = vld [vmem:[%s7 + $0x38] sm:$0xff]
        %v372 = vld [vmem:[%s7 + $0x40] sm:$0xff]
        %v373 = vld [vmem:[%s7 + $0x48] sm:$0xff]
        %v374 = vld [vmem:[%s7 + $0x50] sm:$0xff]
        %v375 = vld [vmem:[%s7 + $0x58] sm:$0xff]
        %v376 = vld [vmem:[%s7 + $0x60] sm:$0xff]
        %v377 = vld [vmem:[%s7 + $0x68] sm:$0xff]
        %v378 = vld [vmem:[%s7 + $0x70] sm:$0xff]
        %v379 = vld [vmem:[%s7 + $0x78] sm:$0xff]
        %v380 = vld [vmem:[%s7 + $0x80] sm:$0xff]
        %v381 = vld [vmem:[%s7 + $0x88] sm:$0xff]
        %v382 = vld [vmem:[%s7 + $0x90] sm:$0xff]
        %v383 = vld [vmem:[%s7 + $0x98] sm:$0xff]
        %v384 = vld [vmem:[%s7 + $0xa0] sm:$0xff]
        %v385 = vld [vmem:[%s7 + $0xa8] sm:$0xff]
        %v386 = vld [vmem:[%s7 + $0xb0] sm:$0xff]
        %v387 = vld [vmem:[%s7 + $0xb8] sm:$0xff]
        %v388 = vld [vmem:[%s7 + $0xc0] sm:$0xff]
        %v389 = vld [vmem:[%s7 + $0xc8] sm:$0xff]
        %v390 = vld [vmem:[%s8] sm:$0x1]
        %v391 = vld [vmem:[%s8 + $0x1] sm:$0x1]
        %v392 = vld [vmem:[%s8 + $0x2] sm:$0x1]
        %v393 = vld [vmem:[%s8 + $0x3] sm:$0x1]
        %v394 = vld [vmem:[%s8 + $0x4] sm:$0x1]
        %v395 = vld [vmem:[%s8 + $0x5] sm:$0x1]
        %v396 = vld [vmem:[%s8 + $0x6] sm:$0x1]
        %v397 = vld [vmem:[%s8 + $0x7] sm:$0x1]
        %v398 = vld [vmem:[%s359] sm:$0xff]
        %v399 = vld [vmem:[%s359 + $0x8] sm:$0xff]
        %v400 = vlaneseq
        %v401 = vshrl.u32 %v400, 7
        %v402 = vsub.s32 0, %v401
        %v403 = vrot.slane %v390, %v402
        %vm404 = vcmask 392192
        %v406 = vsel %vm404, %v398, 0
        %v409 = vsel %vm404, %v399, 0
        %411 = vmatprep.subr.mxu0 0.0
        %412 = vmatpush1.msra.mxu0 %v364
        %413 = vmatprep.subr.mxu0 0.0
        %414 = vmatpush1.msra.mxu0 %v365
        %415 = vmatprep.subr.mxu0 0.0
        %416 = vmatpush1.msra.mxu0 %v366
        %417 = vmatprep.subr.mxu0 0.0
        %418 = vmatpush1.msra.mxu0 %v367
        %419 = vmatprep.subr.mxu0 0.0
        %420 = vmatpush1.msra.mxu0 %v368
        %421 = vmatprep.subr.mxu0 0.0
        %422 = vmatpush1.msra.mxu0 %v369
        %423 = vmatprep.subr.mxu0 0.0
        %424 = vmatpush1.msra.mxu0 0.0
        %425 = vmatprep.subr.mxu0 0.0
        %426 = vmatpush1.msra.mxu0 0.0
        %427 = vmatprep.subr.mxu0 0.0
        %428 = vmatpush1.msra.mxu0 0.0
        %429 = vmatprep.subr.mxu0 0.0
        %430 = vmatpush1.msra.mxu0 0.0
        %431 = vmatprep.subr.mxu0 0.0
        %432 = vmatpush1.msra.mxu0 0.0
        %433 = vmatprep.subr.mxu0 0.0
        %434 = vmatpush1.msra.mxu0 0.0
        %435 = vmatprep.subr.mxu0 0.0
        %436 = vmatpush1.msra.mxu0 0.0
        %437 = vmatprep.subr.mxu0 0.0
        %438 = vmatpush1.msra.mxu0 0.0
        %439 = vmatprep.subr.mxu0 0.0
        %440 = vmatpush1.msra.mxu0 0.0
        %441 = vmatprep.subr.mxu0 0.0
        %442 = vmatpush1.msra.mxu0 0.0
        %443 = vmatprep.subr.mxu0 0.0
        %444 = vmatpush1.msra.mxu0 0.0
        %445 = vmatprep.subr.mxu0 0.0
        %446 = vmatpush1.msra.mxu0 0.0
        %447 = vmatprep.subr.mxu0 0.0
        %448 = vmatpush1.msra.mxu0 0.0
        %449 = vmatprep.subr.mxu0 0.0
        %450 = vmatpush1.msra.mxu0 0.0
        %451 = vmatprep.subr.mxu0 0.0
        %452 = vmatpush1.msra.mxu0 0.0
        %453 = vmatprep.subr.mxu0 0.0
        %454 = vmatpush1.msra.mxu0 0.0
        %455 = vmatprep.subr.mxu0 0.0
        %456 = vmatpush1.msra.mxu0 0.0
        %457 = vmatprep.subr.mxu0 0.0
        %458 = vmatpush1.msra.mxu0 0.0
        %459 = vmatprep.subr.mxu0 0.0
        %460 = vmatpush1.msra.mxu0 0.0
        %461 = vmatprep.subr.mxu0 0.0
        %462 = vmatpush1.msra.mxu0 0.0
        %463 = vmatprep.subr.mxu0 0.0
        %464 = vmatpush1.msra.mxu0 0.0
        %465 = vmatprep.subr.mxu0 0.0
        %466 = vmatpush1.msra.mxu0 0.0
        %467 = vmatprep.subr.mxu0 0.0
        %468 = vmatpush1.msra.mxu0 0.0
        %469 = vmatprep.subr.mxu0 0.0
        %470 = vmatpush1.msra.mxu0 0.0
        %471 = vmatprep.subr.mxu0 0.0
        %472 = vmatpush1.msra.mxu0 0.0
        %473 = vmatprep.subr.mxu0 0.0
        %474 = vmatpush1.msra.mxu0 0.0
        %475 = vmatprep.mubr.f32.mxu0 0.0
        %476 = vmatmul.mubr.f32.gmra.mrb[0].mxu0 %v406
        %v477 = vpop.f32.mrb[0].mxu0
        %v478 = vadd.f32 %v403, %v477
        %v479 = vpop.f32.mrb[0].mxu0
        %480 = vmatprep.mubr.f32.mxu0 0.0
        %481 = vmatmul.mubr.f32.gmra.mrb[0].mxu0 %v409
        %v482 = vpop.f32.mrb[0].mxu0
        %v483 = vadd.f32 %v403, %v482
        %v484 = vpop.f32.mrb[0].mxu0
        %485 = vdwg.mxu0
        %v486 = vmax.f32 %v478, 0.0
        %v487 = vmax.f32 %v483, 0.0
        %vm488 = vcmask 261120
        %v489 = vsel %vm488, %v486, 0.0
        %v490 = vsel %vm488, %v487, 0.0
        %v491 = vadd.f32 %v489, %v490
        %v492 = vrot.slane %v491, 4
        %v493 = vadd.f32 %v491, %v492
        %v494 = vrot.slane %v493, 2
        %v495 = vadd.f32 %v493, %v494
        %v496 = vrot.slane %v495, 1
        %v497 = vadd.f32 %v495, %v496
        %v498 = vrcp.pop 16.0
        %v499 = vmul.f32 %v497, %v498
        %v501 = vsel %vm488, %v499, 0
        %503 = vmatprep.subr.mxu0 0.0
        %504 = vmatpush1.msra.mxu0 %v378
        %505 = vmatprep.subr.mxu0 0.0
        %506 = vmatpush1.msra.mxu0 %v379
        %507 = vmatprep.subr.mxu0 0.0
        %508 = vmatpush1.msra.mxu0 %v380
        %509 = vmatprep.subr.mxu0 0.0
        %510 = vmatpush1.msra.mxu0 %v381
        %511 = vmatprep.subr.mxu0 0.0
        %512 = vmatpush1.msra.mxu0 0.0
        %513 = vmatprep.subr.mxu0 0.0
        %514 = vmatpush1.msra.mxu0 0.0
        %515 = vmatprep.subr.mxu0 0.0
        %516 = vmatpush1.msra.mxu0 0.0
        %517 = vmatprep.subr.mxu0 0.0
        %518 = vmatpush1.msra.mxu0 0.0
        %519 = vmatprep.subr.mxu0 0.0
        %520 = vmatpush1.msra.mxu0 0.0
        %521 = vmatprep.subr.mxu0 0.0
        %522 = vmatpush1.msra.mxu0 0.0
        %523 = vmatprep.subr.mxu0 0.0
        %524 = vmatpush1.msra.mxu0 0.0
        %525 = vmatprep.subr.mxu0 0.0
        %526 = vmatpush1.msra.mxu0 0.0
        %527 = vmatprep.subr.mxu0 0.0
        %528 = vmatpush1.msra.mxu0 0.0
        %529 = vmatprep.subr.mxu0 0.0
        %530 = vmatpush1.msra.mxu0 0.0
        %531 = vmatprep.subr.mxu0 0.0
        %532 = vmatpush1.msra.mxu0 0.0
        %533 = vmatprep.subr.mxu0 0.0
        %534 = vmatpush1.msra.mxu0 0.0
        %535 = vmatprep.subr.mxu0 0.0
        %536 = vmatpush1.msra.mxu0 0.0
        %537 = vmatprep.subr.mxu0 0.0
        %538 = vmatpush1.msra.mxu0 0.0
        %539 = vmatprep.subr.mxu0 0.0
        %540 = vmatpush1.msra.mxu0 0.0
        %541 = vmatprep.subr.mxu0 0.0
        %542 = vmatpush1.msra.mxu0 0.0
        %543 = vmatprep.subr.mxu0 0.0
        %544 = vmatpush1.msra.mxu0 0.0
        %545 = vmatprep.subr.mxu0 0.0
        %546 = vmatpush1.msra.mxu0 0.0
        %547 = vmatprep.subr.mxu0 0.0
        %548 = vmatpush1.msra.mxu0 0.0
        %549 = vmatprep.subr.mxu0 0.0
        %550 = vmatpush1.msra.mxu0 0.0
        %551 = vmatprep.subr.mxu0 0.0
        %552 = vmatpush1.msra.mxu0 0.0
        %553 = vmatprep.subr.mxu0 0.0
        %554 = vmatpush1.msra.mxu0 0.0
        %555 = vmatprep.subr.mxu0 0.0
        %556 = vmatpush1.msra.mxu0 0.0
        %557 = vmatprep.subr.mxu0 0.0
        %558 = vmatpush1.msra.mxu0 0.0
        %559 = vmatprep.subr.mxu0 0.0
        %560 = vmatpush1.msra.mxu0 0.0
        %561 = vmatprep.subr.mxu0 0.0
        %562 = vmatpush1.msra.mxu0 0.0
        %563 = vmatprep.subr.mxu0 0.0
        %564 = vmatpush1.msra.mxu0 0.0
        %565 = vmatprep.subr.mxu0 0.0
        %566 = vmatpush1.msra.mxu0 0.0
        %567 = vmatprep.mubr.f32.mxu0 0.0
        %568 = vmatmul.mubr.f32.gmra.mrb[0].mxu0 %v501
        %v569 = vpop.f32.mrb[0].mxu0
        %v570 = vadd.f32 %v395, %v569
        %v571 = vpop.f32.mrb[0].mxu0
        %572 = vdwg.mxu0
        %v573 = vmul.f32 %v570, 0.5
        %v574 = vmul.f32 %v570, 0.70710677
        %vm575 = vcmp.ge.f32.partialorder %v574, 0.0
        %v576 = vsel %vm575, 1.0, -1.0
        %v577 = vand.u32 2147483647, %v574
        %v578 = vmul.f32 %v577, 0.3275911
        %v579 = vadd.f32 %v578, 1.0
        %v580 = vrcp.pop %v579
        %v581 = vmul.f32 1.0, %v580
        %v582 = vmul.f32 %v581, 1.0614054
        %v583 = vadd.f32 %v582, -1.4531521
        %v584 = vmul.f32 %v583, %v581
        %v585 = vadd.f32 %v584, 1.4214138
        %v586 = vmul.f32 %v585, %v581
        %v587 = vadd.f32 %v586, -0.28449672
        %v588 = vmul.f32 %v587, %v581
        %v589 = vadd.f32 %v588, 0.2548296
        %v590 = vmul.f32 %v589, %v581
        %v591 = vsub.f32 0.0, %v577
        %v592 = vmul.f32 %v591, %v577
        %v593 = vmul.f32 %v592, 1.442695
        %v594 = vpow.pop %v593
        %v595 = vmul.f32 %v590, %v594
        %v596 = vsub.f32 1.0, %v595
        %v597 = vmul.f32 %v576, %v596
        %v598 = vadd.f32 %v597, 1.0
        %v599 = vmul.f32 %v573, %v598
        %v600 = vlaneseq
        %v601 = vshrl.u32 %v600, 7
        %v602 = vsub.s32 0, %v601
        %v603 = vrot.slane %v394, %v602
        %v605 = vsel %vm488, %v486, 0
        %v608 = vsel %vm488, %v487, 0
        %610 = vmatprep.subr.mxu0 0.0
        %611 = vmatpush1.msra.mxu0 %v374
        %612 = vmatprep.subr.mxu0 0.0
        %613 = vmatpush1.msra.mxu0 %v375
        %614 = vmatprep.subr.mxu0 0.0
        %615 = vmatpush1.msra.mxu0 %v376
        %616 = vmatprep.subr.mxu0 0.0
        %617 = vmatpush1.msra.mxu0 %v377
        %618 = vmatprep.subr.mxu0 0.0
        %619 = vmatpush1.msra.mxu0 0.0
        %620 = vmatprep.subr.mxu0 0.0
        %621 = vmatpush1.msra.mxu0 0.0
        %622 = vmatprep.subr.mxu0 0.0
        %623 = vmatpush1.msra.mxu0 0.0
        %624 = vmatprep.subr.mxu0 0.0
        %625 = vmatpush1.msra.mxu0 0.0
        %626 = vmatprep.subr.mxu0 0.0
        %627 = vmatpush1.msra.mxu0 0.0
        %628 = vmatprep.subr.mxu0 0.0
        %629 = vmatpush1.msra.mxu0 0.0
        %630 = vmatprep.subr.mxu0 0.0
        %631 = vmatpush1.msra.mxu0 0.0
        %632 = vmatprep.subr.mxu0 0.0
        %633 = vmatpush1.msra.mxu0 0.0
        %634 = vmatprep.subr.mxu0 0.0
        %635 = vmatpush1.msra.mxu0 0.0
        %636 = vmatprep.subr.mxu0 0.0
        %637 = vmatpush1.msra.mxu0 0.0
        %638 = vmatprep.subr.mxu0 0.0
        %639 = vmatpush1.msra.mxu0 0.0
        %640 = vmatprep.subr.mxu0 0.0
        %641 = vmatpush1.msra.mxu0 0.0
        %642 = vmatprep.subr.mxu0 0.0
        %643 = vmatpush1.msra.mxu0 0.0
        %644 = vmatprep.subr.mxu0 0.0
        %645 = vmatpush1.msra.mxu0 0.0
        %646 = vmatprep.subr.mxu0 0.0
        %647 = vmatpush1.msra.mxu0 0.0
        %648 = vmatprep.subr.mxu0 0.0
        %649 = vmatpush1.msra.mxu0 0.0
        %650 = vmatprep.subr.mxu0 0.0
        %651 = vmatpush1.msra.mxu0 0.0
        %652 = vmatprep.subr.mxu0 0.0
        %653 = vmatpush1.msra.mxu0 0.0
        %654 = vmatprep.subr.mxu0 0.0
        %655 = vmatpush1.msra.mxu0 0.0
        %656 = vmatprep.subr.mxu0 0.0
        %657 = vmatpush1.msra.mxu0 0.0
        %658 = vmatprep.subr.mxu0 0.0
        %659 = vmatpush1.msra.mxu0 0.0
        %660 = vmatprep.subr.mxu0 0.0
        %661 = vmatpush1.msra.mxu0 0.0
        %662 = vmatprep.subr.mxu0 0.0
        %663 = vmatpush1.msra.mxu0 0.0
        %664 = vmatprep.subr.mxu0 0.0
        %665 = vmatpush1.msra.mxu0 0.0
        %666 = vmatprep.subr.mxu0 0.0
        %667 = vmatpush1.msra.mxu0 0.0
        %668 = vmatprep.subr.mxu0 0.0
        %669 = vmatpush1.msra.mxu0 0.0
        %670 = vmatprep.subr.mxu0 0.0
        %671 = vmatpush1.msra.mxu0 0.0
        %672 = vmatprep.subr.mxu0 0.0
        %673 = vmatpush1.msra.mxu0 0.0
        %674 = vmatprep.mubr.f32.mxu0 0.0
        %675 = vmatmul.mubr.f32.gmra.mrb[0].mxu0 %v605
        %v676 = vpop.f32.mrb[0].mxu0
        %v677 = vadd.f32 %v603, %v676
        %v678 = vpop.f32.mrb[0].mxu0
        %679 = vmatprep.mubr.f32.mxu0 0.0
        %680 = vmatmul.mubr.f32.gmra.mrb[0].mxu0 %v608
        %v681 = vpop.f32.mrb[0].mxu0
        %v682 = vadd.f32 %v603, %v681
        %v683 = vpop.f32.mrb[0].mxu0
        %684 = vdwg.mxu0
        %v685 = vmul.f32 %v677, 0.5
        %v686 = vmul.f32 %v682, 0.5
        %v687 = vmul.f32 %v677, 0.70710677
        %v688 = vmul.f32 %v682, 0.70710677
        %vm689 = vcmp.ge.f32.partialorder %v687, 0.0
        %vm690 = vcmp.ge.f32.partialorder %v688, 0.0
        %v691 = vsel %vm689, 1.0, -1.0
        %v692 = vsel %vm690, 1.0, -1.0
        %v693 = vand.u32 2147483647, %v687
        %v694 = vand.u32 2147483647, %v688
        %v695 = vmul.f32 %v693, 0.3275911
        %v696 = vmul.f32 %v694, 0.3275911
        %v697 = vadd.f32 %v695, 1.0
        %v698 = vadd.f32 %v696, 1.0
        %v699 = vrcp.pop %v697
        %v700 = vmul.f32 1.0, %v699
        %v701 = vrcp.pop %v698
        %v702 = vmul.f32 1.0, %v701
        %v703 = vmul.f32 %v700, 1.0614054
        %v704 = vmul.f32 %v702, 1.0614054
        %v705 = vadd.f32 %v703, -1.4531521
        %v706 = vadd.f32 %v704, -1.4531521
        %v707 = vmul.f32 %v705, %v700
        %v708 = vmul.f32 %v706, %v702
        %v709 = vadd.f32 %v707, 1.4214138
        %v710 = vadd.f32 %v708, 1.4214138
        %v711 = vmul.f32 %v709, %v700
        %v712 = vmul.f32 %v710, %v702
        %v713 = vadd.f32 %v711, -0.28449672
        %v714 = vadd.f32 %v712, -0.28449672
        %v715 = vmul.f32 %v713, %v700
        %v716 = vmul.f32 %v714, %v702
        %v717 = vadd.f32 %v715, 0.2548296
        %v718 = vadd.f32 %v716, 0.2548296
        %v719 = vmul.f32 %v717, %v700
        %v720 = vmul.f32 %v718, %v702
        %v721 = vsub.f32 0.0, %v693
        %v722 = vsub.f32 0.0, %v694
        %v723 = vmul.f32 %v721, %v693
        %v724 = vmul.f32 %v722, %v694
        %v725 = vmul.f32 %v723, 1.442695
        %v726 = vpow.pop %v725
        %v727 = vmul.f32 %v724, 1.442695
        %v728 = vpow.pop %v727
        %v729 = vmul.f32 %v719, %v726
        %v730 = vmul.f32 %v720, %v728
        %v731 = vsub.f32 1.0, %v729
        %v732 = vsub.f32 1.0, %v730
        %v733 = vmul.f32 %v691, %v731
        %v734 = vmul.f32 %v692, %v732
        %v735 = vadd.f32 %v733, 1.0
        %v736 = vadd.f32 %v734, 1.0
        %v737 = vmul.f32 %v685, %v735
        %v738 = vmul.f32 %v686, %v736
        %vm741 = vcmask 1040384
        %v742 = vrot.slane %v737, 7
        %v743 = vrot.slane %v738, 7
        %v744 = vsel %vm741, %v742, %v743
        %v748 = vsel %vm741, %v599, %v742
        %v749 = vsel %vm741, %v743, 0.0
        %v750 = vlaneseq
        %v751 = vand.u32 %v750, 127
        %vm752 = vcmp.lt.s32.totalorder %v751, 17
        %v753 = vsel %vm752, 0.0, -10000.0
        %v754 = vld [vmem:[%s5] sm:$0xff]
        %v755 = vld [vmem:[%s5 + $0x8] sm:$0xff]
        %v756 = vld [vmem:[%s5 + $0x10] sm:$0xff]
        %v757 = vld [vmem:[%s5 + $0x18] sm:$0xff]
        %v758 = vld [vmem:[%s5 + $0x20] sm:$0xff]
        %v759 = vld [vmem:[%s5 + $0x28] sm:$0xff]
        %v760 = vld [vmem:[%s5 + $0x30] sm:$0xff]
        %v761 = vld [vmem:[%s5 + $0x38] sm:$0xff]
        %v762 = vld [vmem:[%s5 + $0x40] sm:$0xff]
        %v763 = vld [vmem:[%s5 + $0x48] sm:$0xff]
        %v764 = vld [vmem:[%s5 + $0x50] sm:$0xff]
        %v765 = vld [vmem:[%s5 + $0x58] sm:$0xff]
        %v766 = vld [vmem:[%s5 + $0x60] sm:$0xff]
        %v767 = vld [vmem:[%s5 + $0x68] sm:$0xff]
        %v768 = vld [vmem:[%s5 + $0x70] sm:$0xff]
        %v769 = vld [vmem:[%s5 + $0x78] sm:$0xff]
        %v770 = vld [vmem:[%s5 + $0x80] sm:$0xff]
        %v771 = vld [vmem:[%s5 + $0x90] sm:$0xff]
        %v772 = vld [vmem:[%s5 + $0xa0] sm:$0xff]
        %v773 = vld [vmem:[%s5 + $0xb0] sm:$0xff]
        %v774 = vld [vmem:[%s5 + $0xc0] sm:$0xff]
        %v775 = vld [vmem:[%s5 + $0xd0] sm:$0xff]
        %v776 = vld [vmem:[%s5 + $0xe0] sm:$0xff]
        %v777 = vld [vmem:[%s5 + $0xf0] sm:$0xff]
        %v778 = vld [vmem:[%s5 + $0x100] sm:$0xff]
        %v779 = vld [vmem:[%s5 + $0x108] sm:$0xff]
        %v780 = vld [vmem:[%s5 + $0x110] sm:$0xff]
        %v781 = vld [vmem:[%s5 + $0x118] sm:$0xff]
        %v782 = vld [vmem:[%s5 + $0x120] sm:$0xff]
        %v783 = vld [vmem:[%s5 + $0x128] sm:$0xff]
        %v784 = vld [vmem:[%s5 + $0x130] sm:$0xff]
        %v785 = vld [vmem:[%s5 + $0x138] sm:$0xff]
        %v786 = vld [vmem:[%s5 + $0x140] sm:$0xff]
        %v787 = vld [vmem:[%s5 + $0x148] sm:$0xff]
        %v788 = vld [vmem:[%s5 + $0x150] sm:$0xff]
        %v789 = vld [vmem:[%s5 + $0x158] sm:$0xff]
        %v790 = vld [vmem:[%s5 + $0x160] sm:$0xff]
        %v791 = vld [vmem:[%s5 + $0x168] sm:$0xff]
        %v792 = vld [vmem:[%s5 + $0x170] sm:$0xff]
        %v793 = vld [vmem:[%s5 + $0x178] sm:$0xff]
        %v794 = vld [vmem:[%s5 + $0x180] sm:$0xff]
        %v795 = vld [vmem:[%s5 + $0x190] sm:$0xff]
        %v796 = vld [vmem:[%s5 + $0x1a0] sm:$0xff]
        %v797 = vld [vmem:[%s5 + $0x1b0] sm:$0xff]
        %v798 = vld [vmem:[%s5 + $0x1c0] sm:$0xff]
        %v799 = vld [vmem:[%s5 + $0x1d0] sm:$0xff]
        %v800 = vld [vmem:[%s5 + $0x1e0] sm:$0xff]
        %v801 = vld [vmem:[%s5 + $0x1f0] sm:$0xff]
        %v802 = vld [vmem:[%s5 + $0x200] sm:$0xff]
        %v803 = vld [vmem:[%s5 + $0x210] sm:$0xff]
        %v804 = vld [vmem:[%s5 + $0x220] sm:$0xff]
        %v805 = vld [vmem:[%s5 + $0x230] sm:$0xff]
        %v806 = vld [vmem:[%s5 + $0x240] sm:$0xff]
        %v807 = vld [vmem:[%s5 + $0x250] sm:$0xff]
        %v808 = vld [vmem:[%s5 + $0x260] sm:$0xff]
        %v809 = vld [vmem:[%s5 + $0x270] sm:$0xff]
        %v810 = vld [vmem:[%s5 + $0x280] sm:$0xff]
        %v811 = vld [vmem:[%s5 + $0x290] sm:$0xff]
        %v812 = vld [vmem:[%s5 + $0x2a0] sm:$0xff]
        %v813 = vld [vmem:[%s5 + $0x2b0] sm:$0xff]
        %v814 = vld [vmem:[%s5 + $0x2c0] sm:$0xff]
        %v815 = vld [vmem:[%s5 + $0x2d0] sm:$0xff]
        %v816 = vld [vmem:[%s5 + $0x2e0] sm:$0xff]
        %v817 = vld [vmem:[%s5 + $0x2f0] sm:$0xff]
        %v818 = vld [vmem:[%s5 + $0x300] sm:$0xff]
        %v819 = vld [vmem:[%s5 + $0x310] sm:$0xff]
        %v820 = vld [vmem:[%s5 + $0x320] sm:$0xff]
        %v821 = vld [vmem:[%s5 + $0x330] sm:$0xff]
        %v822 = vld [vmem:[%s5 + $0x340] sm:$0xff]
        %v823 = vld [vmem:[%s5 + $0x350] sm:$0xff]
        %v824 = vld [vmem:[%s5 + $0x360] sm:$0xff]
        %v825 = vld [vmem:[%s5 + $0x370] sm:$0xff]
        %v826 = vld [vmem:[%s6] ss:$8 sm:$0x3]
        %v827 = vld [vmem:[%s6 + $0x1] ss:$0 sm:$0xff]
        %v828 = vld [vmem:[%s6 + $0x2] ss:$0 sm:$0xff]
        %v829 = vld [vmem:[%s6 + $0x3] ss:$0 sm:$0xff]
        %s830 = scalar_lea.vmem %s6, 4
        %v831 = vld [vmem:[%s830] ss:$8 sm:$0x3]
        %v832 = vld [vmem:[%s6 + $0x5] ss:$0 sm:$0xff]
        %v833 = vld [vmem:[%s6 + $0x6] ss:$0 sm:$0xff]
        %v834 = vld [vmem:[%s6 + $0x7] ss:$0 sm:$0xff]
        %v836 = vlaneseq
        %v837 = vshrl.u32 %v836, 7
        %v838 = vsub.s32 0, %v837
        %v839 = vrot.slane %v826, %v838
        %v840 = vlaneseq
        %v841 = vshrl.u32 %v840, 7
        %v842 = vsub.s32 1, %v841
        %v843 = vrot.slane %v826, %v842
        %vm846 = vcmask 523264
        %v848 = vsel %vm846, %v748, 0
        %v850 = vsel %vm846, %v744, 0
        %v853 = vsel %vm846, %v749, 0
        %855 = vmatprep.subr.mxu0 %v755
        %856 = vmatpush1.msra.mxu0 %v754
        %857 = vmatprep.subr.mxu0 %v757
        %858 = vmatpush1.msra.mxu0 %v756
        %859 = vmatprep.subr.mxu0 %v759
        %860 = vmatpush1.msra.mxu0 %v758
        %861 = vmatprep.subr.mxu0 %v761
        %862 = vmatpush1.msra.mxu0 %v760
        %863 = vmatprep.subr.mxu0 %v763
        %864 = vmatpush1.msra.mxu0 %v762
        %865 = vmatprep.subr.mxu0 %v765
        %866 = vmatpush1.msra.mxu0 %v764
        %867 = vmatprep.subr.mxu0 %v767
        %868 = vmatpush1.msra.mxu0 %v766
        %869 = vmatprep.subr.mxu0 %v769
        %870 = vmatpush1.msra.mxu0 %v768
        %871 = vmatprep.subr.mxu0 0.0
        %872 = vmatpush1.msra.mxu0 0.0
        %873 = vmatprep.subr.mxu0 0.0
        %874 = vmatpush1.msra.mxu0 0.0
        %875 = vmatprep.subr.mxu0 0.0
        %876 = vmatpush1.msra.mxu0 0.0
        %877 = vmatprep.subr.mxu0 0.0
        %878 = vmatpush1.msra.mxu0 0.0
        %879 = vmatprep.subr.mxu0 0.0
        %880 = vmatpush1.msra.mxu0 0.0
        %881 = vmatprep.subr.mxu0 0.0
        %882 = vmatpush1.msra.mxu0 0.0
        %883 = vmatprep.subr.mxu0 0.0
        %884 = vmatpush1.msra.mxu0 0.0
        %885 = vmatprep.subr.mxu0 0.0
        %886 = vmatpush1.msra.mxu0 0.0
        %887 = vmatprep.subr.mxu0 0.0
        %888 = vmatpush1.msra.mxu0 0.0
        %889 = vmatprep.subr.mxu0 0.0
        %890 = vmatpush1.msra.mxu0 0.0
        %891 = vmatprep.subr.mxu0 0.0
        %892 = vmatpush1.msra.mxu0 0.0
        %893 = vmatprep.subr.mxu0 0.0
        %894 = vmatpush1.msra.mxu0 0.0
        %895 = vmatprep.subr.mxu0 0.0
        %896 = vmatpush1.msra.mxu0 0.0
        %897 = vmatprep.subr.mxu0 0.0
        %898 = vmatpush1.msra.mxu0 0.0
        %899 = vmatprep.subr.mxu0 0.0
        %900 = vmatpush1.msra.mxu0 0.0
        %901 = vmatprep.subr.mxu0 0.0
        %902 = vmatpush1.msra.mxu0 0.0
        %903 = vmatprep.subr.mxu0 0.0
        %904 = vmatpush1.msra.mxu0 0.0
        %905 = vmatprep.subr.mxu0 0.0
        %906 = vmatpush1.msra.mxu0 0.0
        %907 = vmatprep.subr.mxu0 0.0
        %908 = vmatpush1.msra.mxu0 0.0
        %909 = vmatprep.subr.mxu0 0.0
        %910 = vmatpush1.msra.mxu0 0.0
        %911 = vmatprep.subr.mxu0 0.0
        %912 = vmatpush1.msra.mxu0 0.0
        %913 = vmatprep.subr.mxu0 0.0
        %914 = vmatpush1.msra.mxu0 0.0
        %915 = vmatprep.subr.mxu0 0.0
        %916 = vmatpush1.msra.mxu0 0.0
        %917 = vmatprep.subr.mxu0 0.0
        %918 = vmatpush1.msra.mxu0 0.0
        %919 = vmatprep.mubr.f32.mxu0 0.0
        %920 = vmatmul.mubr.f32.gmra.mrb[0].mxu0 %v848
        %v921 = vpop.f32.mrb[0].mxu0
        %v922 = vadd.f32 %v839, %v921
        %v923 = vpop.f32.mrb[0].mxu0
        %v924 = vadd.f32 %v843, %v923
        %925 = vmatprep.mubr.f32.mxu0 0.0
        %926 = vmatmul.mubr.f32.gmra.mrb[0].mxu0 %v850
        %v927 = vpop.f32.mrb[0].mxu0
        %v928 = vadd.f32 %v839, %v927
        %v929 = vpop.f32.mrb[0].mxu0
        %v930 = vadd.f32 %v843, %v929
        %931 = vmatprep.mubr.f32.mxu0 0.0
        %932 = vmatmul.mubr.f32.gmra.mrb[0].mxu0 %v853
        %v933 = vpop.f32.mrb[0].mxu0
        %v934 = vadd.f32 %v839, %v933
        %v935 = vpop.f32.mrb[0].mxu0
        %v936 = vadd.f32 %v843, %v935
        %937 = vdwg.mxu0
        %941 = vrot.lane.b32.xlu0 %v922, 64
        %v942 = vpop.permute.xlu0 %941
        %943 = vrot.lane.b32.xlu0 %v928, 64
        %v944 = vpop.permute.xlu0 %943
        %945 = vrot.lane.b32.xlu0 %v934, 64
        %v946 = vpop.permute.xlu0 %945
        %v947 = vsel %vm846, %v922, 0
        %v949 = vsel %vm846, %v928, 0
        %v951 = vsel %vm846, %v934, 0
        %v953 = vsel %vm846, %v942, 0
        %v955 = vsel %vm846, %v944, 0
        %v957 = vsel %vm846, %v946, 0
        %959 = vmatprep.subr.mxu0 0.0
        %960 = vmatpush1.xpose.msra.mxu0 %v953
        %961 = vmatprep.subr.mxu0 0.0
        %962 = vmatpush1.xpose.msra.mxu0 %v955
        %963 = vmatprep.subr.mxu0 0.0
        %964 = vmatpush1.xpose.msra.mxu0 %v957
        %965 = vmatprep.subr.mxu0 0.0
        %966 = vmatpush1.xpose.msra.mxu0 0.0
        %967 = vmatprep.subr.mxu0 0.0
        %968 = vmatpush1.xpose.msra.mxu0 0.0
        %969 = vmatprep.subr.mxu0 0.0
        %970 = vmatpush1.xpose.msra.mxu0 0.0
        %971 = vmatprep.subr.mxu0 0.0
        %972 = vmatpush1.xpose.msra.mxu0 0.0
        %973 = vmatprep.subr.mxu0 0.0
        %974 = vmatpush1.xpose.msra.mxu0 0.0
        %975 = vmatprep.subr.mxu0 0.0
        %976 = vmatpush1.xpose.msra.mxu0 0.0
        %977 = vmatprep.subr.mxu0 0.0
        %978 = vmatpush1.xpose.msra.mxu0 0.0
        %979 = vmatprep.subr.mxu0 0.0
        %980 = vmatpush1.xpose.msra.mxu0 0.0
        %981 = vmatprep.subr.mxu0 0.0
        %982 = vmatpush1.xpose.msra.mxu0 0.0
        %983 = vmatprep.subr.mxu0 0.0
        %984 = vmatpush1.xpose.msra.mxu0 0.0
        %985 = vmatprep.subr.mxu0 0.0
        %986 = vmatpush1.xpose.msra.mxu0 0.0
        %987 = vmatprep.subr.mxu0 0.0
        %988 = vmatpush1.xpose.msra.mxu0 0.0
        %989 = vmatprep.subr.mxu0 0.0
        %990 = vmatpush1.xpose.msra.mxu0 0.0
        %991 = vmatprep.subr.mxu0 0.0
        %992 = vmatpush1.xpose.msra.mxu0 0.0
        %993 = vmatprep.subr.mxu0 0.0
        %994 = vmatpush1.xpose.msra.mxu0 0.0
        %995 = vmatprep.subr.mxu0 0.0
        %996 = vmatpush1.xpose.msra.mxu0 0.0
        %997 = vmatprep.subr.mxu0 0.0
        %998 = vmatpush1.xpose.msra.mxu0 0.0
        %999 = vmatprep.subr.mxu0 0.0
        %1000 = vmatpush1.xpose.msra.mxu0 0.0
        %1001 = vmatprep.subr.mxu0 0.0
        %1002 = vmatpush1.xpose.msra.mxu0 0.0
        %1003 = vmatprep.subr.mxu0 0.0
        %1004 = vmatpush1.xpose.msra.mxu0 0.0
        %1005 = vmatprep.subr.mxu0 0.0
        %1006 = vmatpush1.xpose.msra.mxu0 0.0
        %1007 = vmatprep.subr.mxu0 0.0
        %1008 = vmatpush1.xpose.msra.mxu0 0.0
        %1009 = vmatprep.subr.mxu0 0.0
        %1010 = vmatpush1.xpose.msra.mxu0 0.0
        %1011 = vmatprep.subr.mxu0 0.0
        %1012 = vmatpush1.xpose.msra.mxu0 0.0
        %1013 = vmatprep.subr.mxu0 0.0
        %1014 = vmatpush1.xpose.msra.mxu0 0.0
        %1015 = vmatprep.subr.mxu0 0.0
        %1016 = vmatpush1.xpose.msra.mxu0 0.0
        %1017 = vmatprep.subr.mxu0 0.0
        %1018 = vmatpush1.xpose.msra.mxu0 0.0
        %1019 = vmatprep.subr.mxu0 0.0
        %1020 = vmatpush1.xpose.msra.mxu0 0.0
        %1021 = vmatprep.subr.mxu0 0.0
        %1022 = vmatpush1.xpose.msra.mxu0 0.0
        %1023 = vmatprep.mubr.f32.mxu0 0.0
        %1024 = vmatmul.mubr.f32.gmra.mrb[0].mxu0 %v947
        %v1025 = vpop.f32.mrb[0].mxu0
        %v1026 = vadd.f32 0.0, %v1025
        %v1027 = vpop.f32.mrb[0].mxu0
        %1028 = vmatprep.mubr.f32.mxu0 0.0
        %1029 = vmatmul.mubr.f32.gmra.mrb[0].mxu0 %v949
        %v1030 = vpop.f32.mrb[0].mxu0
        %v1031 = vadd.f32 0.0, %v1030
        %v1032 = vpop.f32.mrb[0].mxu0
        %1033 = vmatprep.mubr.f32.mxu0 0.0
        %1034 = vmatmul.mubr.f32.gmra.mrb[0].mxu0 %v951
        %v1035 = vpop.f32.mrb[0].mxu0
        %v1036 = vadd.f32 0.0, %v1035
        %v1037 = vpop.f32.mrb[0].mxu0
        %1038 = vdwg.mxu0
        %v1039 = vmul.f32 %v1026, 0.125
        %v1040 = vmul.f32 %v1031, 0.125
        %v1041 = vmul.f32 %v1036, 0.125
        %v1042 = vadd.f32 %v1039, %v753
        %v1043 = vadd.f32 %v1040, %v753
        %v1044 = vadd.f32 %v1041, %v753
        %vm1045 = vcmask 195584
        %v1046 = vsel %vm1045, %v1042, -inf
        %1047 = vmax.xlane.f32.xlu0 %v1046
        %v1048 = vpop.xlane.xlu0 %1047
        %v1049 = vsel %vm1045, %v1043, -inf
        %1050 = vmax.xlane.f32.xlu0 %v1049
        %v1051 = vpop.xlane.xlu0 %1050
        %v1052 = vsel %vm1045, %v1044, -inf
        %1053 = vmax.xlane.f32.xlu0 %v1052
        %v1054 = vpop.xlane.xlu0 %1053
        %v1055 = vsub.f32 %v1042, %v1048
        %v1056 = vsub.f32 %v1043, %v1051
        %v1057 = vsub.f32 %v1044, %v1054
        %v1058 = vmul.f32 %v1055, 1.442695
        %v1059 = vpow.pop %v1058
        %v1060 = vmul.f32 %v1056, 1.442695
        %v1061 = vpow.pop %v1060
        %v1062 = vmul.f32 %v1057, 1.442695
        %v1063 = vpow.pop %v1062
        %v1064 = vsel %vm1045, %v1059, 0.0
        %1065 = vadd.xlane.f32.xlu0 %v1064
        %v1066 = vpop.xlane.xlu0 %1065
        %v1067 = vsel %vm1045, %v1061, 0.0
        %1068 = vadd.xlane.f32.xlu0 %v1067
        %v1069 = vpop.xlane.xlu0 %1068
        %v1070 = vsel %vm1045, %v1063, 0.0
        %1071 = vadd.xlane.f32.xlu0 %v1070
        %v1072 = vpop.xlane.xlu0 %1071
        %v1073 = vrcp.pop %v1066
        %v1074 = vmul.f32 %v1059, %v1073
        %v1075 = vrcp.pop %v1069
        %v1076 = vmul.f32 %v1061, %v1075
        %v1077 = vrcp.pop %v1072
        %v1078 = vmul.f32 %v1063, %v1077
        %v1080 = vsel %vm1045, %v1074, 0
        %v1083 = vsel %vm1045, %v1076, 0
        %v1086 = vsel %vm1045, %v1078, 0
        %1088 = vmatprep.subr.mxu0 0.0
        %1089 = vmatpush1.msra.mxu0 %v924
        %1090 = vmatprep.subr.mxu0 0.0
        %1091 = vmatpush1.msra.mxu0 %v930
        %1092 = vmatprep.subr.mxu0 0.0
        %1093 = vmatpush1.msra.mxu0 %v936
        %1094 = vmatprep.subr.mxu0 0.0
        %1095 = vmatpush1.msra.mxu0 0.0
        %1096 = vmatprep.subr.mxu0 0.0
        %1097 = vmatpush1.msra.mxu0 0.0
        %1098 = vmatprep.subr.mxu0 0.0
        %1099 = vmatpush1.msra.mxu0 0.0
        %1100 = vmatprep.subr.mxu0 0.0
        %1101 = vmatpush1.msra.mxu0 0.0
        %1102 = vmatprep.subr.mxu0 0.0
        %1103 = vmatpush1.msra.mxu0 0.0
        %1104 = vmatprep.subr.mxu0 0.0
        %1105 = vmatpush1.msra.mxu0 0.0
        %1106 = vmatprep.subr.mxu0 0.0
        %1107 = vmatpush1.msra.mxu0 0.0
        %1108 = vmatprep.subr.mxu0 0.0
        %1109 = vmatpush1.msra.mxu0 0.0
        %1110 = vmatprep.subr.mxu0 0.0
        %1111 = vmatpush1.msra.mxu0 0.0
        %1112 = vmatprep.subr.mxu0 0.0
        %1113 = vmatpush1.msra.mxu0 0.0
        %1114 = vmatprep.subr.mxu0 0.0
        %1115 = vmatpush1.msra.mxu0 0.0
        %1116 = vmatprep.subr.mxu0 0.0
        %1117 = vmatpush1.msra.mxu0 0.0
        %1118 = vmatprep.subr.mxu0 0.0
        %1119 = vmatpush1.msra.mxu0 0.0
        %1120 = vmatprep.subr.mxu0 0.0
        %1121 = vmatpush1.msra.mxu0 0.0
        %1122 = vmatprep.subr.mxu0 0.0
        %1123 = vmatpush1.msra.mxu0 0.0
        %1124 = vmatprep.subr.mxu0 0.0
        %1125 = vmatpush1.msra.mxu0 0.0
        %1126 = vmatprep.subr.mxu0 0.0
        %1127 = vmatpush1.msra.mxu0 0.0
        %1128 = vmatprep.subr.mxu0 0.0
        %1129 = vmatpush1.msra.mxu0 0.0
        %1130 = vmatprep.subr.mxu0 0.0
        %1131 = vmatpush1.msra.mxu0 0.0
        %1132 = vmatprep.subr.mxu0 0.0
        %1133 = vmatpush1.msra.mxu0 0.0
        %1134 = vmatprep.subr.mxu0 0.0
        %1135 = vmatpush1.msra.mxu0 0.0
        %1136 = vmatprep.subr.mxu0 0.0
        %1137 = vmatpush1.msra.mxu0 0.0
        %1138 = vmatprep.subr.mxu0 0.0
        %1139 = vmatpush1.msra.mxu0 0.0
        %1140 = vmatprep.subr.mxu0 0.0
        %1141 = vmatpush1.msra.mxu0 0.0
        %1142 = vmatprep.subr.mxu0 0.0
        %1143 = vmatpush1.msra.mxu0 0.0
        %1144 = vmatprep.subr.mxu0 0.0
        %1145 = vmatpush1.msra.mxu0 0.0
        %1146 = vmatprep.subr.mxu0 0.0
        %1147 = vmatpush1.msra.mxu0 0.0
        %1148 = vmatprep.subr.mxu0 0.0
        %1149 = vmatpush1.msra.mxu0 0.0
        %1150 = vmatprep.subr.mxu0 0.0
        %1151 = vmatpush1.msra.mxu0 0.0
        %1152 = vmatprep.mubr.f32.mxu0 0.0
        %1153 = vmatmul.mubr.f32.gmra.mrb[0].mxu0 %v1080
        %v1154 = vpop.f32.mrb[0].mxu0
        %v1155 = vadd.f32 0.0, %v1154
        %v1156 = vpop.f32.mrb[0].mxu0
        %1157 = vmatprep.mubr.f32.mxu0 0.0
        %1158 = vmatmul.mubr.f32.gmra.mrb[0].mxu0 %v1083
        %v1159 = vpop.f32.mrb[0].mxu0
        %v1160 = vadd.f32 0.0, %v1159
        %v1161 = vpop.f32.mrb[0].mxu0
        %1162 = vmatprep.mubr.f32.mxu0 0.0
        %1163 = vmatmul.mubr.f32.gmra.mrb[0].mxu0 %v1086
        %v1164 = vpop.f32.mrb[0].mxu0
        %v1165 = vadd.f32 0.0, %v1164
        %v1166 = vpop.f32.mrb[0].mxu0
        %1167 = vdwg.mxu0
        %v1169 = vsel %vm846, %v1155, 0
        %v1172 = vsel %vm846, %v1160, 0
        %v1175 = vsel %vm846, %v1165, 0
        %1177 = vmatprep.subr.mxu0 0.0
        %1178 = vmatpush1.msra.mxu0 %v770
        %1179 = vmatprep.subr.mxu0 0.0
        %1180 = vmatpush1.msra.mxu0 %v771
        %1181 = vmatprep.subr.mxu0 0.0
        %1182 = vmatpush1.msra.mxu0 %v772
        %1183 = vmatprep.subr.mxu0 0.0
        %1184 = vmatpush1.msra.mxu0 %v773
        %1185 = vmatprep.subr.mxu0 0.0
        %1186 = vmatpush1.msra.mxu0 %v774
        %1187 = vmatprep.subr.mxu0 0.0
        %1188 = vmatpush1.msra.mxu0 %v775
        %1189 = vmatprep.subr.mxu0 0.0
        %1190 = vmatpush1.msra.mxu0 %v776
        %1191 = vmatprep.subr.mxu0 0.0
        %1192 = vmatpush1.msra.mxu0 %v777
        %1193 = vmatprep.subr.mxu0 0.0
        %1194 = vmatpush1.msra.mxu0 0.0
        %1195 = vmatprep.subr.mxu0 0.0
        %1196 = vmatpush1.msra.mxu0 0.0
        %1197 = vmatprep.subr.mxu0 0.0
        %1198 = vmatpush1.msra.mxu0 0.0
        %1199 = vmatprep.subr.mxu0 0.0
        %1200 = vmatpush1.msra.mxu0 0.0
        %1201 = vmatprep.subr.mxu0 0.0
        %1202 = vmatpush1.msra.mxu0 0.0
        %1203 = vmatprep.subr.mxu0 0.0
        %1204 = vmatpush1.msra.mxu0 0.0
        %1205 = vmatprep.subr.mxu0 0.0
        %1206 = vmatpush1.msra.mxu0 0.0
        %1207 = vmatprep.subr.mxu0 0.0
        %1208 = vmatpush1.msra.mxu0 0.0
        %1209 = vmatprep.subr.mxu0 0.0
        %1210 = vmatpush1.msra.mxu0 0.0
        %1211 = vmatprep.subr.mxu0 0.0
        %1212 = vmatpush1.msra.mxu0 0.0
        %1213 = vmatprep.subr.mxu0 0.0
        %1214 = vmatpush1.msra.mxu0 0.0
        %1215 = vmatprep.subr.mxu0 0.0
        %1216 = vmatpush1.msra.mxu0 0.0
        %1217 = vmatprep.subr.mxu0 0.0
        %1218 = vmatpush1.msra.mxu0 0.0
        %1219 = vmatprep.subr.mxu0 0.0
        %1220 = vmatpush1.msra.mxu0 0.0
        %1221 = vmatprep.subr.mxu0 0.0
        %1222 = vmatpush1.msra.mxu0 0.0
        %1223 = vmatprep.subr.mxu0 0.0
        %1224 = vmatpush1.msra.mxu0 0.0
        %1225 = vmatprep.subr.mxu0 0.0
        %1226 = vmatpush1.msra.mxu0 0.0
        %1227 = vmatprep.subr.mxu0 0.0
        %1228 = vmatpush1.msra.mxu0 0.0
        %1229 = vmatprep.subr.mxu0 0.0
        %1230 = vmatpush1.msra.mxu0 0.0
        %1231 = vmatprep.subr.mxu0 0.0
        %1232 = vmatpush1.msra.mxu0 0.0
        %1233 = vmatprep.subr.mxu0 0.0
        %1234 = vmatpush1.msra.mxu0 0.0
        %1235 = vmatprep.subr.mxu0 0.0
        %1236 = vmatpush1.msra.mxu0 0.0
        %1237 = vmatprep.subr.mxu0 0.0
        %1238 = vmatpush1.msra.mxu0 0.0
        %1239 = vmatprep.subr.mxu0 0.0
        %1240 = vmatpush1.msra.mxu0 0.0
        %1241 = vmatprep.mubr.f32.mxu0 0.0
        %1242 = vmatmul.mubr.f32.gmra.mrb[0].mxu0 %v1169
        %v1243 = vpop.f32.mrb[0].mxu0
        %v1244 = vadd.f32 %v827, %v1243
        %v1245 = vpop.f32.mrb[0].mxu0
        %1246 = vmatprep.mubr.f32.mxu0 0.0
        %1247 = vmatmul.mubr.f32.gmra.mrb[0].mxu0 %v1172
        %v1248 = vpop.f32.mrb[0].mxu0
        %v1249 = vadd.f32 %v827, %v1248
        %v1250 = vpop.f32.mrb[0].mxu0
        %1251 = vmatprep.mubr.f32.mxu0 0.0
        %1252 = vmatmul.mubr.f32.gmra.mrb[0].mxu0 %v1175
        %v1253 = vpop.f32.mrb[0].mxu0
        %v1254 = vadd.f32 %v827, %v1253
        %v1255 = vpop.f32.mrb[0].mxu0
        %1256 = vdwg.mxu0
        %v1257 = vadd.f32 %v1244, %v748
        %v1258 = vadd.f32 %v1249, %v744
        %v1259 = vadd.f32 %v1254, %v749
        %v1260 = vsel %vm846, %v1257, 0.0
        %1261 = vadd.xlane.f32.xlu0 %v1260
        %v1262 = vpop.xlane.xlu0 %1261
        %v1263 = vsel %vm846, %v1258, 0.0
        %1264 = vadd.xlane.f32.xlu0 %v1263
        %v1265 = vpop.xlane.xlu0 %1264
        %v1266 = vsel %vm846, %v1259, 0.0
        %1267 = vadd.xlane.f32.xlu0 %v1266
        %v1268 = vpop.xlane.xlu0 %1267
        %v1269 = vrcp.pop 64.0
        %v1270 = vmul.f32 %v1262, %v1269
        %v1271 = vmul.f32 %v1265, %v1269
        %v1272 = vmul.f32 %v1268, %v1269
        %v1273 = vsub.f32 %v1257, %v1270
        %v1274 = vsub.f32 %v1258, %v1271
        %v1275 = vsub.f32 %v1259, %v1272
        %v1276 = vmul.f32 %v1273, %v1273
        %v1277 = vmul.f32 %v1274, %v1274
        %v1278 = vmul.f32 %v1275, %v1275
        %v1279 = vsel %vm846, %v1276, 0.0
        %1280 = vadd.xlane.f32.xlu0 %v1279
        %v1281 = vpop.xlane.xlu0 %1280
        %v1282 = vsel %vm846, %v1277, 0.0
        %1283 = vadd.xlane.f32.xlu0 %v1282
        %v1284 = vpop.xlane.xlu0 %1283
        %v1285 = vsel %vm846, %v1278, 0.0
        %1286 = vadd.xlane.f32.xlu0 %v1285
        %v1287 = vpop.xlane.xlu0 %1286
        %v1288 = vmul.f32 %v1281, %v1269
        %v1289 = vmul.f32 %v1284, %v1269
        %v1290 = vmul.f32 %v1287, %v1269
        %v1291 = vadd.f32 %v1288, 1e-12
        %v1292 = vadd.f32 %v1289, 1e-12
        %v1293 = vadd.f32 %v1290, 1e-12
        %v1294 = vrsqrt.pop %v1291
        %v1295 = vrsqrt.pop %v1292
        %v1296 = vrsqrt.pop %v1293
        %v1297 = vmul.f32 %v1273, %v1294
        %v1298 = vmul.f32 %v1274, %v1295
        %v1299 = vmul.f32 %v1275, %v1296
        %v1300 = vmul.f32 %v1297, %v828
        %v1301 = vmul.f32 %v1298, %v828
        %v1302 = vmul.f32 %v1299, %v828
        %v1303 = vadd.f32 %v1300, %v829
        %v1304 = vadd.f32 %v1301, %v829
        %v1305 = vadd.f32 %v1302, %v829
        %v1307 = vlaneseq
        %v1308 = vshrl.u32 %v1307, 7
        %v1309 = vsub.s32 0, %v1308
        %v1310 = vrot.slane %v831, %v1309
        %v1311 = vlaneseq
        %v1312 = vshrl.u32 %v1311, 7
        %v1313 = vsub.s32 1, %v1312
        %v1314 = vrot.slane %v831, %v1313
        %v1318 = vsel %vm846, %v1303, 0
        %v1321 = vsel %vm846, %v1304, 0
        %v1324 = vsel %vm846, %v1305, 0
        %1326 = vmatprep.subr.mxu0 %v779
        %1327 = vmatpush1.msra.mxu0 %v778
        %1328 = vmatprep.subr.mxu0 %v781
        %1329 = vmatpush1.msra.mxu0 %v780
        %1330 = vmatprep.subr.mxu0 %v783
        %1331 = vmatpush1.msra.mxu0 %v782
        %1332 = vmatprep.subr.mxu0 %v785
        %1333 = vmatpush1.msra.mxu0 %v784
        %1334 = vmatprep.subr.mxu0 %v787
        %1335 = vmatpush1.msra.mxu0 %v786
        %1336 = vmatprep.subr.mxu0 %v789
        %1337 = vmatpush1.msra.mxu0 %v788
        %1338 = vmatprep.subr.mxu0 %v791
        %1339 = vmatpush1.msra.mxu0 %v790
        %1340 = vmatprep.subr.mxu0 %v793
        %1341 = vmatpush1.msra.mxu0 %v792
        %1342 = vmatprep.subr.mxu0 0.0
        %1343 = vmatpush1.msra.mxu0 0.0
        %1344 = vmatprep.subr.mxu0 0.0
        %1345 = vmatpush1.msra.mxu0 0.0
        %1346 = vmatprep.subr.mxu0 0.0
        %1347 = vmatpush1.msra.mxu0 0.0
        %1348 = vmatprep.subr.mxu0 0.0
        %1349 = vmatpush1.msra.mxu0 0.0
        %1350 = vmatprep.subr.mxu0 0.0
        %1351 = vmatpush1.msra.mxu0 0.0
        %1352 = vmatprep.subr.mxu0 0.0
        %1353 = vmatpush1.msra.mxu0 0.0
        %1354 = vmatprep.subr.mxu0 0.0
        %1355 = vmatpush1.msra.mxu0 0.0
        %1356 = vmatprep.subr.mxu0 0.0
        %1357 = vmatpush1.msra.mxu0 0.0
        %1358 = vmatprep.subr.mxu0 0.0
        %1359 = vmatpush1.msra.mxu0 0.0
        %1360 = vmatprep.subr.mxu0 0.0
        %1361 = vmatpush1.msra.mxu0 0.0
        %1362 = vmatprep.subr.mxu0 0.0
        %1363 = vmatpush1.msra.mxu0 0.0
        %1364 = vmatprep.subr.mxu0 0.0
        %1365 = vmatpush1.msra.mxu0 0.0
        %1366 = vmatprep.subr.mxu0 0.0
        %1367 = vmatpush1.msra.mxu0 0.0
        %1368 = vmatprep.subr.mxu0 0.0
        %1369 = vmatpush1.msra.mxu0 0.0
        %1370 = vmatprep.subr.mxu0 0.0
        %1371 = vmatpush1.msra.mxu0 0.0
        %1372 = vmatprep.subr.mxu0 0.0
        %1373 = vmatpush1.msra.mxu0 0.0
        %1374 = vmatprep.subr.mxu0 0.0
        %1375 = vmatpush1.msra.mxu0 0.0
        %1376 = vmatprep.subr.mxu0 0.0
        %1377 = vmatpush1.msra.mxu0 0.0
        %1378 = vmatprep.subr.mxu0 0.0
        %1379 = vmatpush1.msra.mxu0 0.0
        %1380 = vmatprep.subr.mxu0 0.0
        %1381 = vmatpush1.msra.mxu0 0.0
        %1382 = vmatprep.subr.mxu0 0.0
        %1383 = vmatpush1.msra.mxu0 0.0
        %1384 = vmatprep.subr.mxu0 0.0
        %1385 = vmatpush1.msra.mxu0 0.0
        %1386 = vmatprep.subr.mxu0 0.0
        %1387 = vmatpush1.msra.mxu0 0.0
        %1388 = vmatprep.subr.mxu0 0.0
        %1389 = vmatpush1.msra.mxu0 0.0
        %1390 = vmatprep.mubr.f32.mxu0 0.0
        %1391 = vmatmul.mubr.f32.gmra.mrb[0].mxu0 %v1318
        %v1392 = vpop.f32.mrb[0].mxu0
        %v1393 = vadd.f32 %v1310, %v1392
        %v1394 = vpop.f32.mrb[0].mxu0
        %v1395 = vadd.f32 %v1314, %v1394
        %1396 = vmatprep.mubr.f32.mxu0 0.0
        %1397 = vmatmul.mubr.f32.gmra.mrb[0].mxu0 %v1321
        %v1398 = vpop.f32.mrb[0].mxu0
        %v1399 = vadd.f32 %v1310, %v1398
        %v1400 = vpop.f32.mrb[0].mxu0
        %v1401 = vadd.f32 %v1314, %v1400
        %1402 = vmatprep.mubr.f32.mxu0 0.0
        %1403 = vmatmul.mubr.f32.gmra.mrb[0].mxu0 %v1324
        %v1404 = vpop.f32.mrb[0].mxu0
        %v1405 = vadd.f32 %v1310, %v1404
        %v1406 = vpop.f32.mrb[0].mxu0
        %v1407 = vadd.f32 %v1314, %v1406
        %1408 = vdwg.mxu0
        %v1409 = vmul.f32 %v1393, 0.5
        %v1410 = vmul.f32 %v1395, 0.5
        %v1411 = vmul.f32 %v1399, 0.5
        %v1412 = vmul.f32 %v1401, 0.5
        %v1413 = vmul.f32 %v1405, 0.5
        %v1414 = vmul.f32 %v1407, 0.5
        %v1415 = vmul.f32 %v1393, 0.70710677
        %v1416 = vmul.f32 %v1395, 0.70710677
        %v1417 = vmul.f32 %v1399, 0.70710677
        %v1418 = vmul.f32 %v1401, 0.70710677
        %v1419 = vmul.f32 %v1405, 0.70710677
        %v1420 = vmul.f32 %v1407, 0.70710677
        %vm1421 = vcmp.ge.f32.partialorder %v1415, 0.0
        %vm1422 = vcmp.ge.f32.partialorder %v1416, 0.0
        %vm1423 = vcmp.ge.f32.partialorder %v1417, 0.0
        %vm1424 = vcmp.ge.f32.partialorder %v1418, 0.0
        %vm1425 = vcmp.ge.f32.partialorder %v1419, 0.0
        %vm1426 = vcmp.ge.f32.partialorder %v1420, 0.0
        %v1427 = vsel %vm1421, 1.0, -1.0
        %v1428 = vsel %vm1422, 1.0, -1.0
        %v1429 = vsel %vm1423, 1.0, -1.0
        %v1430 = vsel %vm1424, 1.0, -1.0
        %v1431 = vsel %vm1425, 1.0, -1.0
        %v1432 = vsel %vm1426, 1.0, -1.0
        %v1433 = vand.u32 2147483647, %v1415
        %v1434 = vand.u32 2147483647, %v1416
        %v1435 = vand.u32 2147483647, %v1417
        %v1436 = vand.u32 2147483647, %v1418
        %v1437 = vand.u32 2147483647, %v1419
        %v1438 = vand.u32 2147483647, %v1420
        %v1439 = vmul.f32 %v1433, 0.3275911
        %v1440 = vmul.f32 %v1434, 0.3275911
        %v1441 = vmul.f32 %v1435, 0.3275911
        %v1442 = vmul.f32 %v1436, 0.3275911
        %v1443 = vmul.f32 %v1437, 0.3275911
        %v1444 = vmul.f32 %v1438, 0.3275911
        %v1445 = vadd.f32 %v1439, 1.0
        %v1446 = vadd.f32 %v1440, 1.0
        %v1447 = vadd.f32 %v1441, 1.0
        %v1448 = vadd.f32 %v1442, 1.0
        %v1449 = vadd.f32 %v1443, 1.0
        %v1450 = vadd.f32 %v1444, 1.0
        %v1451 = vrcp.pop %v1445
        %v1452 = vmul.f32 1.0, %v1451
        %v1453 = vrcp.pop %v1446
        %v1454 = vmul.f32 1.0, %v1453
        %v1455 = vrcp.pop %v1447
        %v1456 = vmul.f32 1.0, %v1455
        %v1457 = vrcp.pop %v1448
        %v1458 = vmul.f32 1.0, %v1457
        %v1459 = vrcp.pop %v1449
        %v1460 = vmul.f32 1.0, %v1459
        %v1461 = vrcp.pop %v1450
        %v1462 = vmul.f32 1.0, %v1461
        %v1463 = vmul.f32 %v1452, 1.0614054
        %v1464 = vmul.f32 %v1454, 1.0614054
        %v1465 = vmul.f32 %v1456, 1.0614054
        %v1466 = vmul.f32 %v1458, 1.0614054
        %v1467 = vmul.f32 %v1460, 1.0614054
        %v1468 = vmul.f32 %v1462, 1.0614054
        %v1469 = vadd.f32 %v1463, -1.4531521
        %v1470 = vadd.f32 %v1464, -1.4531521
        %v1471 = vadd.f32 %v1465, -1.4531521
        %v1472 = vadd.f32 %v1466, -1.4531521
        %v1473 = vadd.f32 %v1467, -1.4531521
        %v1474 = vadd.f32 %v1468, -1.4531521
        %v1475 = vmul.f32 %v1469, %v1452
        %v1476 = vmul.f32 %v1470, %v1454
        %v1477 = vmul.f32 %v1471, %v1456
        %v1478 = vmul.f32 %v1472, %v1458
        %v1479 = vmul.f32 %v1473, %v1460
        %v1480 = vmul.f32 %v1474, %v1462
        %v1481 = vadd.f32 %v1475, 1.4214138
        %v1482 = vadd.f32 %v1476, 1.4214138
        %v1483 = vadd.f32 %v1477, 1.4214138
        %v1484 = vadd.f32 %v1478, 1.4214138
        %v1485 = vadd.f32 %v1479, 1.4214138
        %v1486 = vadd.f32 %v1480, 1.4214138
        %v1487 = vmul.f32 %v1481, %v1452
        %v1488 = vmul.f32 %v1482, %v1454
        %v1489 = vmul.f32 %v1483, %v1456
        %v1490 = vmul.f32 %v1484, %v1458
        %v1491 = vmul.f32 %v1485, %v1460
        %v1492 = vmul.f32 %v1486, %v1462
        %v1493 = vadd.f32 %v1487, -0.28449672
        %v1494 = vadd.f32 %v1488, -0.28449672
        %v1495 = vadd.f32 %v1489, -0.28449672
        %v1496 = vadd.f32 %v1490, -0.28449672
        %v1497 = vadd.f32 %v1491, -0.28449672
        %v1498 = vadd.f32 %v1492, -0.28449672
        %v1499 = vmul.f32 %v1493, %v1452
        %v1500 = vmul.f32 %v1494, %v1454
        %v1501 = vmul.f32 %v1495, %v1456
        %v1502 = vmul.f32 %v1496, %v1458
        %v1503 = vmul.f32 %v1497, %v1460
        %v1504 = vmul.f32 %v1498, %v1462
        %v1505 = vadd.f32 %v1499, 0.2548296
        %v1506 = vadd.f32 %v1500, 0.2548296
        %v1507 = vadd.f32 %v1501, 0.2548296
        %v1508 = vadd.f32 %v1502, 0.2548296
        %v1509 = vadd.f32 %v1503, 0.2548296
        %v1510 = vadd.f32 %v1504, 0.2548296
        %v1511 = vmul.f32 %v1505, %v1452
        %v1512 = vmul.f32 %v1506, %v1454
        %v1513 = vmul.f32 %v1507, %v1456
        %v1514 = vmul.f32 %v1508, %v1458
        %v1515 = vmul.f32 %v1509, %v1460
        %v1516 = vmul.f32 %v1510, %v1462
        %v1517 = vsub.f32 0.0, %v1433
        %v1518 = vsub.f32 0.0, %v1434
        %v1519 = vsub.f32 0.0, %v1435
        %v1520 = vsub.f32 0.0, %v1436
        %v1521 = vsub.f32 0.0, %v1437
        %v1522 = vsub.f32 0.0, %v1438
        %v1523 = vmul.f32 %v1517, %v1433
        %v1524 = vmul.f32 %v1518, %v1434
        %v1525 = vmul.f32 %v1519, %v1435
        %v1526 = vmul.f32 %v1520, %v1436
        %v1527 = vmul.f32 %v1521, %v1437
        %v1528 = vmul.f32 %v1522, %v1438
        %v1529 = vmul.f32 %v1523, 1.442695
        %v1530 = vpow.pop %v1529
        %v1531 = vmul.f32 %v1524, 1.442695
        %v1532 = vpow.pop %v1531
        %v1533 = vmul.f32 %v1525, 1.442695
        %v1534 = vpow.pop %v1533
        %v1535 = vmul.f32 %v1526, 1.442695
        %v1536 = vpow.pop %v1535
        %v1537 = vmul.f32 %v1527, 1.442695
        %v1538 = vpow.pop %v1537
        %v1539 = vmul.f32 %v1528, 1.442695
        %v1540 = vpow.pop %v1539
        %v1541 = vmul.f32 %v1511, %v1530
        %v1542 = vmul.f32 %v1512, %v1532
        %v1543 = vmul.f32 %v1513, %v1534
        %v1544 = vmul.f32 %v1514, %v1536
        %v1545 = vmul.f32 %v1515, %v1538
        %v1546 = vmul.f32 %v1516, %v1540
        %v1547 = vsub.f32 1.0, %v1541
        %v1548 = vsub.f32 1.0, %v1542
        %v1549 = vsub.f32 1.0, %v1543
        %v1550 = vsub.f32 1.0, %v1544
        %v1551 = vsub.f32 1.0, %v1545
        %v1552 = vsub.f32 1.0, %v1546
        %v1553 = vmul.f32 %v1427, %v1547
        %v1554 = vmul.f32 %v1428, %v1548
        %v1555 = vmul.f32 %v1429, %v1549
        %v1556 = vmul.f32 %v1430, %v1550
        %v1557 = vmul.f32 %v1431, %v1551
        %v1558 = vmul.f32 %v1432, %v1552
        %v1559 = vadd.f32 %v1553, 1.0
        %v1560 = vadd.f32 %v1554, 1.0
        %v1561 = vadd.f32 %v1555, 1.0
        %v1562 = vadd.f32 %v1556, 1.0
        %v1563 = vadd.f32 %v1557, 1.0
        %v1564 = vadd.f32 %v1558, 1.0
        %v1565 = vmul.f32 %v1409, %v1559
        %v1566 = vmul.f32 %v1410, %v1560
        %v1567 = vmul.f32 %v1411, %v1561
        %v1568 = vmul.f32 %v1412, %v1562
        %v1569 = vmul.f32 %v1413, %v1563
        %v1570 = vmul.f32 %v1414, %v1564
        %1571 = vmatprep.subr.mxu0 0.0
        %1572 = vmatpush1.msra.mxu0 %v794
        %1573 = vmatprep.subr.mxu0 0.0
        %1574 = vmatpush1.msra.mxu0 %v795
        %1575 = vmatprep.subr.mxu0 0.0
        %1576 = vmatpush1.msra.mxu0 %v796
        %1577 = vmatprep.subr.mxu0 0.0
        %1578 = vmatpush1.msra.mxu0 %v797
        %1579 = vmatprep.subr.mxu0 0.0
        %1580 = vmatpush1.msra.mxu0 %v798
        %1581 = vmatprep.subr.mxu0 0.0
        %1582 = vmatpush1.msra.mxu0 %v799
        %1583 = vmatprep.subr.mxu0 0.0
        %1584 = vmatpush1.msra.mxu0 %v800
        %1585 = vmatprep.subr.mxu0 0.0
        %1586 = vmatpush1.msra.mxu0 %v801
        %1587 = vmatprep.subr.mxu0 0.0
        %1588 = vmatpush1.msra.mxu0 %v802
        %1589 = vmatprep.subr.mxu0 0.0
        %1590 = vmatpush1.msra.mxu0 %v803
        %1591 = vmatprep.subr.mxu0 0.0
        %1592 = vmatpush1.msra.mxu0 %v804
        %1593 = vmatprep.subr.mxu0 0.0
        %1594 = vmatpush1.msra.mxu0 %v805
        %1595 = vmatprep.subr.mxu0 0.0
        %1596 = vmatpush1.msra.mxu0 %v806
        %1597 = vmatprep.subr.mxu0 0.0
        %1598 = vmatpush1.msra.mxu0 %v807
        %1599 = vmatprep.subr.mxu0 0.0
        %1600 = vmatpush1.msra.mxu0 %v808
        %1601 = vmatprep.subr.mxu0 0.0
        %1602 = vmatpush1.msra.mxu0 %v809
        %1603 = vmatprep.subr.mxu0 0.0
        %1604 = vmatpush1.msra.mxu0 %v810
        %1605 = vmatprep.subr.mxu0 0.0
        %1606 = vmatpush1.msra.mxu0 %v811
        %1607 = vmatprep.subr.mxu0 0.0
        %1608 = vmatpush1.msra.mxu0 %v812
        %1609 = vmatprep.subr.mxu0 0.0
        %1610 = vmatpush1.msra.mxu0 %v813
        %1611 = vmatprep.subr.mxu0 0.0
        %1612 = vmatpush1.msra.mxu0 %v814
        %1613 = vmatprep.subr.mxu0 0.0
        %1614 = vmatpush1.msra.mxu0 %v815
        %1615 = vmatprep.subr.mxu0 0.0
        %1616 = vmatpush1.msra.mxu0 %v816
        %1617 = vmatprep.subr.mxu0 0.0
        %1618 = vmatpush1.msra.mxu0 %v817
        %1619 = vmatprep.subr.mxu0 0.0
        %1620 = vmatpush1.msra.mxu0 %v818
        %1621 = vmatprep.subr.mxu0 0.0
        %1622 = vmatpush1.msra.mxu0 %v819
        %1623 = vmatprep.subr.mxu0 0.0
        %1624 = vmatpush1.msra.mxu0 %v820
        %1625 = vmatprep.subr.mxu0 0.0
        %1626 = vmatpush1.msra.mxu0 %v821
        %1627 = vmatprep.subr.mxu0 0.0
        %1628 = vmatpush1.msra.mxu0 %v822
        %1629 = vmatprep.subr.mxu0 0.0
        %1630 = vmatpush1.msra.mxu0 %v823
        %1631 = vmatprep.subr.mxu0 0.0
        %1632 = vmatpush1.msra.mxu0 %v824
        %1633 = vmatprep.subr.mxu0 0.0
        %1634 = vmatpush1.msra.mxu0 %v825
        %1635 = vmatprep.mubr.f32.mxu0 %v1566
        %1636 = vmatmul.mubr.f32.gmra.mrb[0].mxu0 %v1565
        %v1637 = vpop.f32.mrb[0].mxu0
        %v1638 = vadd.f32 %v832, %v1637
        %v1639 = vpop.f32.mrb[0].mxu0
        %1640 = vmatprep.mubr.f32.mxu0 %v1568
        %1641 = vmatmul.mubr.f32.gmra.mrb[0].mxu0 %v1567
        %v1642 = vpop.f32.mrb[0].mxu0
        %v1643 = vadd.f32 %v832, %v1642
        %v1644 = vpop.f32.mrb[0].mxu0
        %1645 = vmatprep.mubr.f32.mxu0 %v1570
        %1646 = vmatmul.mubr.f32.gmra.mrb[0].mxu0 %v1569
        %v1647 = vpop.f32.mrb[0].mxu0
        %v1648 = vadd.f32 %v832, %v1647
        %v1649 = vpop.f32.mrb[0].mxu0
        %1650 = vdwg.mxu0
        %v1651 = vadd.f32 %v1638, %v1303
        %v1652 = vadd.f32 %v1643, %v1304
        %v1653 = vadd.f32 %v1648, %v1305
        %v1654 = vsel %vm846, %v1651, 0.0
        %1655 = vadd.xlane.f32.xlu0 %v1654
        %v1656 = vpop.xlane.xlu0 %1655
        %v1657 = vsel %vm846, %v1652, 0.0
        %1658 = vadd.xlane.f32.xlu0 %v1657
        %v1659 = vpop.xlane.xlu0 %1658
        %v1660 = vsel %vm846, %v1653, 0.0
        %1661 = vadd.xlane.f32.xlu0 %v1660
        %v1662 = vpop.xlane.xlu0 %1661
        %v1663 = vmul.f32 %v1656, %v1269
        %v1664 = vmul.f32 %v1659, %v1269
        %v1665 = vmul.f32 %v1662, %v1269
        %v1666 = vsub.f32 %v1651, %v1663
        %v1667 = vsub.f32 %v1652, %v1664
        %v1668 = vsub.f32 %v1653, %v1665
        %v1669 = vmul.f32 %v1666, %v1666
        %v1670 = vmul.f32 %v1667, %v1667
        %v1671 = vmul.f32 %v1668, %v1668
        %v1672 = vsel %vm846, %v1669, 0.0
        %1673 = vadd.xlane.f32.xlu0 %v1672
        %v1674 = vpop.xlane.xlu0 %1673
        %v1675 = vsel %vm846, %v1670, 0.0
        %1676 = vadd.xlane.f32.xlu0 %v1675
        %v1677 = vpop.xlane.xlu0 %1676
        %v1678 = vsel %vm846, %v1671, 0.0
        %1679 = vadd.xlane.f32.xlu0 %v1678
        %v1680 = vpop.xlane.xlu0 %1679
        %v1681 = vmul.f32 %v1674, %v1269
        %v1682 = vmul.f32 %v1677, %v1269
        %v1683 = vmul.f32 %v1680, %v1269
        %v1684 = vadd.f32 %v1681, 1e-12
        %v1685 = vadd.f32 %v1682, 1e-12
        %v1686 = vadd.f32 %v1683, 1e-12
        %v1687 = vrsqrt.pop %v1684
        %v1688 = vrsqrt.pop %v1685
        %v1689 = vrsqrt.pop %v1686
        %v1690 = vmul.f32 %v1666, %v1687
        %v1691 = vmul.f32 %v1667, %v1688
        %v1692 = vmul.f32 %v1668, %v1689
        %v1693 = vmul.f32 %v1690, %v833
        %v1694 = vmul.f32 %v1691, %v833
        %v1695 = vmul.f32 %v1692, %v833
        %v1696 = vadd.f32 %v1693, %v834
        %v1697 = vadd.f32 %v1694, %v834
        %v1698 = vadd.f32 %v1695, %v834
        %v1699 = vld [vmem:[%s354] sm:$0xff]
        %v1700 = vsel %vm488, %v1699, 0.0
        %1701 = vadd.xlane.f32.xlu0 %v1700
        %v1702 = vpop.xlane.xlu0 %1701
        %v1703 = vrcp.pop 32.0
        %v1704 = vmul.f32 %v1702, %v1703
        %v1705 = vsub.f32 %v1699, %v1704
        %v1706 = vmul.f32 %v1705, %v1705
        %v1707 = vsel %vm488, %v1706, 0.0
        %1708 = vadd.xlane.f32.xlu0 %v1707
        %v1709 = vpop.xlane.xlu0 %1708
        %v1710 = vmul.f32 %v1709, %v1703
        %v1711 = vadd.f32 %v1710, 1e-12
        %v1712 = vrsqrt.pop %v1711
        %v1713 = vmul.f32 %v1705, %v1712
        %v1714 = vlaneseq
        %v1715 = vshrl.u32 %v1714, 7
        %v1716 = vsub.s32 0, %v1715
        %v1717 = vrot.slane %v391, %v1716
        %v1718 = vmul.f32 %v1713, %v1717
        %v1719 = vlaneseq
        %v1720 = vshrl.u32 %v1719, 7
        %v1721 = vsub.s32 0, %v1720
        %v1722 = vrot.slane %v392, %v1721
        %v1723 = vadd.f32 %v1718, %v1722
        %v1724 = vld [vmem:[%s363] sm:$0x1]
        %v1725 = vsub.f32 1.0, %v1724
        %v1726 = vmul.f32 %v1725, -10000.0
        %v1727 = vld [vmem:[%s3] sm:$0xff]
        %v1728 = vld [vmem:[%s3 + $0x8] sm:$0xff]
        %v1729 = vld [vmem:[%s3 + $0x10] sm:$0xff]
        %v1730 = vld [vmem:[%s3 + $0x18] sm:$0xff]
        %v1731 = vld [vmem:[%s3 + $0x20] sm:$0xff]
        %v1732 = vld [vmem:[%s3 + $0x28] sm:$0xff]
        %v1733 = vld [vmem:[%s3 + $0x30] sm:$0xff]
        %v1734 = vld [vmem:[%s3 + $0x38] sm:$0xff]
        %v1735 = vld [vmem:[%s3 + $0x40] sm:$0xff]
        %v1736 = vld [vmem:[%s3 + $0x48] sm:$0xff]
        %v1737 = vld [vmem:[%s3 + $0x50] sm:$0xff]
        %v1738 = vld [vmem:[%s3 + $0x58] sm:$0xff]
        %v1739 = vld [vmem:[%s3 + $0x60] sm:$0xff]
        %v1740 = vld [vmem:[%s3 + $0x68] sm:$0xff]
        %v1741 = vld [vmem:[%s3 + $0x70] sm:$0xff]
        %v1742 = vld [vmem:[%s3 + $0x78] sm:$0xff]
        %v1743 = vld [vmem:[%s3 + $0x80] sm:$0xff]
        %v1744 = vld [vmem:[%s3 + $0x88] sm:$0xff]
        %v1745 = vld [vmem:[%s3 + $0x90] sm:$0xff]
        %v1746 = vld [vmem:[%s3 + $0x98] sm:$0xff]
        %v1747 = vld [vmem:[%s3 + $0xa0] sm:$0xff]
        %v1748 = vld [vmem:[%s3 + $0xa8] sm:$0xff]
        %v1749 = vld [vmem:[%s3 + $0xb0] sm:$0xff]
        %v1750 = vld [vmem:[%s3 + $0xb8] sm:$0xff]
        %v1751 = vld [vmem:[%s3 + $0xc0] sm:$0xff]
        %v1752 = vld [vmem:[%s3 + $0xc8] sm:$0xff]
        %v1753 = vld [vmem:[%s3 + $0xd0] sm:$0xff]
        %v1754 = vld [vmem:[%s3 + $0xd8] sm:$0xff]
        %v1755 = vld [vmem:[%s4] sm:$0x1]
        %v1756 = vld [vmem:[%s4 + $0x1] sm:$0x1]
        %v1757 = vld [vmem:[%s4 + $0x2] sm:$0x1]
        %v1758 = vld [vmem:[%s4 + $0x3] sm:$0x1]
        %v1759 = vld [vmem:[%s4 + $0x4] sm:$0x1]
        %v1760 = vld [vmem:[%s4 + $0x5] sm:$0x1]
        %v1761 = vld [vmem:[%s4 + $0x6] sm:$0x1]
        %v1762 = vld [vmem:[%s4 + $0x7] sm:$0x1]
        %v1763 = vlaneseq
        %v1764 = vshrl.u32 %v1763, 7
        %v1765 = vsub.s32 0, %v1764
        %v1766 = vrot.slane %v1755, %v1765
        %v1768 = vsel %vm488, %v1723, 0
        %1770 = vmatprep.subr.mxu0 0.0
        %1771 = vmatpush1.msra.mxu0 %v1727
        %1772 = vmatprep.subr.mxu0 0.0
        %1773 = vmatpush1.msra.mxu0 %v1728
        %1774 = vmatprep.subr.mxu0 0.0
        %1775 = vmatpush1.msra.mxu0 %v1729
        %1776 = vmatprep.subr.mxu0 0.0
        %1777 = vmatpush1.msra.mxu0 %v1730
        %1778 = vmatprep.subr.mxu0 0.0
        %1779 = vmatpush1.msra.mxu0 0.0
        %1780 = vmatprep.subr.mxu0 0.0
        %1781 = vmatpush1.msra.mxu0 0.0
        %1782 = vmatprep.subr.mxu0 0.0
        %1783 = vmatpush1.msra.mxu0 0.0
        %1784 = vmatprep.subr.mxu0 0.0
        %1785 = vmatpush1.msra.mxu0 0.0
        %1786 = vmatprep.subr.mxu0 0.0
        %1787 = vmatpush1.msra.mxu0 0.0
        %1788 = vmatprep.subr.mxu0 0.0
        %1789 = vmatpush1.msra.mxu0 0.0
        %1790 = vmatprep.subr.mxu0 0.0
        %1791 = vmatpush1.msra.mxu0 0.0
        %1792 = vmatprep.subr.mxu0 0.0
        %1793 = vmatpush1.msra.mxu0 0.0
        %1794 = vmatprep.subr.mxu0 0.0
        %1795 = vmatpush1.msra.mxu0 0.0
        %1796 = vmatprep.subr.mxu0 0.0
        %1797 = vmatpush1.msra.mxu0 0.0
        %1798 = vmatprep.subr.mxu0 0.0
        %1799 = vmatpush1.msra.mxu0 0.0
        %1800 = vmatprep.subr.mxu0 0.0
        %1801 = vmatpush1.msra.mxu0 0.0
        %1802 = vmatprep.subr.mxu0 0.0
        %1803 = vmatpush1.msra.mxu0 0.0
        %1804 = vmatprep.subr.mxu0 0.0
        %1805 = vmatpush1.msra.mxu0 0.0
        %1806 = vmatprep.subr.mxu0 0.0
        %1807 = vmatpush1.msra.mxu0 0.0
        %1808 = vmatprep.subr.mxu0 0.0
        %1809 = vmatpush1.msra.mxu0 0.0
        %1810 = vmatprep.subr.mxu0 0.0
        %1811 = vmatpush1.msra.mxu0 0.0
        %1812 = vmatprep.subr.mxu0 0.0
        %1813 = vmatpush1.msra.mxu0 0.0
        %1814 = vmatprep.subr.mxu0 0.0
        %1815 = vmatpush1.msra.mxu0 0.0
        %1816 = vmatprep.subr.mxu0 0.0
        %1817 = vmatpush1.msra.mxu0 0.0
        %1818 = vmatprep.subr.mxu0 0.0
        %1819 = vmatpush1.msra.mxu0 0.0
        %1820 = vmatprep.subr.mxu0 0.0
        %1821 = vmatpush1.msra.mxu0 0.0
        %1822 = vmatprep.subr.mxu0 0.0
        %1823 = vmatpush1.msra.mxu0 0.0
        %1824 = vmatprep.subr.mxu0 0.0
        %1825 = vmatpush1.msra.mxu0 0.0
        %1826 = vmatprep.subr.mxu0 0.0
        %1827 = vmatpush1.msra.mxu0 0.0
        %1828 = vmatprep.subr.mxu0 0.0
        %1829 = vmatpush1.msra.mxu0 0.0
        %1830 = vmatprep.subr.mxu0 0.0
        %1831 = vmatpush1.msra.mxu0 0.0
        %1832 = vmatprep.subr.mxu0 0.0
        %1833 = vmatpush1.msra.mxu0 0.0
        %1834 = vmatprep.mubr.f32.mxu0 0.0
        %1835 = vmatmul.mubr.f32.gmra.mrb[0].mxu0 %v1768
        %v1836 = vpop.f32.mrb[0].mxu0
        %v1837 = vadd.f32 %v1766, %v1836
        %v1838 = vpop.f32.mrb[0].mxu0
        %1839 = vdwg.mxu0
        %1841 = vrot.lane.b32.xlu0 %v1837, 96
        %v1842 = vpop.permute.xlu0 %1841
        %vm1843 = vcmask 130048
        %v1844 = vsel %vm1843, %v1837, 0
        %v1846 = vsel %vm1843, %v1842, 0
        %1848 = vmatprep.subr.mxu0 0.0
        %1849 = vmatpush1.xpose.msra.mxu0 %v1846
        %1850 = vmatprep.subr.mxu0 0.0
        %1851 = vmatpush1.xpose.msra.mxu0 0.0
        %1852 = vmatprep.subr.mxu0 0.0
        %1853 = vmatpush1.xpose.msra.mxu0 0.0
        %1854 = vmatprep.subr.mxu0 0.0
        %1855 = vmatpush1.xpose.msra.mxu0 0.0
        %1856 = vmatprep.subr.mxu0 0.0
        %1857 = vmatpush1.xpose.msra.mxu0 0.0
        %1858 = vmatprep.subr.mxu0 0.0
        %1859 = vmatpush1.xpose.msra.mxu0 0.0
        %1860 = vmatprep.subr.mxu0 0.0
        %1861 = vmatpush1.xpose.msra.mxu0 0.0
        %1862 = vmatprep.subr.mxu0 0.0
        %1863 = vmatpush1.xpose.msra.mxu0 0.0
        %1864 = vmatprep.subr.mxu0 0.0
        %1865 = vmatpush1.xpose.msra.mxu0 0.0
        %1866 = vmatprep.subr.mxu0 0.0
        %1867 = vmatpush1.xpose.msra.mxu0 0.0
        %1868 = vmatprep.subr.mxu0 0.0
        %1869 = vmatpush1.xpose.msra.mxu0 0.0
        %1870 = vmatprep.subr.mxu0 0.0
        %1871 = vmatpush1.xpose.msra.mxu0 0.0
        %1872 = vmatprep.subr.mxu0 0.0
        %1873 = vmatpush1.xpose.msra.mxu0 0.0
        %1874 = vmatprep.subr.mxu0 0.0
        %1875 = vmatpush1.xpose.msra.mxu0 0.0
        %1876 = vmatprep.subr.mxu0 0.0
        %1877 = vmatpush1.xpose.msra.mxu0 0.0
        %1878 = vmatprep.subr.mxu0 0.0
        %1879 = vmatpush1.xpose.msra.mxu0 0.0
        %1880 = vmatprep.subr.mxu0 0.0
        %1881 = vmatpush1.xpose.msra.mxu0 0.0
        %1882 = vmatprep.subr.mxu0 0.0
        %1883 = vmatpush1.xpose.msra.mxu0 0.0
        %1884 = vmatprep.subr.mxu0 0.0
        %1885 = vmatpush1.xpose.msra.mxu0 0.0
        %1886 = vmatprep.subr.mxu0 0.0
        %1887 = vmatpush1.xpose.msra.mxu0 0.0
        %1888 = vmatprep.subr.mxu0 0.0
        %1889 = vmatpush1.xpose.msra.mxu0 0.0
        %1890 = vmatprep.subr.mxu0 0.0
        %1891 = vmatpush1.xpose.msra.mxu0 0.0
        %1892 = vmatprep.subr.mxu0 0.0
        %1893 = vmatpush1.xpose.msra.mxu0 0.0
        %1894 = vmatprep.subr.mxu0 0.0
        %1895 = vmatpush1.xpose.msra.mxu0 0.0
        %1896 = vmatprep.subr.mxu0 0.0
        %1897 = vmatpush1.xpose.msra.mxu0 0.0
        %1898 = vmatprep.subr.mxu0 0.0
        %1899 = vmatpush1.xpose.msra.mxu0 0.0
        %1900 = vmatprep.subr.mxu0 0.0
        %1901 = vmatpush1.xpose.msra.mxu0 0.0
        %1902 = vmatprep.subr.mxu0 0.0
        %1903 = vmatpush1.xpose.msra.mxu0 0.0
        %1904 = vmatprep.subr.mxu0 0.0
        %1905 = vmatpush1.xpose.msra.mxu0 0.0
        %1906 = vmatprep.subr.mxu0 0.0
        %1907 = vmatpush1.xpose.msra.mxu0 0.0
        %1908 = vmatprep.subr.mxu0 0.0
        %1909 = vmatpush1.xpose.msra.mxu0 0.0
        %1910 = vmatprep.subr.mxu0 0.0
        %1911 = vmatpush1.xpose.msra.mxu0 0.0
        %1912 = vmatprep.mubr.f32.mxu0 0.0
        %1913 = vmatmul.mubr.f32.gmra.mrb[0].mxu0 %v1844
        %v1914 = vpop.f32.mrb[0].mxu0
        %v1915 = vadd.f32 0.0, %v1914
        %v1916 = vpop.f32.mrb[0].mxu0
        %1917 = vdwg.mxu0
        %v1918 = vmul.f32 %v1915, 0.25
        %v1919 = vlaneseq
        %v1920 = vshrl.u32 %v1919, 7
        %v1921 = vsub.s32 0, %v1920
        %v1922 = vrot.slane %v1726, %v1921
        %v1923 = vadd.f32 %v1918, %v1922
        %vm1924 = vcmask 64512
        %v1925 = vsel %vm1924, %v1923, -inf
        %1926 = vmax.xlane.f32.xlu0 %v1925
        %v1927 = vpop.xlane.xlu0 %1926
        %v1928 = vsub.f32 %v1923, %v1927
        %v1929 = vmul.f32 %v1928, 1.442695
        %v1930 = vpow.pop %v1929
        %v1931 = vsel %vm1924, %v1930, 0.0
        %1932 = vadd.xlane.f32.xlu0 %v1931
        %v1933 = vpop.xlane.xlu0 %1932
        %v1934 = vrcp.pop %v1933
        %v1935 = vmul.f32 %v1930, %v1934
        %1936 = vrot.lane.b32.xlu0 %v1837, 64
        %v1937 = vpop.permute.xlu0 %1936
        %v1940 = vsel %vm1924, %v1935, 0
        %1942 = vmatprep.subr.mxu0 0.0
        %1943 = vmatpush1.msra.mxu0 %v1937
        %1944 = vmatprep.subr.mxu0 0.0
        %1945 = vmatpush1.msra.mxu0 0.0
        %1946 = vmatprep.subr.mxu0 0.0
        %1947 = vmatpush1.msra.mxu0 0.0
        %1948 = vmatprep.subr.mxu0 0.0
        %1949 = vmatpush1.msra.mxu0 0.0
        %1950 = vmatprep.subr.mxu0 0.0
        %1951 = vmatpush1.msra.mxu0 0.0
        %1952 = vmatprep.subr.mxu0 0.0
        %1953 = vmatpush1.msra.mxu0 0.0
        %1954 = vmatprep.subr.mxu0 0.0
        %1955 = vmatpush1.msra.mxu0 0.0
        %1956 = vmatprep.subr.mxu0 0.0
        %1957 = vmatpush1.msra.mxu0 0.0
        %1958 = vmatprep.subr.mxu0 0.0
        %1959 = vmatpush1.msra.mxu0 0.0
        %1960 = vmatprep.subr.mxu0 0.0
        %1961 = vmatpush1.msra.mxu0 0.0
        %1962 = vmatprep.subr.mxu0 0.0
        %1963 = vmatpush1.msra.mxu0 0.0
        %1964 = vmatprep.subr.mxu0 0.0
        %1965 = vmatpush1.msra.mxu0 0.0
        %1966 = vmatprep.subr.mxu0 0.0
        %1967 = vmatpush1.msra.mxu0 0.0
        %1968 = vmatprep.subr.mxu0 0.0
        %1969 = vmatpush1.msra.mxu0 0.0
        %1970 = vmatprep.subr.mxu0 0.0
        %1971 = vmatpush1.msra.mxu0 0.0
        %1972 = vmatprep.subr.mxu0 0.0
        %1973 = vmatpush1.msra.mxu0 0.0
        %1974 = vmatprep.subr.mxu0 0.0
        %1975 = vmatpush1.msra.mxu0 0.0
        %1976 = vmatprep.subr.mxu0 0.0
        %1977 = vmatpush1.msra.mxu0 0.0
        %1978 = vmatprep.subr.mxu0 0.0
        %1979 = vmatpush1.msra.mxu0 0.0
        %1980 = vmatprep.subr.mxu0 0.0
        %1981 = vmatpush1.msra.mxu0 0.0
        %1982 = vmatprep.subr.mxu0 0.0
        %1983 = vmatpush1.msra.mxu0 0.0
        %1984 = vmatprep.subr.mxu0 0.0
        %1985 = vmatpush1.msra.mxu0 0.0
        %1986 = vmatprep.subr.mxu0 0.0
        %1987 = vmatpush1.msra.mxu0 0.0
        %1988 = vmatprep.subr.mxu0 0.0
        %1989 = vmatpush1.msra.mxu0 0.0
        %1990 = vmatprep.subr.mxu0 0.0
        %1991 = vmatpush1.msra.mxu0 0.0
        %1992 = vmatprep.subr.mxu0 0.0
        %1993 = vmatpush1.msra.mxu0 0.0
        %1994 = vmatprep.subr.mxu0 0.0
        %1995 = vmatpush1.msra.mxu0 0.0
        %1996 = vmatprep.subr.mxu0 0.0
        %1997 = vmatpush1.msra.mxu0 0.0
        %1998 = vmatprep.subr.mxu0 0.0
        %1999 = vmatpush1.msra.mxu0 0.0
        %2000 = vmatprep.subr.mxu0 0.0
        %2001 = vmatpush1.msra.mxu0 0.0
        %2002 = vmatprep.subr.mxu0 0.0
        %2003 = vmatpush1.msra.mxu0 0.0
        %2004 = vmatprep.subr.mxu0 0.0
        %2005 = vmatpush1.msra.mxu0 0.0
        %2006 = vmatprep.mubr.f32.mxu0 0.0
        %2007 = vmatmul.mubr.f32.gmra.mrb[0].mxu0 %v1940
        %v2008 = vpop.f32.mrb[0].mxu0
        %v2009 = vadd.f32 0.0, %v2008
        %v2010 = vpop.f32.mrb[0].mxu0
        %2011 = vdwg.mxu0
        %2012 = vrot.lane.b32.xlu0 %v1837, 112
        %v2013 = vpop.permute.xlu0 %2012
        %2014 = vrot.lane.b32.xlu0 %v1837, 80
        %v2015 = vpop.permute.xlu0 %2014
        %v2016 = vsel %vm1843, %v2013, 0
        %v2018 = vsel %vm1843, %v2015, 0
        %2020 = vmatprep.subr.mxu0 0.0
        %2021 = vmatpush1.xpose.msra.mxu0 %v2018
        %2022 = vmatprep.subr.mxu0 0.0
        %2023 = vmatpush1.xpose.msra.mxu0 0.0
        %2024 = vmatprep.subr.mxu0 0.0
        %2025 = vmatpush1.xpose.msra.mxu0 0.0
        %2026 = vmatprep.subr.mxu0 0.0
        %2027 = vmatpush1.xpose.msra.mxu0 0.0
        %2028 = vmatprep.subr.mxu0 0.0
        %2029 = vmatpush1.xpose.msra.mxu0 0.0
        %2030 = vmatprep.subr.mxu0 0.0
        %2031 = vmatpush1.xpose.msra.mxu0 0.0
        %2032 = vmatprep.subr.mxu0 0.0
        %2033 = vmatpush1.xpose.msra.mxu0 0.0
        %2034 = vmatprep.subr.mxu0 0.0
        %2035 = vmatpush1.xpose.msra.mxu0 0.0
        %2036 = vmatprep.subr.mxu0 0.0
        %2037 = vmatpush1.xpose.msra.mxu0 0.0
        %2038 = vmatprep.subr.mxu0 0.0
        %2039 = vmatpush1.xpose.msra.mxu0 0.0
        %2040 = vmatprep.subr.mxu0 0.0
        %2041 = vmatpush1.xpose.msra.mxu0 0.0
        %2042 = vmatprep.subr.mxu0 0.0
        %2043 = vmatpush1.xpose.msra.mxu0 0.0
        %2044 = vmatprep.subr.mxu0 0.0
        %2045 = vmatpush1.xpose.msra.mxu0 0.0
        %2046 = vmatprep.subr.mxu0 0.0
        %2047 = vmatpush1.xpose.msra.mxu0 0.0
        %2048 = vmatprep.subr.mxu0 0.0
        %2049 = vmatpush1.xpose.msra.mxu0 0.0
        %2050 = vmatprep.subr.mxu0 0.0
        %2051 = vmatpush1.xpose.msra.mxu0 0.0
        %2052 = vmatprep.subr.mxu0 0.0
        %2053 = vmatpush1.xpose.msra.mxu0 0.0
        %2054 = vmatprep.subr.mxu0 0.0
        %2055 = vmatpush1.xpose.msra.mxu0 0.0
        %2056 = vmatprep.subr.mxu0 0.0
        %2057 = vmatpush1.xpose.msra.mxu0 0.0
        %2058 = vmatprep.subr.mxu0 0.0
        %2059 = vmatpush1.xpose.msra.mxu0 0.0
        %2060 = vmatprep.subr.mxu0 0.0
        %2061 = vmatpush1.xpose.msra.mxu0 0.0
        %2062 = vmatprep.subr.mxu0 0.0
        %2063 = vmatpush1.xpose.msra.mxu0 0.0
        %2064 = vmatprep.subr.mxu0 0.0
        %2065 = vmatpush1.xpose.msra.mxu0 0.0
        %2066 = vmatprep.subr.mxu0 0.0
        %2067 = vmatpush1.xpose.msra.mxu0 0.0
        %2068 = vmatprep.subr.mxu0 0.0
        %2069 = vmatpush1.xpose.msra.mxu0 0.0
        %2070 = vmatprep.subr.mxu0 0.0
        %2071 = vmatpush1.xpose.msra.mxu0 0.0
        %2072 = vmatprep.subr.mxu0 0.0
        %2073 = vmatpush1.xpose.msra.mxu0 0.0
        %2074 = vmatprep.subr.mxu0 0.0
        %2075 = vmatpush1.xpose.msra.mxu0 0.0
        %2076 = vmatprep.subr.mxu0 0.0
        %2077 = vmatpush1.xpose.msra.mxu0 0.0
        %2078 = vmatprep.subr.mxu0 0.0
        %2079 = vmatpush1.xpose.msra.mxu0 0.0
        %2080 = vmatprep.subr.mxu0 0.0
        %2081 = vmatpush1.xpose.msra.mxu0 0.0
        %2082 = vmatprep.subr.mxu0 0.0
        %2083 = vmatpush1.xpose.msra.mxu0 0.0
        %2084 = vmatprep.mubr.f32.mxu0 0.0
        %2085 = vmatmul.mubr.f32.gmra.mrb[0].mxu0 %v2016
        %v2086 = vpop.f32.mrb[0].mxu0
        %v2087 = vadd.f32 0.0, %v2086
        %v2088 = vpop.f32.mrb[0].mxu0
        %2089 = vdwg.mxu0
        %v2090 = vmul.f32 %v2087, 0.25
        %v2091 = vadd.f32 %v2090, %v1922
        %v2092 = vsel %vm1924, %v2091, -inf
        %2093 = vmax.xlane.f32.xlu0 %v2092
        %v2094 = vpop.xlane.xlu0 %2093
        %v2095 = vsub.f32 %v2091, %v2094
        %v2096 = vmul.f32 %v2095, 1.442695
        %v2097 = vpow.pop %v2096
        %v2098 = vsel %vm1924, %v2097, 0.0
        %2099 = vadd.xlane.f32.xlu0 %v2098
        %v2100 = vpop.xlane.xlu0 %2099
        %v2101 = vrcp.pop %v2100
        %v2102 = vmul.f32 %v2097, %v2101
        %2103 = vrot.lane.b32.xlu0 %v1837, 48
        %v2104 = vpop.permute.xlu0 %2103
        %v2107 = vsel %vm1924, %v2102, 0
        %2109 = vmatprep.subr.mxu0 0.0
        %2110 = vmatpush1.msra.mxu0 %v2104
        %2111 = vmatprep.subr.mxu0 0.0
        %2112 = vmatpush1.msra.mxu0 0.0
        %2113 = vmatprep.subr.mxu0 0.0
        %2114 = vmatpush1.msra.mxu0 0.0
        %2115 = vmatprep.subr.mxu0 0.0
        %2116 = vmatpush1.msra.mxu0 0.0
        %2117 = vmatprep.subr.mxu0 0.0
        %2118 = vmatpush1.msra.mxu0 0.0
        %2119 = vmatprep.subr.mxu0 0.0
        %2120 = vmatpush1.msra.mxu0 0.0
        %2121 = vmatprep.subr.mxu0 0.0
        %2122 = vmatpush1.msra.mxu0 0.0
        %2123 = vmatprep.subr.mxu0 0.0
        %2124 = vmatpush1.msra.mxu0 0.0
        %2125 = vmatprep.subr.mxu0 0.0
        %2126 = vmatpush1.msra.mxu0 0.0
        %2127 = vmatprep.subr.mxu0 0.0
        %2128 = vmatpush1.msra.mxu0 0.0
        %2129 = vmatprep.subr.mxu0 0.0
        %2130 = vmatpush1.msra.mxu0 0.0
        %2131 = vmatprep.subr.mxu0 0.0
        %2132 = vmatpush1.msra.mxu0 0.0
        %2133 = vmatprep.subr.mxu0 0.0
        %2134 = vmatpush1.msra.mxu0 0.0
        %2135 = vmatprep.subr.mxu0 0.0
        %2136 = vmatpush1.msra.mxu0 0.0
        %2137 = vmatprep.subr.mxu0 0.0
        %2138 = vmatpush1.msra.mxu0 0.0
        %2139 = vmatprep.subr.mxu0 0.0
        %2140 = vmatpush1.msra.mxu0 0.0
        %2141 = vmatprep.subr.mxu0 0.0
        %2142 = vmatpush1.msra.mxu0 0.0
        %2143 = vmatprep.subr.mxu0 0.0
        %2144 = vmatpush1.msra.mxu0 0.0
        %2145 = vmatprep.subr.mxu0 0.0
        %2146 = vmatpush1.msra.mxu0 0.0
        %2147 = vmatprep.subr.mxu0 0.0
        %2148 = vmatpush1.msra.mxu0 0.0
        %2149 = vmatprep.subr.mxu0 0.0
        %2150 = vmatpush1.msra.mxu0 0.0
        %2151 = vmatprep.subr.mxu0 0.0
        %2152 = vmatpush1.msra.mxu0 0.0
        %2153 = vmatprep.subr.mxu0 0.0
        %2154 = vmatpush1.msra.mxu0 0.0
        %2155 = vmatprep.subr.mxu0 0.0
        %2156 = vmatpush1.msra.mxu0 0.0
        %2157 = vmatprep.subr.mxu0 0.0
        %2158 = vmatpush1.msra.mxu0 0.0
        %2159 = vmatprep.subr.mxu0 0.0
        %2160 = vmatpush1.msra.mxu0 0.0
        %2161 = vmatprep.subr.mxu0 0.0
        %2162 = vmatpush1.msra.mxu0 0.0
        %2163 = vmatprep.subr.mxu0 0.0
        %2164 = vmatpush1.msra.mxu0 0.0
        %2165 = vmatprep.subr.mxu0 0.0
        %2166 = vmatpush1.msra.mxu0 0.0
        %2167 = vmatprep.subr.mxu0 0.0
        %2168 = vmatpush1.msra.mxu0 0.0
        %2169 = vmatprep.subr.mxu0 0.0
        %2170 = vmatpush1.msra.mxu0 0.0
        %2171 = vmatprep.subr.mxu0 0.0
        %2172 = vmatpush1.msra.mxu0 0.0
        %2173 = vmatprep.mubr.f32.mxu0 0.0
        %2174 = vmatmul.mubr.f32.gmra.mrb[0].mxu0 %v2107
        %v2175 = vpop.f32.mrb[0].mxu0
        %v2176 = vadd.f32 0.0, %v2175
        %v2177 = vpop.f32.mrb[0].mxu0
        %2178 = vdwg.mxu0
        %2180 = vrot.lane.b32.xlu0 %v2176, 16
        %v2181 = vpop.permute.xlu0 %2180
        %v2183 = vsel %vm1843, %v2009, %v2181
        %v2184 = vlaneseq
        %v2185 = vshrl.u32 %v2184, 7
        %v2186 = vsub.s32 0, %v2185
        %v2187 = vrot.slane %v1756, %v2186
        %v2189 = vsel %vm488, %v2183, 0
        %2191 = vmatprep.subr.mxu0 0.0
        %2192 = vmatpush1.msra.mxu0 %v1731
        %2193 = vmatprep.subr.mxu0 0.0
        %2194 = vmatpush1.msra.mxu0 %v1732
        %2195 = vmatprep.subr.mxu0 0.0
        %2196 = vmatpush1.msra.mxu0 %v1733
        %2197 = vmatprep.subr.mxu0 0.0
        %2198 = vmatpush1.msra.mxu0 %v1734
        %2199 = vmatprep.subr.mxu0 0.0
        %2200 = vmatpush1.msra.mxu0 0.0
        %2201 = vmatprep.subr.mxu0 0.0
        %2202 = vmatpush1.msra.mxu0 0.0
        %2203 = vmatprep.subr.mxu0 0.0
        %2204 = vmatpush1.msra.mxu0 0.0
        %2205 = vmatprep.subr.mxu0 0.0
        %2206 = vmatpush1.msra.mxu0 0.0
        %2207 = vmatprep.subr.mxu0 0.0
        %2208 = vmatpush1.msra.mxu0 0.0
        %2209 = vmatprep.subr.mxu0 0.0
        %2210 = vmatpush1.msra.mxu0 0.0
        %2211 = vmatprep.subr.mxu0 0.0
        %2212 = vmatpush1.msra.mxu0 0.0
        %2213 = vmatprep.subr.mxu0 0.0
        %2214 = vmatpush1.msra.mxu0 0.0
        %2215 = vmatprep.subr.mxu0 0.0
        %2216 = vmatpush1.msra.mxu0 0.0
        %2217 = vmatprep.subr.mxu0 0.0
        %2218 = vmatpush1.msra.mxu0 0.0
        %2219 = vmatprep.subr.mxu0 0.0
        %2220 = vmatpush1.msra.mxu0 0.0
        %2221 = vmatprep.subr.mxu0 0.0
        %2222 = vmatpush1.msra.mxu0 0.0
        %2223 = vmatprep.subr.mxu0 0.0
        %2224 = vmatpush1.msra.mxu0 0.0
        %2225 = vmatprep.subr.mxu0 0.0
        %2226 = vmatpush1.msra.mxu0 0.0
        %2227 = vmatprep.subr.mxu0 0.0
        %2228 = vmatpush1.msra.mxu0 0.0
        %2229 = vmatprep.subr.mxu0 0.0
        %2230 = vmatpush1.msra.mxu0 0.0
        %2231 = vmatprep.subr.mxu0 0.0
        %2232 = vmatpush1.msra.mxu0 0.0
        %2233 = vmatprep.subr.mxu0 0.0
        %2234 = vmatpush1.msra.mxu0 0.0
        %2235 = vmatprep.subr.mxu0 0.0
        %2236 = vmatpush1.msra.mxu0 0.0
        %2237 = vmatprep.subr.mxu0 0.0
        %2238 = vmatpush1.msra.mxu0 0.0
        %2239 = vmatprep.subr.mxu0 0.0
        %2240 = vmatpush1.msra.mxu0 0.0
        %2241 = vmatprep.subr.mxu0 0.0
        %2242 = vmatpush1.msra.mxu0 0.0
        %2243 = vmatprep.subr.mxu0 0.0
        %2244 = vmatpush1.msra.mxu0 0.0
        %2245 = vmatprep.subr.mxu0 0.0
        %2246 = vmatpush1.msra.mxu0 0.0
        %2247 = vmatprep.subr.mxu0 0.0
        %2248 = vmatpush1.msra.mxu0 0.0
        %2249 = vmatprep.subr.mxu0 0.0
        %2250 = vmatpush1.msra.mxu0 0.0
        %2251 = vmatprep.subr.mxu0 0.0
        %2252 = vmatpush1.msra.mxu0 0.0
        %2253 = vmatprep.subr.mxu0 0.0
        %2254 = vmatpush1.msra.mxu0 0.0
        %2255 = vmatprep.mubr.f32.mxu0 0.0
        %2256 = vmatmul.mubr.f32.gmra.mrb[0].mxu0 %v2189
        %v2257 = vpop.f32.mrb[0].mxu0
        %v2258 = vadd.f32 %v2187, %v2257
        %v2259 = vpop.f32.mrb[0].mxu0
        %2260 = vdwg.mxu0
        %v2261 = vadd.f32 %v2258, %v1723
        %v2262 = vsel %vm488, %v2261, 0.0
        %2263 = vadd.xlane.f32.xlu0 %v2262
        %v2264 = vpop.xlane.xlu0 %2263
        %v2265 = vmul.f32 %v2264, %v1703
        %v2266 = vsub.f32 %v2261, %v2265
        %v2267 = vmul.f32 %v2266, %v2266
        %v2268 = vsel %vm488, %v2267, 0.0
        %2269 = vadd.xlane.f32.xlu0 %v2268
        %v2270 = vpop.xlane.xlu0 %2269
        %v2271 = vmul.f32 %v2270, %v1703
        %v2272 = vadd.f32 %v2271, 1e-12
        %v2273 = vrsqrt.pop %v2272
        %v2274 = vmul.f32 %v2266, %v2273
        %v2275 = vlaneseq
        %v2276 = vshrl.u32 %v2275, 7
        %v2277 = vsub.s32 0, %v2276
        %v2278 = vrot.slane %v1757, %v2277
        %v2279 = vmul.f32 %v2274, %v2278
        %v2280 = vlaneseq
        %v2281 = vshrl.u32 %v2280, 7
        %v2282 = vsub.s32 0, %v2281
        %v2283 = vrot.slane %v1758, %v2282
        %v2284 = vadd.f32 %v2279, %v2283
        %v2285 = vlaneseq
        %v2286 = vshrl.u32 %v2285, 7
        %v2287 = vsub.s32 0, %v2286
        %v2288 = vrot.slane %v1759, %v2287
        %v2290 = vsel %vm488, %v2284, 0
        %2292 = vmatprep.subr.mxu0 0.0
        %2293 = vmatpush1.msra.mxu0 %v1735
        %2294 = vmatprep.subr.mxu0 0.0
        %2295 = vmatpush1.msra.mxu0 %v1736
        %2296 = vmatprep.subr.mxu0 0.0
        %2297 = vmatpush1.msra.mxu0 %v1737
        %2298 = vmatprep.subr.mxu0 0.0
        %2299 = vmatpush1.msra.mxu0 %v1738
        %2300 = vmatprep.subr.mxu0 0.0
        %2301 = vmatpush1.msra.mxu0 0.0
        %2302 = vmatprep.subr.mxu0 0.0
        %2303 = vmatpush1.msra.mxu0 0.0
        %2304 = vmatprep.subr.mxu0 0.0
        %2305 = vmatpush1.msra.mxu0 0.0
        %2306 = vmatprep.subr.mxu0 0.0
        %2307 = vmatpush1.msra.mxu0 0.0
        %2308 = vmatprep.subr.mxu0 0.0
        %2309 = vmatpush1.msra.mxu0 0.0
        %2310 = vmatprep.subr.mxu0 0.0
        %2311 = vmatpush1.msra.mxu0 0.0
        %2312 = vmatprep.subr.mxu0 0.0
        %2313 = vmatpush1.msra.mxu0 0.0
        %2314 = vmatprep.subr.mxu0 0.0
        %2315 = vmatpush1.msra.mxu0 0.0
        %2316 = vmatprep.subr.mxu0 0.0
        %2317 = vmatpush1.msra.mxu0 0.0
        %2318 = vmatprep.subr.mxu0 0.0
        %2319 = vmatpush1.msra.mxu0 0.0
        %2320 = vmatprep.subr.mxu0 0.0
        %2321 = vmatpush1.msra.mxu0 0.0
        %2322 = vmatprep.subr.mxu0 0.0
        %2323 = vmatpush1.msra.mxu0 0.0
        %2324 = vmatprep.subr.mxu0 0.0
        %2325 = vmatpush1.msra.mxu0 0.0
        %2326 = vmatprep.subr.mxu0 0.0
        %2327 = vmatpush1.msra.mxu0 0.0
        %2328 = vmatprep.subr.mxu0 0.0
        %2329 = vmatpush1.msra.mxu0 0.0
        %2330 = vmatprep.subr.mxu0 0.0
        %2331 = vmatpush1.msra.mxu0 0.0
        %2332 = vmatprep.subr.mxu0 0.0
        %2333 = vmatpush1.msra.mxu0 0.0
        %2334 = vmatprep.subr.mxu0 0.0
        %2335 = vmatpush1.msra.mxu0 0.0
        %2336 = vmatprep.subr.mxu0 0.0
        %2337 = vmatpush1.msra.mxu0 0.0
        %2338 = vmatprep.subr.mxu0 0.0
        %2339 = vmatpush1.msra.mxu0 0.0
        %2340 = vmatprep.subr.mxu0 0.0
        %2341 = vmatpush1.msra.mxu0 0.0
        %2342 = vmatprep.subr.mxu0 0.0
        %2343 = vmatpush1.msra.mxu0 0.0
        %2344 = vmatprep.subr.mxu0 0.0
        %2345 = vmatpush1.msra.mxu0 0.0
        %2346 = vmatprep.subr.mxu0 0.0
        %2347 = vmatpush1.msra.mxu0 0.0
        %2348 = vmatprep.subr.mxu0 0.0
        %2349 = vmatpush1.msra.mxu0 0.0
        %2350 = vmatprep.subr.mxu0 0.0
        %2351 = vmatpush1.msra.mxu0 0.0
        %2352 = vmatprep.subr.mxu0 0.0
        %2353 = vmatpush1.msra.mxu0 0.0
        %2354 = vmatprep.subr.mxu0 0.0
        %2355 = vmatpush1.msra.mxu0 0.0
        %2356 = vmatprep.mubr.f32.mxu0 0.0
        %2357 = vmatmul.mubr.f32.gmra.mrb[0].mxu0 %v2290
        %v2358 = vpop.f32.mrb[0].mxu0
        %v2359 = vadd.f32 %v2288, %v2358
        %v2360 = vpop.f32.mrb[0].mxu0
        %2361 = vdwg.mxu0
        %v2362 = vmul.f32 %v2359, 0.5
        %v2363 = vmul.f32 %v2359, 0.70710677
        %vm2364 = vcmp.ge.f32.partialorder %v2363, 0.0
        %v2365 = vsel %vm2364, 1.0, -1.0
        %v2366 = vand.u32 2147483647, %v2363
        %v2367 = vmul.f32 %v2366, 0.3275911
        %v2368 = vadd.f32 %v2367, 1.0
        %v2369 = vrcp.pop %v2368
        %v2370 = vmul.f32 1.0, %v2369
        %v2371 = vmul.f32 %v2370, 1.0614054
        %v2372 = vadd.f32 %v2371, -1.4531521
        %v2373 = vmul.f32 %v2372, %v2370
        %v2374 = vadd.f32 %v2373, 1.4214138
        %v2375 = vmul.f32 %v2374, %v2370
        %v2376 = vadd.f32 %v2375, -0.28449672
        %v2377 = vmul.f32 %v2376, %v2370
        %v2378 = vadd.f32 %v2377, 0.2548296
        %v2379 = vmul.f32 %v2378, %v2370
        %v2380 = vsub.f32 0.0, %v2366
        %v2381 = vmul.f32 %v2380, %v2366
        %v2382 = vmul.f32 %v2381, 1.442695
        %v2383 = vpow.pop %v2382
        %v2384 = vmul.f32 %v2379, %v2383
        %v2385 = vsub.f32 1.0, %v2384
        %v2386 = vmul.f32 %v2365, %v2385
        %v2387 = vadd.f32 %v2386, 1.0
        %v2388 = vmul.f32 %v2362, %v2387
        %v2389 = vlaneseq
        %v2390 = vshrl.u32 %v2389, 7
        %v2391 = vsub.s32 0, %v2390
        %v2392 = vrot.slane %v1760, %v2391
        %2393 = vmatprep.subr.mxu0 0.0
        %2394 = vmatpush1.msra.mxu0 %v1739
        %2395 = vmatprep.subr.mxu0 0.0
        %2396 = vmatpush1.msra.mxu0 %v1740
        %2397 = vmatprep.subr.mxu0 0.0
        %2398 = vmatpush1.msra.mxu0 %v1741
        %2399 = vmatprep.subr.mxu0 0.0
        %2400 = vmatpush1.msra.mxu0 %v1742
        %2401 = vmatprep.subr.mxu0 0.0
        %2402 = vmatpush1.msra.mxu0 %v1743
        %2403 = vmatprep.subr.mxu0 0.0
        %2404 = vmatpush1.msra.mxu0 %v1744
        %2405 = vmatprep.subr.mxu0 0.0
        %2406 = vmatpush1.msra.mxu0 %v1745
        %2407 = vmatprep.subr.mxu0 0.0
        %2408 = vmatpush1.msra.mxu0 %v1746
        %2409 = vmatprep.subr.mxu0 0.0
        %2410 = vmatpush1.msra.mxu0 %v1747
        %2411 = vmatprep.subr.mxu0 0.0
        %2412 = vmatpush1.msra.mxu0 %v1748
        %2413 = vmatprep.subr.mxu0 0.0
        %2414 = vmatpush1.msra.mxu0 %v1749
        %2415 = vmatprep.subr.mxu0 0.0
        %2416 = vmatpush1.msra.mxu0 %v1750
        %2417 = vmatprep.subr.mxu0 0.0
        %2418 = vmatpush1.msra.mxu0 %v1751
        %2419 = vmatprep.subr.mxu0 0.0
        %2420 = vmatpush1.msra.mxu0 %v1752
        %2421 = vmatprep.subr.mxu0 0.0
        %2422 = vmatpush1.msra.mxu0 %v1753
        %2423 = vmatprep.subr.mxu0 0.0
        %2424 = vmatpush1.msra.mxu0 %v1754
        %2425 = vmatprep.subr.mxu0 0.0
        %2426 = vmatpush1.msra.mxu0 0.0
        %2427 = vmatprep.subr.mxu0 0.0
        %2428 = vmatpush1.msra.mxu0 0.0
        %2429 = vmatprep.subr.mxu0 0.0
        %2430 = vmatpush1.msra.mxu0 0.0
        %2431 = vmatprep.subr.mxu0 0.0
        %2432 = vmatpush1.msra.mxu0 0.0
        %2433 = vmatprep.subr.mxu0 0.0
        %2434 = vmatpush1.msra.mxu0 0.0
        %2435 = vmatprep.subr.mxu0 0.0
        %2436 = vmatpush1.msra.mxu0 0.0
        %2437 = vmatprep.subr.mxu0 0.0
        %2438 = vmatpush1.msra.mxu0 0.0
        %2439 = vmatprep.subr.mxu0 0.0
        %2440 = vmatpush1.msra.mxu0 0.0
        %2441 = vmatprep.subr.mxu0 0.0
        %2442 = vmatpush1.msra.mxu0 0.0
        %2443 = vmatprep.subr.mxu0 0.0
        %2444 = vmatpush1.msra.mxu0 0.0
        %2445 = vmatprep.subr.mxu0 0.0
        %2446 = vmatpush1.msra.mxu0 0.0
        %2447 = vmatprep.subr.mxu0 0.0
        %2448 = vmatpush1.msra.mxu0 0.0
        %2449 = vmatprep.subr.mxu0 0.0
        %2450 = vmatpush1.msra.mxu0 0.0
        %2451 = vmatprep.subr.mxu0 0.0
        %2452 = vmatpush1.msra.mxu0 0.0
        %2453 = vmatprep.subr.mxu0 0.0
        %2454 = vmatpush1.msra.mxu0 0.0
        %2455 = vmatprep.subr.mxu0 0.0
        %2456 = vmatpush1.msra.mxu0 0.0
        %2457 = vmatprep.mubr.f32.mxu0 0.0
        %2458 = vmatmul.mubr.f32.gmra.mrb[0].mxu0 %v2388
        %v2459 = vpop.f32.mrb[0].mxu0
        %v2460 = vadd.f32 %v2392, %v2459
        %v2461 = vpop.f32.mrb[0].mxu0
        %2462 = vdwg.mxu0
        %v2463 = vadd.f32 %v2460, %v2284
        %v2464 = vsel %vm488, %v2463, 0.0
        %2465 = vadd.xlane.f32.xlu0 %v2464
        %v2466 = vpop.xlane.xlu0 %2465
        %v2467 = vmul.f32 %v2466, %v1703
        %v2468 = vsub.f32 %v2463, %v2467
        %v2469 = vmul.f32 %v2468, %v2468
        %v2470 = vsel %vm488, %v2469, 0.0
        %2471 = vadd.xlane.f32.xlu0 %v2470
        %v2472 = vpop.xlane.xlu0 %2471
        %v2473 = vmul.f32 %v2472, %v1703
        %v2474 = vadd.f32 %v2473, 1e-12
        %v2475 = vrsqrt.pop %v2474
        %v2476 = vmul.f32 %v2468, %v2475
        %v2477 = vlaneseq
        %v2478 = vshrl.u32 %v2477, 7
        %v2479 = vsub.s32 0, %v2478
        %v2480 = vrot.slane %v1761, %v2479
        %v2481 = vmul.f32 %v2476, %v2480
        %v2482 = vlaneseq
        %v2483 = vshrl.u32 %v2482, 7
        %v2484 = vsub.s32 0, %v2483
        %v2485 = vrot.slane %v1762, %v2484
        %v2486 = vadd.f32 %v2481, %v2485
        %v2487 = vlaneseq
        %v2488 = vshrl.u32 %v2487, 7
        %v2489 = vsub.s32 0, %v2488
        %v2490 = vrot.slane %v393, %v2489
        %v2492 = vsel %vm488, %v2486, 0
        %2494 = vmatprep.subr.mxu0 0.0
        %2495 = vmatpush1.msra.mxu0 %v370
        %2496 = vmatprep.subr.mxu0 0.0
        %2497 = vmatpush1.msra.mxu0 %v371
        %2498 = vmatprep.subr.mxu0 0.0
        %2499 = vmatpush1.msra.mxu0 %v372
        %2500 = vmatprep.subr.mxu0 0.0
        %2501 = vmatpush1.msra.mxu0 %v373
        %2502 = vmatprep.subr.mxu0 0.0
        %2503 = vmatpush1.msra.mxu0 0.0
        %2504 = vmatprep.subr.mxu0 0.0
        %2505 = vmatpush1.msra.mxu0 0.0
        %2506 = vmatprep.subr.mxu0 0.0
        %2507 = vmatpush1.msra.mxu0 0.0
        %2508 = vmatprep.subr.mxu0 0.0
        %2509 = vmatpush1.msra.mxu0 0.0
        %2510 = vmatprep.subr.mxu0 0.0
        %2511 = vmatpush1.msra.mxu0 0.0
        %2512 = vmatprep.subr.mxu0 0.0
        %2513 = vmatpush1.msra.mxu0 0.0
        %2514 = vmatprep.subr.mxu0 0.0
        %2515 = vmatpush1.msra.mxu0 0.0
        %2516 = vmatprep.subr.mxu0 0.0
        %2517 = vmatpush1.msra.mxu0 0.0
        %2518 = vmatprep.subr.mxu0 0.0
        %2519 = vmatpush1.msra.mxu0 0.0
        %2520 = vmatprep.subr.mxu0 0.0
        %2521 = vmatpush1.msra.mxu0 0.0
        %2522 = vmatprep.subr.mxu0 0.0
        %2523 = vmatpush1.msra.mxu0 0.0
        %2524 = vmatprep.subr.mxu0 0.0
        %2525 = vmatpush1.msra.mxu0 0.0
        %2526 = vmatprep.subr.mxu0 0.0
        %2527 = vmatpush1.msra.mxu0 0.0
        %2528 = vmatprep.subr.mxu0 0.0
        %2529 = vmatpush1.msra.mxu0 0.0
        %2530 = vmatprep.subr.mxu0 0.0
        %2531 = vmatpush1.msra.mxu0 0.0
        %2532 = vmatprep.subr.mxu0 0.0
        %2533 = vmatpush1.msra.mxu0 0.0
        %2534 = vmatprep.subr.mxu0 0.0
        %2535 = vmatpush1.msra.mxu0 0.0
        %2536 = vmatprep.subr.mxu0 0.0
        %2537 = vmatpush1.msra.mxu0 0.0
        %2538 = vmatprep.subr.mxu0 0.0
        %2539 = vmatpush1.msra.mxu0 0.0
        %2540 = vmatprep.subr.mxu0 0.0
        %2541 = vmatpush1.msra.mxu0 0.0
        %2542 = vmatprep.subr.mxu0 0.0
        %2543 = vmatpush1.msra.mxu0 0.0
        %2544 = vmatprep.subr.mxu0 0.0
        %2545 = vmatpush1.msra.mxu0 0.0
        %2546 = vmatprep.subr.mxu0 0.0
        %2547 = vmatpush1.msra.mxu0 0.0
        %2548 = vmatprep.subr.mxu0 0.0
        %2549 = vmatpush1.msra.mxu0 0.0
        %2550 = vmatprep.subr.mxu0 0.0
        %2551 = vmatpush1.msra.mxu0 0.0
        %2552 = vmatprep.subr.mxu0 0.0
        %2553 = vmatpush1.msra.mxu0 0.0
        %2554 = vmatprep.subr.mxu0 0.0
        %2555 = vmatpush1.msra.mxu0 0.0
        %2556 = vmatprep.subr.mxu0 0.0
        %2557 = vmatpush1.msra.mxu0 0.0
        %2558 = vmatprep.mubr.f32.mxu0 0.0
        %2559 = vmatmul.mubr.f32.gmra.mrb[0].mxu0 %v2492
        %v2560 = vpop.f32.mrb[0].mxu0
        %v2561 = vadd.f32 %v2490, %v2560
        %v2562 = vpop.f32.mrb[0].mxu0
        %2563 = vdwg.mxu0
        %v2564 = vmul.f32 %v2561, 0.5
        %v2565 = vmul.f32 %v2561, 0.70710677
        %vm2566 = vcmp.ge.f32.partialorder %v2565, 0.0
        %v2567 = vsel %vm2566, 1.0, -1.0
        %v2568 = vand.u32 2147483647, %v2565
        %v2569 = vmul.f32 %v2568, 0.3275911
        %v2570 = vadd.f32 %v2569, 1.0
        %v2571 = vrcp.pop %v2570
        %v2572 = vmul.f32 1.0, %v2571
        %v2573 = vmul.f32 %v2572, 1.0614054
        %v2574 = vadd.f32 %v2573, -1.4531521
        %v2575 = vmul.f32 %v2574, %v2572
        %v2576 = vadd.f32 %v2575, 1.4214138
        %v2577 = vmul.f32 %v2576, %v2572
        %v2578 = vadd.f32 %v2577, -0.28449672
        %v2579 = vmul.f32 %v2578, %v2572
        %v2580 = vadd.f32 %v2579, 0.2548296
        %v2581 = vmul.f32 %v2580, %v2572
        %v2582 = vsub.f32 0.0, %v2568
        %v2583 = vmul.f32 %v2582, %v2568
        %v2584 = vmul.f32 %v2583, 1.442695
        %v2585 = vpow.pop %v2584
        %v2586 = vmul.f32 %v2581, %v2585
        %v2587 = vsub.f32 1.0, %v2586
        %v2588 = vmul.f32 %v2567, %v2587
        %v2589 = vadd.f32 %v2588, 1.0
        %v2590 = vmul.f32 %v2564, %v2589
        %v2591 = vld [vmem:[%s363 + $0x1] sm:$0x1]
        %v2592 = vsub.f32 1.0, %v2591
        %v2593 = vmul.f32 %v2592, -10000.0
        %s2594 = scalar_lea.vmem %s5, 896
        %v2595 = vld [vmem:[%s2594] sm:$0xff]
        %v2596 = vld [vmem:[%s2594 + $0x8] sm:$0xff]
        %v2597 = vld [vmem:[%s2594 + $0x10] sm:$0xff]
        %v2598 = vld [vmem:[%s2594 + $0x18] sm:$0xff]
        %v2599 = vld [vmem:[%s2594 + $0x20] sm:$0xff]
        %v2600 = vld [vmem:[%s2594 + $0x28] sm:$0xff]
        %v2601 = vld [vmem:[%s2594 + $0x30] sm:$0xff]
        %v2602 = vld [vmem:[%s2594 + $0x38] sm:$0xff]
        %v2603 = vld [vmem:[%s2594 + $0x40] sm:$0xff]
        %v2604 = vld [vmem:[%s2594 + $0x48] sm:$0xff]
        %v2605 = vld [vmem:[%s2594 + $0x50] sm:$0xff]
        %v2606 = vld [vmem:[%s2594 + $0x58] sm:$0xff]
        %v2607 = vld [vmem:[%s2594 + $0x60] sm:$0xff]
        %v2608 = vld [vmem:[%s2594 + $0x68] sm:$0xff]
        %v2609 = vld [vmem:[%s2594 + $0x70] sm:$0xff]
        %v2610 = vld [vmem:[%s2594 + $0x78] sm:$0xff]
        %v2611 = vld [vmem:[%s2594 + $0x80] sm:$0xff]
        %v2612 = vld [vmem:[%s2594 + $0x90] sm:$0xff]
        %v2613 = vld [vmem:[%s2594 + $0xa0] sm:$0xff]
        %v2614 = vld [vmem:[%s2594 + $0xb0] sm:$0xff]
        %v2615 = vld [vmem:[%s2594 + $0xc0] sm:$0xff]
        %v2616 = vld [vmem:[%s2594 + $0xd0] sm:$0xff]
        %v2617 = vld [vmem:[%s2594 + $0xe0] sm:$0xff]
        %v2618 = vld [vmem:[%s2594 + $0xf0] sm:$0xff]
        %v2619 = vld [vmem:[%s2594 + $0x100] sm:$0xff]
        %v2620 = vld [vmem:[%s2594 + $0x108] sm:$0xff]
        %v2621 = vld [vmem:[%s2594 + $0x110] sm:$0xff]
        %v2622 = vld [vmem:[%s2594 + $0x118] sm:$0xff]
        %v2623 = vld [vmem:[%s2594 + $0x120] sm:$0xff]
        %v2624 = vld [vmem:[%s2594 + $0x128] sm:$0xff]
        %v2625 = vld [vmem:[%s2594 + $0x130] sm:$0xff]
        %v2626 = vld [vmem:[%s2594 + $0x138] sm:$0xff]
        %v2627 = vld [vmem:[%s2594 + $0x140] sm:$0xff]
        %v2628 = vld [vmem:[%s2594 + $0x148] sm:$0xff]
        %v2629 = vld [vmem:[%s2594 + $0x150] sm:$0xff]
        %v2630 = vld [vmem:[%s2594 + $0x158] sm:$0xff]
        %v2631 = vld [vmem:[%s2594 + $0x160] sm:$0xff]
        %v2632 = vld [vmem:[%s2594 + $0x168] sm:$0xff]
        %v2633 = vld [vmem:[%s2594 + $0x170] sm:$0xff]
        %v2634 = vld [vmem:[%s2594 + $0x178] sm:$0xff]
        %v2635 = vld [vmem:[%s2594 + $0x180] sm:$0xff]
        %v2636 = vld [vmem:[%s2594 + $0x190] sm:$0xff]
        %v2637 = vld [vmem:[%s2594 + $0x1a0] sm:$0xff]
        %v2638 = vld [vmem:[%s2594 + $0x1b0] sm:$0xff]
        %v2639 = vld [vmem:[%s2594 + $0x1c0] sm:$0xff]
        %v2640 = vld [vmem:[%s2594 + $0x1d0] sm:$0xff]
        %v2641 = vld [vmem:[%s2594 + $0x1e0] sm:$0xff]
        %v2642 = vld [vmem:[%s2594 + $0x1f0] sm:$0xff]
        %v2643 = vld [vmem:[%s2594 + $0x200] sm:$0xff]
        %v2644 = vld [vmem:[%s2594 + $0x210] sm:$0xff]
        %v2645 = vld [vmem:[%s2594 + $0x220] sm:$0xff]
        %v2646 = vld [vmem:[%s2594 + $0x230] sm:$0xff]
        %v2647 = vld [vmem:[%s2594 + $0x240] sm:$0xff]
        %v2648 = vld [vmem:[%s2594 + $0x250] sm:$0xff]
        %v2649 = vld [vmem:[%s2594 + $0x260] sm:$0xff]
        %v2650 = vld [vmem:[%s2594 + $0x270] sm:$0xff]
        %v2651 = vld [vmem:[%s2594 + $0x280] sm:$0xff]
        %v2652 = vld [vmem:[%s2594 + $0x290] sm:$0xff]
        %v2653 = vld [vmem:[%s2594 + $0x2a0] sm:$0xff]
        %v2654 = vld [vmem:[%s2594 + $0x2b0] sm:$0xff]
        %v2655 = vld [vmem:[%s2594 + $0x2c0] sm:$0xff]
        %v2656 = vld [vmem:[%s2594 + $0x2d0] sm:$0xff]
        %v2657 = vld [vmem:[%s2594 + $0x2e0] sm:$0xff]
        %v2658 = vld [vmem:[%s2594 + $0x2f0] sm:$0xff]
        %v2659 = vld [vmem:[%s2594 + $0x300] sm:$0xff]
        %v2660 = vld [vmem:[%s2594 + $0x310] sm:$0xff]
        %v2661 = vld [vmem:[%s2594 + $0x320] sm:$0xff]
        %v2662 = vld [vmem:[%s2594 + $0x330] sm:$0xff]
        %v2663 = vld [vmem:[%s2594 + $0x340] sm:$0xff]
        %v2664 = vld [vmem:[%s2594 + $0x350] sm:$0xff]
        %v2665 = vld [vmem:[%s2594 + $0x360] sm:$0xff]
        %v2666 = vld [vmem:[%s2594 + $0x370] sm:$0xff]
        %s2667 = scalar_lea.vmem %s6, 16
        %v2668 = vld [vmem:[%s2667] ss:$8 sm:$0x3]
        %v2669 = vld [vmem:[%s2667 + $0x1] ss:$0 sm:$0xff]
        %v2670 = vld [vmem:[%s2667 + $0x2] ss:$0 sm:$0xff]
        %v2671 = vld [vmem:[%s2667 + $0x3] ss:$0 sm:$0xff]
        %s2672 = scalar_lea.vmem %s2667, 4
        %v2673 = vld [vmem:[%s2672] ss:$8 sm:$0x3]
        %v2674 = vld [vmem:[%s2667 + $0x5] ss:$0 sm:$0xff]
        %v2675 = vld [vmem:[%s2667 + $0x6] ss:$0 sm:$0xff]
        %v2676 = vld [vmem:[%s2667 + $0x7] ss:$0 sm:$0xff]
        %v2678 = vlaneseq
        %v2679 = vshrl.u32 %v2678, 7
        %v2680 = vsub.s32 0, %v2679
        %v2681 = vrot.slane %v2668, %v2680
        %v2682 = vlaneseq
        %v2683 = vshrl.u32 %v2682, 7
        %v2684 = vsub.s32 1, %v2683
        %v2685 = vrot.slane %v2668, %v2684
        %v2689 = vsel %vm846, %v2590, 0
        %v2692 = vsel %vm846, %v1696, 0
        %v2695 = vsel %vm846, %v1697, 0
        %v2698 = vsel %vm846, %v1698, 0
        %2700 = vmatprep.subr.mxu0 %v2596
        %2701 = vmatpush1.msra.mxu0 %v2595
        %2702 = vmatprep.subr.mxu0 %v2598
        %2703 = vmatpush1.msra.mxu0 %v2597
        %2704 = vmatprep.subr.mxu0 %v2600
        %2705 = vmatpush1.msra.mxu0 %v2599
        %2706 = vmatprep.subr.mxu0 %v2602
        %2707 = vmatpush1.msra.mxu0 %v2601
        %2708 = vmatprep.subr.mxu0 %v2604
        %2709 = vmatpush1.msra.mxu0 %v2603
        %2710 = vmatprep.subr.mxu0 %v2606
        %2711 = vmatpush1.msra.mxu0 %v2605
        %2712 = vmatprep.subr.mxu0 %v2608
        %2713 = vmatpush1.msra.mxu0 %v2607
        %2714 = vmatprep.subr.mxu0 %v2610
        %2715 = vmatpush1.msra.mxu0 %v2609
        %2716 = vmatprep.subr.mxu0 0.0
        %2717 = vmatpush1.msra.mxu0 0.0
        %2718 = vmatprep.subr.mxu0 0.0
        %2719 = vmatpush1.msra.mxu0 0.0
        %2720 = vmatprep.subr.mxu0 0.0
        %2721 = vmatpush1.msra.mxu0 0.0
        %2722 = vmatprep.subr.mxu0 0.0
        %2723 = vmatpush1.msra.mxu0 0.0
        %2724 = vmatprep.subr.mxu0 0.0
        %2725 = vmatpush1.msra.mxu0 0.0
        %2726 = vmatprep.subr.mxu0 0.0
        %2727 = vmatpush1.msra.mxu0 0.0
        %2728 = vmatprep.subr.mxu0 0.0
        %2729 = vmatpush1.msra.mxu0 0.0
        %2730 = vmatprep.subr.mxu0 0.0
        %2731 = vmatpush1.msra.mxu0 0.0
        %2732 = vmatprep.subr.mxu0 0.0
        %2733 = vmatpush1.msra.mxu0 0.0
        %2734 = vmatprep.subr.mxu0 0.0
        %2735 = vmatpush1.msra.mxu0 0.0
        %2736 = vmatprep.subr.mxu0 0.0
        %2737 = vmatpush1.msra.mxu0 0.0
        %2738 = vmatprep.subr.mxu0 0.0
        %2739 = vmatpush1.msra.mxu0 0.0
        %2740 = vmatprep.subr.mxu0 0.0
        %2741 = vmatpush1.msra.mxu0 0.0
        %2742 = vmatprep.subr.mxu0 0.0
        %2743 = vmatpush1.msra.mxu0 0.0
        %2744 = vmatprep.subr.mxu0 0.0
        %2745 = vmatpush1.msra.mxu0 0.0
        %2746 = vmatprep.subr.mxu0 0.0
        %2747 = vmatpush1.msra.mxu0 0.0
        %2748 = vmatprep.subr.mxu0 0.0
        %2749 = vmatpush1.msra.mxu0 0.0
        %2750 = vmatprep.subr.mxu0 0.0
        %2751 = vmatpush1.msra.mxu0 0.0
        %2752 = vmatprep.subr.mxu0 0.0
        %2753 = vmatpush1.msra.mxu0 0.0
        %2754 = vmatprep.subr.mxu0 0.0
        %2755 = vmatpush1.msra.mxu0 0.0
        %2756 = vmatprep.subr.mxu0 0.0
        %2757 = vmatpush1.msra.mxu0 0.0
        %2758 = vmatprep.subr.mxu0 0.0
        %2759 = vmatpush1.msra.mxu0 0.0
        %2760 = vmatprep.subr.mxu0 0.0
        %2761 = vmatpush1.msra.mxu0 0.0
        %2762 = vmatprep.subr.mxu0 0.0
        %2763 = vmatpush1.msra.mxu0 0.0
        %2764 = vmatprep.mubr.f32.mxu0 0.0
        %2765 = vmatmul.mubr.f32.gmra.mrb[0].mxu0 %v2689
        %v2766 = vpop.f32.mrb[0].mxu0
        %v2767 = vadd.f32 %v2681, %v2766
        %v2768 = vpop.f32.mrb[0].mxu0
        %v2769 = vadd.f32 %v2685, %v2768
        %2770 = vmatprep.mubr.f32.mxu0 0.0
        %2771 = vmatmul.mubr.f32.gmra.mrb[0].mxu0 %v2692
        %v2772 = vpop.f32.mrb[0].mxu0
        %v2773 = vadd.f32 %v2681, %v2772
        %v2774 = vpop.f32.mrb[0].mxu0
        %v2775 = vadd.f32 %v2685, %v2774
        %2776 = vmatprep.mubr.f32.mxu0 0.0
        %2777 = vmatmul.mubr.f32.gmra.mrb[0].mxu0 %v2695
        %v2778 = vpop.f32.mrb[0].mxu0
        %v2779 = vadd.f32 %v2681, %v2778
        %v2780 = vpop.f32.mrb[0].mxu0
        %v2781 = vadd.f32 %v2685, %v2780
        %2782 = vmatprep.mubr.f32.mxu0 0.0
        %2783 = vmatmul.mubr.f32.gmra.mrb[0].mxu0 %v2698
        %v2784 = vpop.f32.mrb[0].mxu0
        %v2785 = vadd.f32 %v2681, %v2784
        %v2786 = vpop.f32.mrb[0].mxu0
        %v2787 = vadd.f32 %v2685, %v2786
        %2788 = vdwg.mxu0
        %2793 = vrot.lane.b32.xlu0 %v2767, 64
        %v2794 = vpop.permute.xlu0 %2793
        %2795 = vrot.lane.b32.xlu0 %v2773, 64
        %v2796 = vpop.permute.xlu0 %2795
        %2797 = vrot.lane.b32.xlu0 %v2779, 64
        %v2798 = vpop.permute.xlu0 %2797
        %2799 = vrot.lane.b32.xlu0 %v2785, 64
        %v2800 = vpop.permute.xlu0 %2799
        %v2801 = vsel %vm846, %v2767, 0
        %v2803 = vsel %vm846, %v2773, 0
        %v2805 = vsel %vm846, %v2779, 0
        %v2807 = vsel %vm846, %v2785, 0
        %v2809 = vsel %vm846, %v2794, 0
        %v2811 = vsel %vm846, %v2796, 0
        %v2813 = vsel %vm846, %v2798, 0
        %v2815 = vsel %vm846, %v2800, 0
        %2817 = vmatprep.subr.mxu0 0.0
        %2818 = vmatpush1.xpose.msra.mxu0 %v2809
        %2819 = vmatprep.subr.mxu0 0.0
        %2820 = vmatpush1.xpose.msra.mxu0 %v2811
        %2821 = vmatprep.subr.mxu0 0.0
        %2822 = vmatpush1.xpose.msra.mxu0 %v2813
        %2823 = vmatprep.subr.mxu0 0.0
        %2824 = vmatpush1.xpose.msra.mxu0 %v2815
        %2825 = vmatprep.subr.mxu0 0.0
        %2826 = vmatpush1.xpose.msra.mxu0 0.0
        %2827 = vmatprep.subr.mxu0 0.0
        %2828 = vmatpush1.xpose.msra.mxu0 0.0
        %2829 = vmatprep.subr.mxu0 0.0
        %2830 = vmatpush1.xpose.msra.mxu0 0.0
        %2831 = vmatprep.subr.mxu0 0.0
        %2832 = vmatpush1.xpose.msra.mxu0 0.0
        %2833 = vmatprep.subr.mxu0 0.0
        %2834 = vmatpush1.xpose.msra.mxu0 0.0
        %2835 = vmatprep.subr.mxu0 0.0
        %2836 = vmatpush1.xpose.msra.mxu0 0.0
        %2837 = vmatprep.subr.mxu0 0.0
        %2838 = vmatpush1.xpose.msra.mxu0 0.0
        %2839 = vmatprep.subr.mxu0 0.0
        %2840 = vmatpush1.xpose.msra.mxu0 0.0
        %2841 = vmatprep.subr.mxu0 0.0
        %2842 = vmatpush1.xpose.msra.mxu0 0.0
        %2843 = vmatprep.subr.mxu0 0.0
        %2844 = vmatpush1.xpose.msra.mxu0 0.0
        %2845 = vmatprep.subr.mxu0 0.0
        %2846 = vmatpush1.xpose.msra.mxu0 0.0
        %2847 = vmatprep.subr.mxu0 0.0
        %2848 = vmatpush1.xpose.msra.mxu0 0.0
        %2849 = vmatprep.subr.mxu0 0.0
        %2850 = vmatpush1.xpose.msra.mxu0 0.0
        %2851 = vmatprep.subr.mxu0 0.0
        %2852 = vmatpush1.xpose.msra.mxu0 0.0
        %2853 = vmatprep.subr.mxu0 0.0
        %2854 = vmatpush1.xpose.msra.mxu0 0.0
        %2855 = vmatprep.subr.mxu0 0.0
        %2856 = vmatpush1.xpose.msra.mxu0 0.0
        %2857 = vmatprep.subr.mxu0 0.0
        %2858 = vmatpush1.xpose.msra.mxu0 0.0
        %2859 = vmatprep.subr.mxu0 0.0
        %2860 = vmatpush1.xpose.msra.mxu0 0.0
        %2861 = vmatprep.subr.mxu0 0.0
        %2862 = vmatpush1.xpose.msra.mxu0 0.0
        %2863 = vmatprep.subr.mxu0 0.0
        %2864 = vmatpush1.xpose.msra.mxu0 0.0
        %2865 = vmatprep.subr.mxu0 0.0
        %2866 = vmatpush1.xpose.msra.mxu0 0.0
        %2867 = vmatprep.subr.mxu0 0.0
        %2868 = vmatpush1.xpose.msra.mxu0 0.0
        %2869 = vmatprep.subr.mxu0 0.0
        %2870 = vmatpush1.xpose.msra.mxu0 0.0
        %2871 = vmatprep.subr.mxu0 0.0
        %2872 = vmatpush1.xpose.msra.mxu0 0.0
        %2873 = vmatprep.subr.mxu0 0.0
        %2874 = vmatpush1.xpose.msra.mxu0 0.0
        %2875 = vmatprep.subr.mxu0 0.0
        %2876 = vmatpush1.xpose.msra.mxu0 0.0
        %2877 = vmatprep.subr.mxu0 0.0
        %2878 = vmatpush1.xpose.msra.mxu0 0.0
        %2879 = vmatprep.subr.mxu0 0.0
        %2880 = vmatpush1.xpose.msra.mxu0 0.0
        %2881 = vmatprep.mubr.f32.mxu0 0.0
        %2882 = vmatmul.mubr.f32.gmra.mrb[0].mxu0 %v2801
        %v2883 = vpop.f32.mrb[0].mxu0
        %v2884 = vadd.f32 0.0, %v2883
        %v2885 = vpop.f32.mrb[0].mxu0
        %2886 = vmatprep.mubr.f32.mxu0 0.0
        %2887 = vmatmul.mubr.f32.gmra.mrb[0].mxu0 %v2803
        %v2888 = vpop.f32.mrb[0].mxu0
        %v2889 = vadd.f32 0.0, %v2888
        %v2890 = vpop.f32.mrb[0].mxu0
        %2891 = vmatprep.mubr.f32.mxu0 0.0
        %2892 = vmatmul.mubr.f32.gmra.mrb[0].mxu0 %v2805
        %v2893 = vpop.f32.mrb[0].mxu0
        %v2894 = vadd.f32 0.0, %v2893
        %v2895 = vpop.f32.mrb[0].mxu0
        %2896 = vmatprep.mubr.f32.mxu0 0.0
        %2897 = vmatmul.mubr.f32.gmra.mrb[0].mxu0 %v2807
        %v2898 = vpop.f32.mrb[0].mxu0
        %v2899 = vadd.f32 0.0, %v2898
        %v2900 = vpop.f32.mrb[0].mxu0
        %2901 = vdwg.mxu0
        %v2902 = vmul.f32 %v2884, 0.125
        %v2903 = vmul.f32 %v2889, 0.125
        %v2904 = vmul.f32 %v2894, 0.125
        %v2905 = vmul.f32 %v2899, 0.125
        %v2906 = vlaneseq
        %v2907 = vshrl.u32 %v2906, 7
        %v2908 = vsub.s32 0, %v2907
        %v2909 = vrot.slane %v2593, %v2908
        %v2910 = vadd.f32 %v2902, %v2909
        %v2911 = vadd.f32 %v2903, %v2909
        %v2912 = vadd.f32 %v2904, %v2909
        %v2913 = vadd.f32 %v2905, %v2909
        %v2914 = vsel %vm488, %v2910, -inf
        %2915 = vmax.xlane.f32.xlu0 %v2914
        %v2916 = vpop.xlane.xlu0 %2915
        %v2917 = vsel %vm488, %v2911, -inf
        %2918 = vmax.xlane.f32.xlu0 %v2917
        %v2919 = vpop.xlane.xlu0 %2918
        %v2920 = vsel %vm488, %v2912, -inf
        %2921 = vmax.xlane.f32.xlu0 %v2920
        %v2922 = vpop.xlane.xlu0 %2921
        %v2923 = vsel %vm488, %v2913, -inf
        %2924 = vmax.xlane.f32.xlu0 %v2923
        %v2925 = vpop.xlane.xlu0 %2924
        %v2926 = vsub.f32 %v2910, %v2916
        %v2927 = vsub.f32 %v2911, %v2919
        %v2928 = vsub.f32 %v2912, %v2922
        %v2929 = vsub.f32 %v2913, %v2925
        %v2930 = vmul.f32 %v2926, 1.442695
        %v2931 = vpow.pop %v2930
        %v2932 = vmul.f32 %v2927, 1.442695
        %v2933 = vpow.pop %v2932
        %v2934 = vmul.f32 %v2928, 1.442695
        %v2935 = vpow.pop %v2934
        %v2936 = vmul.f32 %v2929, 1.442695
        %v2937 = vpow.pop %v2936
        %v2938 = vsel %vm488, %v2931, 0.0
        %2939 = vadd.xlane.f32.xlu0 %v2938
        %v2940 = vpop.xlane.xlu0 %2939
        %v2941 = vsel %vm488, %v2933, 0.0
        %2942 = vadd.xlane.f32.xlu0 %v2941
        %v2943 = vpop.xlane.xlu0 %2942
        %v2944 = vsel %vm488, %v2935, 0.0
        %2945 = vadd.xlane.f32.xlu0 %v2944
        %v2946 = vpop.xlane.xlu0 %2945
        %v2947 = vsel %vm488, %v2937, 0.0
        %2948 = vadd.xlane.f32.xlu0 %v2947
        %v2949 = vpop.xlane.xlu0 %2948
        %v2950 = vrcp.pop %v2940
        %v2951 = vmul.f32 %v2931, %v2950
        %v2952 = vrcp.pop %v2943
        %v2953 = vmul.f32 %v2933, %v2952
        %v2954 = vrcp.pop %v2946
        %v2955 = vmul.f32 %v2935, %v2954
        %v2956 = vrcp.pop %v2949
        %v2957 = vmul.f32 %v2937, %v2956
        %v2959 = vsel %vm488, %v2951, 0
        %v2962 = vsel %vm488, %v2953, 0
        %v2965 = vsel %vm488, %v2955, 0
        %v2968 = vsel %vm488, %v2957, 0
        %2970 = vmatprep.subr.mxu0 0.0
        %2971 = vmatpush1.msra.mxu0 %v2769
        %2972 = vmatprep.subr.mxu0 0.0
        %2973 = vmatpush1.msra.mxu0 %v2775
        %2974 = vmatprep.subr.mxu0 0.0
        %2975 = vmatpush1.msra.mxu0 %v2781
        %2976 = vmatprep.subr.mxu0 0.0
        %2977 = vmatpush1.msra.mxu0 %v2787
        %2978 = vmatprep.subr.mxu0 0.0
        %2979 = vmatpush1.msra.mxu0 0.0
        %2980 = vmatprep.subr.mxu0 0.0
        %2981 = vmatpush1.msra.mxu0 0.0
        %2982 = vmatprep.subr.mxu0 0.0
        %2983 = vmatpush1.msra.mxu0 0.0
        %2984 = vmatprep.subr.mxu0 0.0
        %2985 = vmatpush1.msra.mxu0 0.0
        %2986 = vmatprep.subr.mxu0 0.0
        %2987 = vmatpush1.msra.mxu0 0.0
        %2988 = vmatprep.subr.mxu0 0.0
        %2989 = vmatpush1.msra.mxu0 0.0
        %2990 = vmatprep.subr.mxu0 0.0
        %2991 = vmatpush1.msra.mxu0 0.0
        %2992 = vmatprep.subr.mxu0 0.0
        %2993 = vmatpush1.msra.mxu0 0.0
        %2994 = vmatprep.subr.mxu0 0.0
        %2995 = vmatpush1.msra.mxu0 0.0
        %2996 = vmatprep.subr.mxu0 0.0
        %2997 = vmatpush1.msra.mxu0 0.0
        %2998 = vmatprep.subr.mxu0 0.0
        %2999 = vmatpush1.msra.mxu0 0.0
        %3000 = vmatprep.subr.mxu0 0.0
        %3001 = vmatpush1.msra.mxu0 0.0
        %3002 = vmatprep.subr.mxu0 0.0
        %3003 = vmatpush1.msra.mxu0 0.0
        %3004 = vmatprep.subr.mxu0 0.0
        %3005 = vmatpush1.msra.mxu0 0.0
        %3006 = vmatprep.subr.mxu0 0.0
        %3007 = vmatpush1.msra.mxu0 0.0
        %3008 = vmatprep.subr.mxu0 0.0
        %3009 = vmatpush1.msra.mxu0 0.0
        %3010 = vmatprep.subr.mxu0 0.0
        %3011 = vmatpush1.msra.mxu0 0.0
        %3012 = vmatprep.subr.mxu0 0.0
        %3013 = vmatpush1.msra.mxu0 0.0
        %3014 = vmatprep.subr.mxu0 0.0
        %3015 = vmatpush1.msra.mxu0 0.0
        %3016 = vmatprep.subr.mxu0 0.0
        %3017 = vmatpush1.msra.mxu0 0.0
        %3018 = vmatprep.subr.mxu0 0.0
        %3019 = vmatpush1.msra.mxu0 0.0
        %3020 = vmatprep.subr.mxu0 0.0
        %3021 = vmatpush1.msra.mxu0 0.0
        %3022 = vmatprep.subr.mxu0 0.0
        %3023 = vmatpush1.msra.mxu0 0.0
        %3024 = vmatprep.subr.mxu0 0.0
        %3025 = vmatpush1.msra.mxu0 0.0
        %3026 = vmatprep.subr.mxu0 0.0
        %3027 = vmatpush1.msra.mxu0 0.0
        %3028 = vmatprep.subr.mxu0 0.0
        %3029 = vmatpush1.msra.mxu0 0.0
        %3030 = vmatprep.subr.mxu0 0.0
        %3031 = vmatpush1.msra.mxu0 0.0
        %3032 = vmatprep.subr.mxu0 0.0
        %3033 = vmatpush1.msra.mxu0 0.0
        %3034 = vmatprep.mubr.f32.mxu0 0.0
        %3035 = vmatmul.mubr.f32.gmra.mrb[0].mxu0 %v2959
        %v3036 = vpop.f32.mrb[0].mxu0
        %v3037 = vadd.f32 0.0, %v3036
        %v3038 = vpop.f32.mrb[0].mxu0
        %3039 = vmatprep.mubr.f32.mxu0 0.0
        %3040 = vmatmul.mubr.f32.gmra.mrb[0].mxu0 %v2962
        %v3041 = vpop.f32.mrb[0].mxu0
        %v3042 = vadd.f32 0.0, %v3041
        %v3043 = vpop.f32.mrb[0].mxu0
        %3044 = vmatprep.mubr.f32.mxu0 0.0
        %3045 = vmatmul.mubr.f32.gmra.mrb[0].mxu0 %v2965
        %v3046 = vpop.f32.mrb[0].mxu0
        %v3047 = vadd.f32 0.0, %v3046
        %v3048 = vpop.f32.mrb[0].mxu0
        %3049 = vmatprep.mubr.f32.mxu0 0.0
        %3050 = vmatmul.mubr.f32.gmra.mrb[0].mxu0 %v2968
        %v3051 = vpop.f32.mrb[0].mxu0
        %v3052 = vadd.f32 0.0, %v3051
        %v3053 = vpop.f32.mrb[0].mxu0
        %3054 = vdwg.mxu0
        %v3056 = vsel %vm846, %v3037, 0
        %v3059 = vsel %vm846, %v3042, 0
        %v3062 = vsel %vm846, %v3047, 0
        %v3065 = vsel %vm846, %v3052, 0
        %3067 = vmatprep.subr.mxu0 0.0
        %3068 = vmatpush1.msra.mxu0 %v2611
        %3069 = vmatprep.subr.mxu0 0.0
        %3070 = vmatpush1.msra.mxu0 %v2612
        %3071 = vmatprep.subr.mxu0 0.0
        %3072 = vmatpush1.msra.mxu0 %v2613
        %3073 = vmatprep.subr.mxu0 0.0
        %3074 = vmatpush1.msra.mxu0 %v2614
        %3075 = vmatprep.subr.mxu0 0.0
        %3076 = vmatpush1.msra.mxu0 %v2615
        %3077 = vmatprep.subr.mxu0 0.0
        %3078 = vmatpush1.msra.mxu0 %v2616
        %3079 = vmatprep.subr.mxu0 0.0
        %3080 = vmatpush1.msra.mxu0 %v2617
        %3081 = vmatprep.subr.mxu0 0.0
        %3082 = vmatpush1.msra.mxu0 %v2618
        %3083 = vmatprep.subr.mxu0 0.0
        %3084 = vmatpush1.msra.mxu0 0.0
        %3085 = vmatprep.subr.mxu0 0.0
        %3086 = vmatpush1.msra.mxu0 0.0
        %3087 = vmatprep.subr.mxu0 0.0
        %3088 = vmatpush1.msra.mxu0 0.0
        %3089 = vmatprep.subr.mxu0 0.0
        %3090 = vmatpush1.msra.mxu0 0.0
        %3091 = vmatprep.subr.mxu0 0.0
        %3092 = vmatpush1.msra.mxu0 0.0
        %3093 = vmatprep.subr.mxu0 0.0
        %3094 = vmatpush1.msra.mxu0 0.0
        %3095 = vmatprep.subr.mxu0 0.0
        %3096 = vmatpush1.msra.mxu0 0.0
        %3097 = vmatprep.subr.mxu0 0.0
        %3098 = vmatpush1.msra.mxu0 0.0
        %3099 = vmatprep.subr.mxu0 0.0
        %3100 = vmatpush1.msra.mxu0 0.0
        %3101 = vmatprep.subr.mxu0 0.0
        %3102 = vmatpush1.msra.mxu0 0.0
        %3103 = vmatprep.subr.mxu0 0.0
        %3104 = vmatpush1.msra.mxu0 0.0
        %3105 = vmatprep.subr.mxu0 0.0
        %3106 = vmatpush1.msra.mxu0 0.0
        %3107 = vmatprep.subr.mxu0 0.0
        %3108 = vmatpush1.msra.mxu0 0.0
        %3109 = vmatprep.subr.mxu0 0.0
        %3110 = vmatpush1.msra.mxu0 0.0
        %3111 = vmatprep.subr.mxu0 0.0
        %3112 = vmatpush1.msra.mxu0 0.0
        %3113 = vmatprep.subr.mxu0 0.0
        %3114 = vmatpush1.msra.mxu0 0.0
        %3115 = vmatprep.subr.mxu0 0.0
        %3116 = vmatpush1.msra.mxu0 0.0
        %3117 = vmatprep.subr.mxu0 0.0
        %3118 = vmatpush1.msra.mxu0 0.0
        %3119 = vmatprep.subr.mxu0 0.0
        %3120 = vmatpush1.msra.mxu0 0.0
        %3121 = vmatprep.subr.mxu0 0.0
        %3122 = vmatpush1.msra.mxu0 0.0
        %3123 = vmatprep.subr.mxu0 0.0
        %3124 = vmatpush1.msra.mxu0 0.0
        %3125 = vmatprep.subr.mxu0 0.0
        %3126 = vmatpush1.msra.mxu0 0.0
        %3127 = vmatprep.subr.mxu0 0.0
        %3128 = vmatpush1.msra.mxu0 0.0
        %3129 = vmatprep.subr.mxu0 0.0
        %3130 = vmatpush1.msra.mxu0 0.0
        %3131 = vmatprep.mubr.f32.mxu0 0.0
        %3132 = vmatmul.mubr.f32.gmra.mrb[0].mxu0 %v3056
        %v3133 = vpop.f32.mrb[0].mxu0
        %v3134 = vadd.f32 %v2669, %v3133
        %v3135 = vpop.f32.mrb[0].mxu0
        %3136 = vmatprep.mubr.f32.mxu0 0.0
        %3137 = vmatmul.mubr.f32.gmra.mrb[0].mxu0 %v3059
        %v3138 = vpop.f32.mrb[0].mxu0
        %v3139 = vadd.f32 %v2669, %v3138
        %v3140 = vpop.f32.mrb[0].mxu0
        %3141 = vmatprep.mubr.f32.mxu0 0.0
        %3142 = vmatmul.mubr.f32.gmra.mrb[0].mxu0 %v3062
        %v3143 = vpop.f32.mrb[0].mxu0
        %v3144 = vadd.f32 %v2669, %v3143
        %v3145 = vpop.f32.mrb[0].mxu0
        %3146 = vmatprep.mubr.f32.mxu0 0.0
        %3147 = vmatmul.mubr.f32.gmra.mrb[0].mxu0 %v3065
        %v3148 = vpop.f32.mrb[0].mxu0
        %v3149 = vadd.f32 %v2669, %v3148
        %v3150 = vpop.f32.mrb[0].mxu0
        %3151 = vdwg.mxu0
        %v3152 = vadd.f32 %v3134, %v2590
        %v3153 = vadd.f32 %v3139, %v1696
        %v3154 = vadd.f32 %v3144, %v1697
        %v3155 = vadd.f32 %v3149, %v1698
        %v3156 = vsel %vm846, %v3152, 0.0
        %3157 = vadd.xlane.f32.xlu0 %v3156
        %v3158 = vpop.xlane.xlu0 %3157
        %v3159 = vsel %vm846, %v3153, 0.0
        %3160 = vadd.xlane.f32.xlu0 %v3159
        %v3161 = vpop.xlane.xlu0 %3160
        %v3162 = vsel %vm846, %v3154, 0.0
        %3163 = vadd.xlane.f32.xlu0 %v3162
        %v3164 = vpop.xlane.xlu0 %3163
        %v3165 = vsel %vm846, %v3155, 0.0
        %3166 = vadd.xlane.f32.xlu0 %v3165
        %v3167 = vpop.xlane.xlu0 %3166
        %v3168 = vmul.f32 %v3158, %v1269
        %v3169 = vmul.f32 %v3161, %v1269
        %v3170 = vmul.f32 %v3164, %v1269
        %v3171 = vmul.f32 %v3167, %v1269
        %v3172 = vsub.f32 %v3152, %v3168
        %v3173 = vsub.f32 %v3153, %v3169
        %v3174 = vsub.f32 %v3154, %v3170
        %v3175 = vsub.f32 %v3155, %v3171
        %v3176 = vmul.f32 %v3172, %v3172
        %v3177 = vmul.f32 %v3173, %v3173
        %v3178 = vmul.f32 %v3174, %v3174
        %v3179 = vmul.f32 %v3175, %v3175
        %v3180 = vsel %vm846, %v3176, 0.0
        %3181 = vadd.xlane.f32.xlu0 %v3180
        %v3182 = vpop.xlane.xlu0 %3181
        %v3183 = vsel %vm846, %v3177, 0.0
        %3184 = vadd.xlane.f32.xlu0 %v3183
        %v3185 = vpop.xlane.xlu0 %3184
        %v3186 = vsel %vm846, %v3178, 0.0
        %3187 = vadd.xlane.f32.xlu0 %v3186
        %v3188 = vpop.xlane.xlu0 %3187
        %v3189 = vsel %vm846, %v3179, 0.0
        %3190 = vadd.xlane.f32.xlu0 %v3189
        %v3191 = vpop.xlane.xlu0 %3190
        %v3192 = vmul.f32 %v3182, %v1269
        %v3193 = vmul.f32 %v3185, %v1269
        %v3194 = vmul.f32 %v3188, %v1269
        %v3195 = vmul.f32 %v3191, %v1269
        %v3196 = vadd.f32 %v3192, 1e-12
        %v3197 = vadd.f32 %v3193, 1e-12
        %v3198 = vadd.f32 %v3194, 1e-12
        %v3199 = vadd.f32 %v3195, 1e-12
        %v3200 = vrsqrt.pop %v3196
        %v3201 = vrsqrt.pop %v3197
        %v3202 = vrsqrt.pop %v3198
        %v3203 = vrsqrt.pop %v3199
        %v3204 = vmul.f32 %v3172, %v3200
        %v3205 = vmul.f32 %v3173, %v3201
        %v3206 = vmul.f32 %v3174, %v3202
        %v3207 = vmul.f32 %v3175, %v3203
        %v3208 = vmul.f32 %v3204, %v2670
        %v3209 = vmul.f32 %v3205, %v2670
        %v3210 = vmul.f32 %v3206, %v2670
        %v3211 = vmul.f32 %v3207, %v2670
        %v3212 = vadd.f32 %v3208, %v2671
        %v3213 = vadd.f32 %v3209, %v2671
        %v3214 = vadd.f32 %v3210, %v2671
        %v3215 = vadd.f32 %v3211, %v2671
        %v3217 = vlaneseq
        %v3218 = vshrl.u32 %v3217, 7
        %v3219 = vsub.s32 0, %v3218
        %v3220 = vrot.slane %v2673, %v3219
        %v3221 = vlaneseq
        %v3222 = vshrl.u32 %v3221, 7
        %v3223 = vsub.s32 1, %v3222
        %v3224 = vrot.slane %v2673, %v3223
        %v3228 = vsel %vm846, %v3212, 0
        %v3231 = vsel %vm846, %v3213, 0
        %v3234 = vsel %vm846, %v3214, 0
        %v3237 = vsel %vm846, %v3215, 0
        %3239 = vmatprep.subr.mxu0 %v2620
        %3240 = vmatpush1.msra.mxu0 %v2619
        %3241 = vmatprep.subr.mxu0 %v2622
        %3242 = vmatpush1.msra.mxu0 %v2621
        %3243 = vmatprep.subr.mxu0 %v2624
        %3244 = vmatpush1.msra.mxu0 %v2623
        %3245 = vmatprep.subr.mxu0 %v2626
        %3246 = vmatpush1.msra.mxu0 %v2625
        %3247 = vmatprep.subr.mxu0 %v2628
        %3248 = vmatpush1.msra.mxu0 %v2627
        %3249 = vmatprep.subr.mxu0 %v2630
        %3250 = vmatpush1.msra.mxu0 %v2629
        %3251 = vmatprep.subr.mxu0 %v2632
        %3252 = vmatpush1.msra.mxu0 %v2631
        %3253 = vmatprep.subr.mxu0 %v2634
        %3254 = vmatpush1.msra.mxu0 %v2633
        %3255 = vmatprep.subr.mxu0 0.0
        %3256 = vmatpush1.msra.mxu0 0.0
        %3257 = vmatprep.subr.mxu0 0.0
        %3258 = vmatpush1.msra.mxu0 0.0
        %3259 = vmatprep.subr.mxu0 0.0
        %3260 = vmatpush1.msra.mxu0 0.0
        %3261 = vmatprep.subr.mxu0 0.0
        %3262 = vmatpush1.msra.mxu0 0.0
        %3263 = vmatprep.subr.mxu0 0.0
        %3264 = vmatpush1.msra.mxu0 0.0
        %3265 = vmatprep.subr.mxu0 0.0
        %3266 = vmatpush1.msra.mxu0 0.0
        %3267 = vmatprep.subr.mxu0 0.0
        %3268 = vmatpush1.msra.mxu0 0.0
        %3269 = vmatprep.subr.mxu0 0.0
        %3270 = vmatpush1.msra.mxu0 0.0
        %3271 = vmatprep.subr.mxu0 0.0
        %3272 = vmatpush1.msra.mxu0 0.0
        %3273 = vmatprep.subr.mxu0 0.0
        %3274 = vmatpush1.msra.mxu0 0.0
        %3275 = vmatprep.subr.mxu0 0.0
        %3276 = vmatpush1.msra.mxu0 0.0
        %3277 = vmatprep.subr.mxu0 0.0
        %3278 = vmatpush1.msra.mxu0 0.0
        %3279 = vmatprep.subr.mxu0 0.0
        %3280 = vmatpush1.msra.mxu0 0.0
        %3281 = vmatprep.subr.mxu0 0.0
        %3282 = vmatpush1.msra.mxu0 0.0
        %3283 = vmatprep.subr.mxu0 0.0
        %3284 = vmatpush1.msra.mxu0 0.0
        %3285 = vmatprep.subr.mxu0 0.0
        %3286 = vmatpush1.msra.mxu0 0.0
        %3287 = vmatprep.subr.mxu0 0.0
        %3288 = vmatpush1.msra.mxu0 0.0
        %3289 = vmatprep.subr.mxu0 0.0
        %3290 = vmatpush1.msra.mxu0 0.0
        %3291 = vmatprep.subr.mxu0 0.0
        %3292 = vmatpush1.msra.mxu0 0.0
        %3293 = vmatprep.subr.mxu0 0.0
        %3294 = vmatpush1.msra.mxu0 0.0
        %3295 = vmatprep.subr.mxu0 0.0
        %3296 = vmatpush1.msra.mxu0 0.0
        %3297 = vmatprep.subr.mxu0 0.0
        %3298 = vmatpush1.msra.mxu0 0.0
        %3299 = vmatprep.subr.mxu0 0.0
        %3300 = vmatpush1.msra.mxu0 0.0
        %3301 = vmatprep.subr.mxu0 0.0
        %3302 = vmatpush1.msra.mxu0 0.0
        %3303 = vmatprep.mubr.f32.mxu0 0.0
        %3304 = vmatmul.mubr.f32.gmra.mrb[0].mxu0 %v3228
        %v3305 = vpop.f32.mrb[0].mxu0
        %v3306 = vadd.f32 %v3220, %v3305
        %v3307 = vpop.f32.mrb[0].mxu0
        %v3308 = vadd.f32 %v3224, %v3307
        %3309 = vmatprep.mubr.f32.mxu0 0.0
        %3310 = vmatmul.mubr.f32.gmra.mrb[0].mxu0 %v3231
        %v3311 = vpop.f32.mrb[0].mxu0
        %v3312 = vadd.f32 %v3220, %v3311
        %v3313 = vpop.f32.mrb[0].mxu0
        %v3314 = vadd.f32 %v3224, %v3313
        %3315 = vmatprep.mubr.f32.mxu0 0.0
        %3316 = vmatmul.mubr.f32.gmra.mrb[0].mxu0 %v3234
        %v3317 = vpop.f32.mrb[0].mxu0
        %v3318 = vadd.f32 %v3220, %v3317
        %v3319 = vpop.f32.mrb[0].mxu0
        %v3320 = vadd.f32 %v3224, %v3319
        %3321 = vmatprep.mubr.f32.mxu0 0.0
        %3322 = vmatmul.mubr.f32.gmra.mrb[0].mxu0 %v3237
        %v3323 = vpop.f32.mrb[0].mxu0
        %v3324 = vadd.f32 %v3220, %v3323
        %v3325 = vpop.f32.mrb[0].mxu0
        %v3326 = vadd.f32 %v3224, %v3325
        %3327 = vdwg.mxu0
        %v3328 = vmul.f32 %v3306, 0.5
        %v3329 = vmul.f32 %v3308, 0.5
        %v3330 = vmul.f32 %v3312, 0.5
        %v3331 = vmul.f32 %v3314, 0.5
        %v3332 = vmul.f32 %v3318, 0.5
        %v3333 = vmul.f32 %v3320, 0.5
        %v3334 = vmul.f32 %v3324, 0.5
        %v3335 = vmul.f32 %v3326, 0.5
        %v3336 = vmul.f32 %v3306, 0.70710677
        %v3337 = vmul.f32 %v3308, 0.70710677
        %v3338 = vmul.f32 %v3312, 0.70710677
        %v3339 = vmul.f32 %v3314, 0.70710677
        %v3340 = vmul.f32 %v3318, 0.70710677
        %v3341 = vmul.f32 %v3320, 0.70710677
        %v3342 = vmul.f32 %v3324, 0.70710677
        %v3343 = vmul.f32 %v3326, 0.70710677
        %vm3344 = vcmp.ge.f32.partialorder %v3336, 0.0
        %vm3345 = vcmp.ge.f32.partialorder %v3337, 0.0
        %vm3346 = vcmp.ge.f32.partialorder %v3338, 0.0
        %vm3347 = vcmp.ge.f32.partialorder %v3339, 0.0
        %vm3348 = vcmp.ge.f32.partialorder %v3340, 0.0
        %vm3349 = vcmp.ge.f32.partialorder %v3341, 0.0
        %vm3350 = vcmp.ge.f32.partialorder %v3342, 0.0
        %vm3351 = vcmp.ge.f32.partialorder %v3343, 0.0
        %v3352 = vsel %vm3344, 1.0, -1.0
        %v3353 = vsel %vm3345, 1.0, -1.0
        %v3354 = vsel %vm3346, 1.0, -1.0
        %v3355 = vsel %vm3347, 1.0, -1.0
        %v3356 = vsel %vm3348, 1.0, -1.0
        %v3357 = vsel %vm3349, 1.0, -1.0
        %v3358 = vsel %vm3350, 1.0, -1.0
        %v3359 = vsel %vm3351, 1.0, -1.0
        %v3360 = vand.u32 2147483647, %v3336
        %v3361 = vand.u32 2147483647, %v3337
        %v3362 = vand.u32 2147483647, %v3338
        %v3363 = vand.u32 2147483647, %v3339
        %v3364 = vand.u32 2147483647, %v3340
        %v3365 = vand.u32 2147483647, %v3341
        %v3366 = vand.u32 2147483647, %v3342
        %v3367 = vand.u32 2147483647, %v3343
        %v3368 = vmul.f32 %v3360, 0.3275911
        %v3369 = vmul.f32 %v3361, 0.3275911
        %v3370 = vmul.f32 %v3362, 0.3275911
        %v3371 = vmul.f32 %v3363, 0.3275911
        %v3372 = vmul.f32 %v3364, 0.3275911
        %v3373 = vmul.f32 %v3365, 0.3275911
        %v3374 = vmul.f32 %v3366, 0.3275911
        %v3375 = vmul.f32 %v3367, 0.3275911
        %v3376 = vadd.f32 %v3368, 1.0
        %v3377 = vadd.f32 %v3369, 1.0
        %v3378 = vadd.f32 %v3370, 1.0
        %v3379 = vadd.f32 %v3371, 1.0
        %v3380 = vadd.f32 %v3372, 1.0
        %v3381 = vadd.f32 %v3373, 1.0
        %v3382 = vadd.f32 %v3374, 1.0
        %v3383 = vadd.f32 %v3375, 1.0
        %v3384 = vrcp.pop %v3376
        %v3385 = vmul.f32 1.0, %v3384
        %v3386 = vrcp.pop %v3377
        %v3387 = vmul.f32 1.0, %v3386
        %v3388 = vrcp.pop %v3378
        %v3389 = vmul.f32 1.0, %v3388
        %v3390 = vrcp.pop %v3379
        %v3391 = vmul.f32 1.0, %v3390
        %v3392 = vrcp.pop %v3380
        %v3393 = vmul.f32 1.0, %v3392
        %v3394 = vrcp.pop %v3381
        %v3395 = vmul.f32 1.0, %v3394
        %v3396 = vrcp.pop %v3382
        %v3397 = vmul.f32 1.0, %v3396
        %v3398 = vrcp.pop %v3383
        %v3399 = vmul.f32 1.0, %v3398
        %v3400 = vmul.f32 %v3385, 1.0614054
        %v3401 = vmul.f32 %v3387, 1.0614054
        %v3402 = vmul.f32 %v3389, 1.0614054
        %v3403 = vmul.f32 %v3391, 1.0614054
        %v3404 = vmul.f32 %v3393, 1.0614054
        %v3405 = vmul.f32 %v3395, 1.0614054
        %v3406 = vmul.f32 %v3397, 1.0614054
        %v3407 = vmul.f32 %v3399, 1.0614054
        %v3408 = vadd.f32 %v3400, -1.4531521
        %v3409 = vadd.f32 %v3401, -1.4531521
        %v3410 = vadd.f32 %v3402, -1.4531521
        %v3411 = vadd.f32 %v3403, -1.4531521
        %v3412 = vadd.f32 %v3404, -1.4531521
        %v3413 = vadd.f32 %v3405, -1.4531521
        %v3414 = vadd.f32 %v3406, -1.4531521
        %v3415 = vadd.f32 %v3407, -1.4531521
        %v3416 = vmul.f32 %v3408, %v3385
        %v3417 = vmul.f32 %v3409, %v3387
        %v3418 = vmul.f32 %v3410, %v3389
        %v3419 = vmul.f32 %v3411, %v3391
        %v3420 = vmul.f32 %v3412, %v3393
        %v3421 = vmul.f32 %v3413, %v3395
        %v3422 = vmul.f32 %v3414, %v3397
        %v3423 = vmul.f32 %v3415, %v3399
        %v3424 = vadd.f32 %v3416, 1.4214138
        %v3425 = vadd.f32 %v3417, 1.4214138
        %v3426 = vadd.f32 %v3418, 1.4214138
        %v3427 = vadd.f32 %v3419, 1.4214138
        %v3428 = vadd.f32 %v3420, 1.4214138
        %v3429 = vadd.f32 %v3421, 1.4214138
        %v3430 = vadd.f32 %v3422, 1.4214138
        %v3431 = vadd.f32 %v3423, 1.4214138
        %v3432 = vmul.f32 %v3424, %v3385
        %v3433 = vmul.f32 %v3425, %v3387
        %v3434 = vmul.f32 %v3426, %v3389
        %v3435 = vmul.f32 %v3427, %v3391
        %v3436 = vmul.f32 %v3428, %v3393
        %v3437 = vmul.f32 %v3429, %v3395
        %v3438 = vmul.f32 %v3430, %v3397
        %v3439 = vmul.f32 %v3431, %v3399
        %v3440 = vadd.f32 %v3432, -0.28449672
        %v3441 = vadd.f32 %v3433, -0.28449672
        %v3442 = vadd.f32 %v3434, -0.28449672
        %v3443 = vadd.f32 %v3435, -0.28449672
        %v3444 = vadd.f32 %v3436, -0.28449672
        %v3445 = vadd.f32 %v3437, -0.28449672
        %v3446 = vadd.f32 %v3438, -0.28449672
        %v3447 = vadd.f32 %v3439, -0.28449672
        %v3448 = vmul.f32 %v3440, %v3385
        %v3449 = vmul.f32 %v3441, %v3387
        %v3450 = vmul.f32 %v3442, %v3389
        %v3451 = vmul.f32 %v3443, %v3391
        %v3452 = vmul.f32 %v3444, %v3393
        %v3453 = vmul.f32 %v3445, %v3395
        %v3454 = vmul.f32 %v3446, %v3397
        %v3455 = vmul.f32 %v3447, %v3399
        %v3456 = vadd.f32 %v3448, 0.2548296
        %v3457 = vadd.f32 %v3449, 0.2548296
        %v3458 = vadd.f32 %v3450, 0.2548296
        %v3459 = vadd.f32 %v3451, 0.2548296
        %v3460 = vadd.f32 %v3452, 0.2548296
        %v3461 = vadd.f32 %v3453, 0.2548296
        %v3462 = vadd.f32 %v3454, 0.2548296
        %v3463 = vadd.f32 %v3455, 0.2548296
        %v3464 = vmul.f32 %v3456, %v3385
        %v3465 = vmul.f32 %v3457, %v3387
        %v3466 = vmul.f32 %v3458, %v3389
        %v3467 = vmul.f32 %v3459, %v3391
        %v3468 = vmul.f32 %v3460, %v3393
        %v3469 = vmul.f32 %v3461, %v3395
        %v3470 = vmul.f32 %v3462, %v3397
        %v3471 = vmul.f32 %v3463, %v3399
        %v3472 = vsub.f32 0.0, %v3360
        %v3473 = vsub.f32 0.0, %v3361
        %v3474 = vsub.f32 0.0, %v3362
        %v3475 = vsub.f32 0.0, %v3363
        %v3476 = vsub.f32 0.0, %v3364
        %v3477 = vsub.f32 0.0, %v3365
        %v3478 = vsub.f32 0.0, %v3366
        %v3479 = vsub.f32 0.0, %v3367
        %v3480 = vmul.f32 %v3472, %v3360
        %v3481 = vmul.f32 %v3473, %v3361
        %v3482 = vmul.f32 %v3474, %v3362
        %v3483 = vmul.f32 %v3475, %v3363
        %v3484 = vmul.f32 %v3476, %v3364
        %v3485 = vmul.f32 %v3477, %v3365
        %v3486 = vmul.f32 %v3478, %v3366
        %v3487 = vmul.f32 %v3479, %v3367
        %v3488 = vmul.f32 %v3480, 1.442695
        %v3489 = vpow.pop %v3488
        %v3490 = vmul.f32 %v3481, 1.442695
        %v3491 = vpow.pop %v3490
        %v3492 = vmul.f32 %v3482, 1.442695
        %v3493 = vpow.pop %v3492
        %v3494 = vmul.f32 %v3483, 1.442695
        %v3495 = vpow.pop %v3494
        %v3496 = vmul.f32 %v3484, 1.442695
        %v3497 = vpow.pop %v3496
        %v3498 = vmul.f32 %v3485, 1.442695
        %v3499 = vpow.pop %v3498
        %v3500 = vmul.f32 %v3486, 1.442695
        %v3501 = vpow.pop %v3500
        %v3502 = vmul.f32 %v3487, 1.442695
        %v3503 = vpow.pop %v3502
        %v3504 = vmul.f32 %v3464, %v3489
        %v3505 = vmul.f32 %v3465, %v3491
        %v3506 = vmul.f32 %v3466, %v3493
        %v3507 = vmul.f32 %v3467, %v3495
        %v3508 = vmul.f32 %v3468, %v3497
        %v3509 = vmul.f32 %v3469, %v3499
        %v3510 = vmul.f32 %v3470, %v3501
        %v3511 = vmul.f32 %v3471, %v3503
        %v3512 = vsub.f32 1.0, %v3504
        %v3513 = vsub.f32 1.0, %v3505
        %v3514 = vsub.f32 1.0, %v3506
        %v3515 = vsub.f32 1.0, %v3507
        %v3516 = vsub.f32 1.0, %v3508
        %v3517 = vsub.f32 1.0, %v3509
        %v3518 = vsub.f32 1.0, %v3510
        %v3519 = vsub.f32 1.0, %v3511
        %v3520 = vmul.f32 %v3352, %v3512
        %v3521 = vmul.f32 %v3353, %v3513
        %v3522 = vmul.f32 %v3354, %v3514
        %v3523 = vmul.f32 %v3355, %v3515
        %v3524 = vmul.f32 %v3356, %v3516
        %v3525 = vmul.f32 %v3357, %v3517
        %v3526 = vmul.f32 %v3358, %v3518
        %v3527 = vmul.f32 %v3359, %v3519
        %v3528 = vadd.f32 %v3520, 1.0
        %v3529 = vadd.f32 %v3521, 1.0
        %v3530 = vadd.f32 %v3522, 1.0
        %v3531 = vadd.f32 %v3523, 1.0
        %v3532 = vadd.f32 %v3524, 1.0
        %v3533 = vadd.f32 %v3525, 1.0
        %v3534 = vadd.f32 %v3526, 1.0
        %v3535 = vadd.f32 %v3527, 1.0
        %v3536 = vmul.f32 %v3328, %v3528
        %v3537 = vmul.f32 %v3329, %v3529
        %v3538 = vmul.f32 %v3330, %v3530
        %v3539 = vmul.f32 %v3331, %v3531
        %v3540 = vmul.f32 %v3332, %v3532
        %v3541 = vmul.f32 %v3333, %v3533
        %v3542 = vmul.f32 %v3334, %v3534
        %v3543 = vmul.f32 %v3335, %v3535
        %3544 = vmatprep.subr.mxu0 0.0
        %3545 = vmatpush1.msra.mxu0 %v2635
        %3546 = vmatprep.subr.mxu0 0.0
        %3547 = vmatpush1.msra.mxu0 %v2636
        %3548 = vmatprep.subr.mxu0 0.0
        %3549 = vmatpush1.msra.mxu0 %v2637
        %3550 = vmatprep.subr.mxu0 0.0
        %3551 = vmatpush1.msra.mxu0 %v2638
        %3552 = vmatprep.subr.mxu0 0.0
        %3553 = vmatpush1.msra.mxu0 %v2639
        %3554 = vmatprep.subr.mxu0 0.0
        %3555 = vmatpush1.msra.mxu0 %v2640
        %3556 = vmatprep.subr.mxu0 0.0
        %3557 = vmatpush1.msra.mxu0 %v2641
        %3558 = vmatprep.subr.mxu0 0.0
        %3559 = vmatpush1.msra.mxu0 %v2642
        %3560 = vmatprep.subr.mxu0 0.0
        %3561 = vmatpush1.msra.mxu0 %v2643
        %3562 = vmatprep.subr.mxu0 0.0
        %3563 = vmatpush1.msra.mxu0 %v2644
        %3564 = vmatprep.subr.mxu0 0.0
        %3565 = vmatpush1.msra.mxu0 %v2645
        %3566 = vmatprep.subr.mxu0 0.0
        %3567 = vmatpush1.msra.mxu0 %v2646
        %3568 = vmatprep.subr.mxu0 0.0
        %3569 = vmatpush1.msra.mxu0 %v2647
        %3570 = vmatprep.subr.mxu0 0.0
        %3571 = vmatpush1.msra.mxu0 %v2648
        %3572 = vmatprep.subr.mxu0 0.0
        %3573 = vmatpush1.msra.mxu0 %v2649
        %3574 = vmatprep.subr.mxu0 0.0
        %3575 = vmatpush1.msra.mxu0 %v2650
        %3576 = vmatprep.subr.mxu0 0.0
        %3577 = vmatpush1.msra.mxu0 %v2651
        %3578 = vmatprep.subr.mxu0 0.0
        %3579 = vmatpush1.msra.mxu0 %v2652
        %3580 = vmatprep.subr.mxu0 0.0
        %3581 = vmatpush1.msra.mxu0 %v2653
        %3582 = vmatprep.subr.mxu0 0.0
        %3583 = vmatpush1.msra.mxu0 %v2654
        %3584 = vmatprep.subr.mxu0 0.0
        %3585 = vmatpush1.msra.mxu0 %v2655
        %3586 = vmatprep.subr.mxu0 0.0
        %3587 = vmatpush1.msra.mxu0 %v2656
        %3588 = vmatprep.subr.mxu0 0.0
        %3589 = vmatpush1.msra.mxu0 %v2657
        %3590 = vmatprep.subr.mxu0 0.0
        %3591 = vmatpush1.msra.mxu0 %v2658
        %3592 = vmatprep.subr.mxu0 0.0
        %3593 = vmatpush1.msra.mxu0 %v2659
        %3594 = vmatprep.subr.mxu0 0.0
        %3595 = vmatpush1.msra.mxu0 %v2660
        %3596 = vmatprep.subr.mxu0 0.0
        %3597 = vmatpush1.msra.mxu0 %v2661
        %3598 = vmatprep.subr.mxu0 0.0
        %3599 = vmatpush1.msra.mxu0 %v2662
        %3600 = vmatprep.subr.mxu0 0.0
        %3601 = vmatpush1.msra.mxu0 %v2663
        %3602 = vmatprep.subr.mxu0 0.0
        %3603 = vmatpush1.msra.mxu0 %v2664
        %3604 = vmatprep.subr.mxu0 0.0
        %3605 = vmatpush1.msra.mxu0 %v2665
        %3606 = vmatprep.subr.mxu0 0.0
        %3607 = vmatpush1.msra.mxu0 %v2666
        %3608 = vmatprep.mubr.f32.mxu0 %v3537
        %3609 = vmatmul.mubr.f32.gmra.mrb[0].mxu0 %v3536
        %v3610 = vpop.f32.mrb[0].mxu0
        %v3611 = vadd.f32 %v2674, %v3610
        %v3612 = vpop.f32.mrb[0].mxu0
        %3613 = vmatprep.mubr.f32.mxu0 %v3539
        %3614 = vmatmul.mubr.f32.gmra.mrb[0].mxu0 %v3538
        %v3615 = vpop.f32.mrb[0].mxu0
        %v3616 = vadd.f32 %v2674, %v3615
        %v3617 = vpop.f32.mrb[0].mxu0
        %3618 = vmatprep.mubr.f32.mxu0 %v3541
        %3619 = vmatmul.mubr.f32.gmra.mrb[0].mxu0 %v3540
        %v3620 = vpop.f32.mrb[0].mxu0
        %v3621 = vadd.f32 %v2674, %v3620
        %v3622 = vpop.f32.mrb[0].mxu0
        %3623 = vmatprep.mubr.f32.mxu0 %v3543
        %3624 = vmatmul.mubr.f32.gmra.mrb[0].mxu0 %v3542
        %v3625 = vpop.f32.mrb[0].mxu0
        %v3626 = vadd.f32 %v2674, %v3625
        %v3627 = vpop.f32.mrb[0].mxu0
        %3628 = vdwg.mxu0
        %v3629 = vadd.f32 %v3611, %v3212
        %v3630 = vadd.f32 %v3616, %v3213
        %v3631 = vadd.f32 %v3621, %v3214
        %v3632 = vadd.f32 %v3626, %v3215
        %v3633 = vsel %vm846, %v3629, 0.0
        %3634 = vadd.xlane.f32.xlu0 %v3633
        %v3635 = vpop.xlane.xlu0 %3634
        %v3636 = vsel %vm846, %v3630, 0.0
        %3637 = vadd.xlane.f32.xlu0 %v3636
        %v3638 = vpop.xlane.xlu0 %3637
        %v3639 = vsel %vm846, %v3631, 0.0
        %3640 = vadd.xlane.f32.xlu0 %v3639
        %v3641 = vpop.xlane.xlu0 %3640
        %v3642 = vsel %vm846, %v3632, 0.0
        %3643 = vadd.xlane.f32.xlu0 %v3642
        %v3644 = vpop.xlane.xlu0 %3643
        %v3645 = vmul.f32 %v3635, %v1269
        %v3646 = vmul.f32 %v3638, %v1269
        %v3647 = vmul.f32 %v3641, %v1269
        %v3648 = vmul.f32 %v3644, %v1269
        %v3649 = vsub.f32 %v3629, %v3645
        %v3650 = vsub.f32 %v3630, %v3646
        %v3651 = vsub.f32 %v3631, %v3647
        %v3652 = vsub.f32 %v3632, %v3648
        %v3653 = vmul.f32 %v3649, %v3649
        %v3654 = vmul.f32 %v3650, %v3650
        %v3655 = vmul.f32 %v3651, %v3651
        %v3656 = vmul.f32 %v3652, %v3652
        %v3657 = vsel %vm846, %v3653, 0.0
        %3658 = vadd.xlane.f32.xlu0 %v3657
        %v3659 = vpop.xlane.xlu0 %3658
        %v3660 = vsel %vm846, %v3654, 0.0
        %3661 = vadd.xlane.f32.xlu0 %v3660
        %v3662 = vpop.xlane.xlu0 %3661
        %v3663 = vsel %vm846, %v3655, 0.0
        %3664 = vadd.xlane.f32.xlu0 %v3663
        %v3665 = vpop.xlane.xlu0 %3664
        %v3666 = vsel %vm846, %v3656, 0.0
        %3667 = vadd.xlane.f32.xlu0 %v3666
        %v3668 = vpop.xlane.xlu0 %3667
        %v3669 = vmul.f32 %v3659, %v1269
        %v3670 = vmul.f32 %v3662, %v1269
        %v3671 = vmul.f32 %v3665, %v1269
        %v3672 = vmul.f32 %v3668, %v1269
        %v3673 = vadd.f32 %v3669, 1e-12
        %v3674 = vadd.f32 %v3670, 1e-12
        %v3675 = vadd.f32 %v3671, 1e-12
        %v3676 = vadd.f32 %v3672, 1e-12
        %v3677 = vrsqrt.pop %v3673
        %v3678 = vrsqrt.pop %v3674
        %v3679 = vrsqrt.pop %v3675
        %v3680 = vrsqrt.pop %v3676
        %v3681 = vmul.f32 %v3649, %v3677
        %v3682 = vmul.f32 %v3650, %v3678
        %v3683 = vmul.f32 %v3651, %v3679
        %v3684 = vmul.f32 %v3652, %v3680
        %v3685 = vmul.f32 %v3681, %v2675
        %v3686 = vmul.f32 %v3682, %v2675
        %v3687 = vmul.f32 %v3683, %v2675
        %v3688 = vmul.f32 %v3684, %v2675
        %v3689 = vadd.f32 %v3685, %v2676
        %v3690 = vadd.f32 %v3686, %v2676
        %v3691 = vadd.f32 %v3687, %v2676
        %v3692 = vadd.f32 %v3688, %v2676
        %v3693 = vlaneseq
        %v3694 = vshrl.u32 %v3693, 7
        %v3695 = vsub.s32 0, %v3694
        %v3696 = vrot.slane %v396, %v3695
        %v3698 = vsel %vm846, %v3689, 0
        %v3701 = vsel %vm846, %v3690, 0
        %v3704 = vsel %vm846, %v3691, 0
        %v3707 = vsel %vm846, %v3692, 0
        %3709 = vmatprep.subr.mxu0 0.0
        %3710 = vmatpush1.msra.mxu0 %v382
        %3711 = vmatprep.subr.mxu0 0.0
        %3712 = vmatpush1.msra.mxu0 %v383
        %3713 = vmatprep.subr.mxu0 0.0
        %3714 = vmatpush1.msra.mxu0 %v384
        %3715 = vmatprep.subr.mxu0 0.0
        %3716 = vmatpush1.msra.mxu0 %v385
        %3717 = vmatprep.subr.mxu0 0.0
        %3718 = vmatpush1.msra.mxu0 %v386
        %3719 = vmatprep.subr.mxu0 0.0
        %3720 = vmatpush1.msra.mxu0 %v387
        %3721 = vmatprep.subr.mxu0 0.0
        %3722 = vmatpush1.msra.mxu0 %v388
        %3723 = vmatprep.subr.mxu0 0.0
        %3724 = vmatpush1.msra.mxu0 %v389
        %3725 = vmatprep.subr.mxu0 0.0
        %3726 = vmatpush1.msra.mxu0 0.0
        %3727 = vmatprep.subr.mxu0 0.0
        %3728 = vmatpush1.msra.mxu0 0.0
        %3729 = vmatprep.subr.mxu0 0.0
        %3730 = vmatpush1.msra.mxu0 0.0
        %3731 = vmatprep.subr.mxu0 0.0
        %3732 = vmatpush1.msra.mxu0 0.0
        %3733 = vmatprep.subr.mxu0 0.0
        %3734 = vmatpush1.msra.mxu0 0.0
        %3735 = vmatprep.subr.mxu0 0.0
        %3736 = vmatpush1.msra.mxu0 0.0
        %3737 = vmatprep.subr.mxu0 0.0
        %3738 = vmatpush1.msra.mxu0 0.0
        %3739 = vmatprep.subr.mxu0 0.0
        %3740 = vmatpush1.msra.mxu0 0.0
        %3741 = vmatprep.subr.mxu0 0.0
        %3742 = vmatpush1.msra.mxu0 0.0
        %3743 = vmatprep.subr.mxu0 0.0
        %3744 = vmatpush1.msra.mxu0 0.0
        %3745 = vmatprep.subr.mxu0 0.0
        %3746 = vmatpush1.msra.mxu0 0.0
        %3747 = vmatprep.subr.mxu0 0.0
        %3748 = vmatpush1.msra.mxu0 0.0
        %3749 = vmatprep.subr.mxu0 0.0
        %3750 = vmatpush1.msra.mxu0 0.0
        %3751 = vmatprep.subr.mxu0 0.0
        %3752 = vmatpush1.msra.mxu0 0.0
        %3753 = vmatprep.subr.mxu0 0.0
        %3754 = vmatpush1.msra.mxu0 0.0
        %3755 = vmatprep.subr.mxu0 0.0
        %3756 = vmatpush1.msra.mxu0 0.0
        %3757 = vmatprep.subr.mxu0 0.0
        %3758 = vmatpush1.msra.mxu0 0.0
        %3759 = vmatprep.subr.mxu0 0.0
        %3760 = vmatpush1.msra.mxu0 0.0
        %3761 = vmatprep.subr.mxu0 0.0
        %3762 = vmatpush1.msra.mxu0 0.0
        %3763 = vmatprep.subr.mxu0 0.0
        %3764 = vmatpush1.msra.mxu0 0.0
        %3765 = vmatprep.subr.mxu0 0.0
        %3766 = vmatpush1.msra.mxu0 0.0
        %3767 = vmatprep.subr.mxu0 0.0
        %3768 = vmatpush1.msra.mxu0 0.0
        %3769 = vmatprep.subr.mxu0 0.0
        %3770 = vmatpush1.msra.mxu0 0.0
        %3771 = vmatprep.subr.mxu0 0.0
        %3772 = vmatpush1.msra.mxu0 0.0
        %3773 = vmatprep.mubr.f32.mxu0 0.0
        %3774 = vmatmul.mubr.f32.gmra.mrb[0].mxu0 %v3698
        %v3775 = vpop.f32.mrb[0].mxu0
        %v3776 = vadd.f32 %v3696, %v3775
        %v3777 = vpop.f32.mrb[0].mxu0
        %3778 = vmatprep.mubr.f32.mxu0 0.0
        %3779 = vmatmul.mubr.f32.gmra.mrb[0].mxu0 %v3701
        %v3780 = vpop.f32.mrb[0].mxu0
        %v3781 = vadd.f32 %v3696, %v3780
        %v3782 = vpop.f32.mrb[0].mxu0
        %3783 = vmatprep.mubr.f32.mxu0 0.0
        %3784 = vmatmul.mubr.f32.gmra.mrb[0].mxu0 %v3704
        %v3785 = vpop.f32.mrb[0].mxu0
        %v3786 = vadd.f32 %v3696, %v3785
        %v3787 = vpop.f32.mrb[0].mxu0
        %3788 = vmatprep.mubr.f32.mxu0 0.0
        %3789 = vmatmul.mubr.f32.gmra.mrb[0].mxu0 %v3707
        %v3790 = vpop.f32.mrb[0].mxu0
        %v3791 = vadd.f32 %v3696, %v3790
        %v3792 = vpop.f32.mrb[0].mxu0
        %3793 = vdwg.mxu0
        %v3794 = vmul.f32 %v3776, 0.5
        %v3795 = vmul.f32 %v3781, 0.5
        %v3796 = vmul.f32 %v3786, 0.5
        %v3797 = vmul.f32 %v3791, 0.5
        %v3798 = vmul.f32 %v3776, 0.70710677
        %v3799 = vmul.f32 %v3781, 0.70710677
        %v3800 = vmul.f32 %v3786, 0.70710677
        %v3801 = vmul.f32 %v3791, 0.70710677
        %vm3802 = vcmp.ge.f32.partialorder %v3798, 0.0
        %vm3803 = vcmp.ge.f32.partialorder %v3799, 0.0
        %vm3804 = vcmp.ge.f32.partialorder %v3800, 0.0
        %vm3805 = vcmp.ge.f32.partialorder %v3801, 0.0
        %v3806 = vsel %vm3802, 1.0, -1.0
        %v3807 = vsel %vm3803, 1.0, -1.0
        %v3808 = vsel %vm3804, 1.0, -1.0
        %v3809 = vsel %vm3805, 1.0, -1.0
        %v3810 = vand.u32 2147483647, %v3798
        %v3811 = vand.u32 2147483647, %v3799
        %v3812 = vand.u32 2147483647, %v3800
        %v3813 = vand.u32 2147483647, %v3801
        %v3814 = vmul.f32 %v3810, 0.3275911
        %v3815 = vmul.f32 %v3811, 0.3275911
        %v3816 = vmul.f32 %v3812, 0.3275911
        %v3817 = vmul.f32 %v3813, 0.3275911
        %v3818 = vadd.f32 %v3814, 1.0
        %v3819 = vadd.f32 %v3815, 1.0
        %v3820 = vadd.f32 %v3816, 1.0
        %v3821 = vadd.f32 %v3817, 1.0
        %v3822 = vrcp.pop %v3818
        %v3823 = vmul.f32 1.0, %v3822
        %v3824 = vrcp.pop %v3819
        %v3825 = vmul.f32 1.0, %v3824
        %v3826 = vrcp.pop %v3820
        %v3827 = vmul.f32 1.0, %v3826
        %v3828 = vrcp.pop %v3821
        %v3829 = vmul.f32 1.0, %v3828
        %v3830 = vmul.f32 %v3823, 1.0614054
        %v3831 = vmul.f32 %v3825, 1.0614054
        %v3832 = vmul.f32 %v3827, 1.0614054
        %v3833 = vmul.f32 %v3829, 1.0614054
        %v3834 = vadd.f32 %v3830, -1.4531521
        %v3835 = vadd.f32 %v3831, -1.4531521
        %v3836 = vadd.f32 %v3832, -1.4531521
        %v3837 = vadd.f32 %v3833, -1.4531521
        %v3838 = vmul.f32 %v3834, %v3823
        %v3839 = vmul.f32 %v3835, %v3825
        %v3840 = vmul.f32 %v3836, %v3827
        %v3841 = vmul.f32 %v3837, %v3829
        %v3842 = vadd.f32 %v3838, 1.4214138
        %v3843 = vadd.f32 %v3839, 1.4214138
        %v3844 = vadd.f32 %v3840, 1.4214138
        %v3845 = vadd.f32 %v3841, 1.4214138
        %v3846 = vmul.f32 %v3842, %v3823
        %v3847 = vmul.f32 %v3843, %v3825
        %v3848 = vmul.f32 %v3844, %v3827
        %v3849 = vmul.f32 %v3845, %v3829
        %v3850 = vadd.f32 %v3846, -0.28449672
        %v3851 = vadd.f32 %v3847, -0.28449672
        %v3852 = vadd.f32 %v3848, -0.28449672
        %v3853 = vadd.f32 %v3849, -0.28449672
        %v3854 = vmul.f32 %v3850, %v3823
        %v3855 = vmul.f32 %v3851, %v3825
        %v3856 = vmul.f32 %v3852, %v3827
        %v3857 = vmul.f32 %v3853, %v3829
        %v3858 = vadd.f32 %v3854, 0.2548296
        %v3859 = vadd.f32 %v3855, 0.2548296
        %v3860 = vadd.f32 %v3856, 0.2548296
        %v3861 = vadd.f32 %v3857, 0.2548296
        %v3862 = vmul.f32 %v3858, %v3823
        %v3863 = vmul.f32 %v3859, %v3825
        %v3864 = vmul.f32 %v3860, %v3827
        %v3865 = vmul.f32 %v3861, %v3829
        %v3866 = vsub.f32 0.0, %v3810
        %v3867 = vsub.f32 0.0, %v3811
        %v3868 = vsub.f32 0.0, %v3812
        %v3869 = vsub.f32 0.0, %v3813
        %v3870 = vmul.f32 %v3866, %v3810
        %v3871 = vmul.f32 %v3867, %v3811
        %v3872 = vmul.f32 %v3868, %v3812
        %v3873 = vmul.f32 %v3869, %v3813
        %v3874 = vmul.f32 %v3870, 1.442695
        %v3875 = vpow.pop %v3874
        %v3876 = vmul.f32 %v3871, 1.442695
        %v3877 = vpow.pop %v3876
        %v3878 = vmul.f32 %v3872, 1.442695
        %v3879 = vpow.pop %v3878
        %v3880 = vmul.f32 %v3873, 1.442695
        %v3881 = vpow.pop %v3880
        %v3882 = vmul.f32 %v3862, %v3875
        %v3883 = vmul.f32 %v3863, %v3877
        %v3884 = vmul.f32 %v3864, %v3879
        %v3885 = vmul.f32 %v3865, %v3881
        %v3886 = vsub.f32 1.0, %v3882
        %v3887 = vsub.f32 1.0, %v3883
        %v3888 = vsub.f32 1.0, %v3884
        %v3889 = vsub.f32 1.0, %v3885
        %v3890 = vmul.f32 %v3806, %v3886
        %v3891 = vmul.f32 %v3807, %v3887
        %v3892 = vmul.f32 %v3808, %v3888
        %v3893 = vmul.f32 %v3809, %v3889
        %v3894 = vadd.f32 %v3890, 1.0
        %v3895 = vadd.f32 %v3891, 1.0
        %v3896 = vadd.f32 %v3892, 1.0
        %v3897 = vadd.f32 %v3893, 1.0
        %v3898 = vmul.f32 %v3794, %v3894
        %v3899 = vmul.f32 %v3795, %v3895
        %v3900 = vmul.f32 %v3796, %v3896
        %v3901 = vmul.f32 %v3797, %v3897
        %3903 = vset.pattern.permute.xlu0 32
        %3904 = vperm.xlu0 %3903, %v397
        %v3905 = vpop.permute.xlu0 %3904
        %v3907 = vsel %vm488, %v397, 0
        %v3910 = vsel %vm488, %v3898, 0
        %v3913 = vsel %vm488, %v3899, 0
        %v3916 = vsel %vm488, %v3900, 0
        %v3919 = vsel %vm488, %v3901, 0
        %3921 = vmatprep.subr.mxu0 0.0
        %3922 = vmatpush1.xpose.msra.mxu0 %v3910
        %3923 = vmatprep.subr.mxu0 0.0
        %3924 = vmatpush1.xpose.msra.mxu0 %v3913
        %3925 = vmatprep.subr.mxu0 0.0
        %3926 = vmatpush1.xpose.msra.mxu0 %v3916
        %3927 = vmatprep.subr.mxu0 0.0
        %3928 = vmatpush1.xpose.msra.mxu0 %v3919
        %3929 = vmatprep.subr.mxu0 0.0
        %3930 = vmatpush1.xpose.msra.mxu0 0.0
        %3931 = vmatprep.subr.mxu0 0.0
        %3932 = vmatpush1.xpose.msra.mxu0 0.0
        %3933 = vmatprep.subr.mxu0 0.0
        %3934 = vmatpush1.xpose.msra.mxu0 0.0
        %3935 = vmatprep.subr.mxu0 0.0
        %3936 = vmatpush1.xpose.msra.mxu0 0.0
        %3937 = vmatprep.subr.mxu0 0.0
        %3938 = vmatpush1.xpose.msra.mxu0 0.0
        %3939 = vmatprep.subr.mxu0 0.0
        %3940 = vmatpush1.xpose.msra.mxu0 0.0
        %3941 = vmatprep.subr.mxu0 0.0
        %3942 = vmatpush1.xpose.msra.mxu0 0.0
        %3943 = vmatprep.subr.mxu0 0.0
        %3944 = vmatpush1.xpose.msra.mxu0 0.0
        %3945 = vmatprep.subr.mxu0 0.0
        %3946 = vmatpush1.xpose.msra.mxu0 0.0
        %3947 = vmatprep.subr.mxu0 0.0
        %3948 = vmatpush1.xpose.msra.mxu0 0.0
        %3949 = vmatprep.subr.mxu0 0.0
        %3950 = vmatpush1.xpose.msra.mxu0 0.0
        %3951 = vmatprep.subr.mxu0 0.0
        %3952 = vmatpush1.xpose.msra.mxu0 0.0
        %3953 = vmatprep.subr.mxu0 0.0
        %3954 = vmatpush1.xpose.msra.mxu0 0.0
        %3955 = vmatprep.subr.mxu0 0.0
        %3956 = vmatpush1.xpose.msra.mxu0 0.0
        %3957 = vmatprep.subr.mxu0 0.0
        %3958 = vmatpush1.xpose.msra.mxu0 0.0
        %3959 = vmatprep.subr.mxu0 0.0
        %3960 = vmatpush1.xpose.msra.mxu0 0.0
        %3961 = vmatprep.subr.mxu0 0.0
        %3962 = vmatpush1.xpose.msra.mxu0 0.0
        %3963 = vmatprep.subr.mxu0 0.0
        %3964 = vmatpush1.xpose.msra.mxu0 0.0
        %3965 = vmatprep.subr.mxu0 0.0
        %3966 = vmatpush1.xpose.msra.mxu0 0.0
        %3967 = vmatprep.subr.mxu0 0.0
        %3968 = vmatpush1.xpose.msra.mxu0 0.0
        %3969 = vmatprep.subr.mxu0 0.0
        %3970 = vmatpush1.xpose.msra.mxu0 0.0
        %3971 = vmatprep.subr.mxu0 0.0
        %3972 = vmatpush1.xpose.msra.mxu0 0.0
        %3973 = vmatprep.subr.mxu0 0.0
        %3974 = vmatpush1.xpose.msra.mxu0 0.0
        %3975 = vmatprep.subr.mxu0 0.0
        %3976 = vmatpush1.xpose.msra.mxu0 0.0
        %3977 = vmatprep.subr.mxu0 0.0
        %3978 = vmatpush1.xpose.msra.mxu0 0.0
        %3979 = vmatprep.subr.mxu0 0.0
        %3980 = vmatpush1.xpose.msra.mxu0 0.0
        %3981 = vmatprep.subr.mxu0 0.0
        %3982 = vmatpush1.xpose.msra.mxu0 0.0
        %3983 = vmatprep.subr.mxu0 0.0
        %3984 = vmatpush1.xpose.msra.mxu0 0.0
        %3985 = vmatprep.mubr.f32.mxu0 0.0
        %3986 = vmatmul.mubr.f32.gmra.mrb[0].mxu0 %v3907
        %v3987 = vpop.f32.mrb[0].mxu0
        %v3988 = vadd.f32 %v3905, %v3987
        %v3989 = vpop.f32.mrb[0].mxu0
        %3990 = vdwg.mxu0
        %vm3991 = vcmp.eq.f32.partialorder %v2591, 0.0
        %v3992 = vsel %vm3991, -1e+09, %v3988
        %vm3993 = vcmask 253952
        %v3994 = vsel %vm3993, %v3992, -inf
        %3995 = vmax.xlane.f32.xlu0 %v3994
        %v3996 = vpop.xlane.xlu0 %3995
        %v3997 = vsub.f32 %v3992, %v3996
        %v3998 = vmul.f32 %v3997, 1.442695
        %v3999 = vpow.pop %v3998
        %v4000 = vsel %vm3993, %v3999, 0.0
        %4001 = vadd.xlane.f32.xlu0 %v4000
        %v4002 = vpop.xlane.xlu0 %4001
        %v4003 = vrcp.pop %v4002
        %v4004 = vmul.f32 %v3999, %v4003
        %v4006 = vsel %vm488, %v4004, 0
        %4008 = vmatprep.subr.mxu0 0.0
        %4009 = vmatpush1.msra.mxu0 %v3689
        %4010 = vmatprep.subr.mxu0 0.0
        %4011 = vmatpush1.msra.mxu0 %v3690
        %4012 = vmatprep.subr.mxu0 0.0
        %4013 = vmatpush1.msra.mxu0 %v3691
        %4014 = vmatprep.subr.mxu0 0.0
        %4015 = vmatpush1.msra.mxu0 %v3692
        %4016 = vmatprep.subr.mxu0 0.0
        %4017 = vmatpush1.msra.mxu0 0.0
        %4018 = vmatprep.subr.mxu0 0.0
        %4019 = vmatpush1.msra.mxu0 0.0
        %4020 = vmatprep.subr.mxu0 0.0
        %4021 = vmatpush1.msra.mxu0 0.0
        %4022 = vmatprep.subr.mxu0 0.0
        %4023 = vmatpush1.msra.mxu0 0.0
        %4024 = vmatprep.subr.mxu0 0.0
        %4025 = vmatpush1.msra.mxu0 0.0
        %4026 = vmatprep.subr.mxu0 0.0
        %4027 = vmatpush1.msra.mxu0 0.0
        %4028 = vmatprep.subr.mxu0 0.0
        %4029 = vmatpush1.msra.mxu0 0.0
        %4030 = vmatprep.subr.mxu0 0.0
        %4031 = vmatpush1.msra.mxu0 0.0
        %4032 = vmatprep.subr.mxu0 0.0
        %4033 = vmatpush1.msra.mxu0 0.0
        %4034 = vmatprep.subr.mxu0 0.0
        %4035 = vmatpush1.msra.mxu0 0.0
        %4036 = vmatprep.subr.mxu0 0.0
        %4037 = vmatpush1.msra.mxu0 0.0
        %4038 = vmatprep.subr.mxu0 0.0
        %4039 = vmatpush1.msra.mxu0 0.0
        %4040 = vmatprep.subr.mxu0 0.0
        %4041 = vmatpush1.msra.mxu0 0.0
        %4042 = vmatprep.subr.mxu0 0.0
        %4043 = vmatpush1.msra.mxu0 0.0
        %4044 = vmatprep.subr.mxu0 0.0
        %4045 = vmatpush1.msra.mxu0 0.0
        %4046 = vmatprep.subr.mxu0 0.0
        %4047 = vmatpush1.msra.mxu0 0.0
        %4048 = vmatprep.subr.mxu0 0.0
        %4049 = vmatpush1.msra.mxu0 0.0
        %4050 = vmatprep.subr.mxu0 0.0
        %4051 = vmatpush1.msra.mxu0 0.0
        %4052 = vmatprep.subr.mxu0 0.0
        %4053 = vmatpush1.msra.mxu0 0.0
        %4054 = vmatprep.subr.mxu0 0.0
        %4055 = vmatpush1.msra.mxu0 0.0
        %4056 = vmatprep.subr.mxu0 0.0
        %4057 = vmatpush1.msra.mxu0 0.0
        %4058 = vmatprep.subr.mxu0 0.0
        %4059 = vmatpush1.msra.mxu0 0.0
        %4060 = vmatprep.subr.mxu0 0.0
        %4061 = vmatpush1.msra.mxu0 0.0
        %4062 = vmatprep.subr.mxu0 0.0
        %4063 = vmatpush1.msra.mxu0 0.0
        %4064 = vmatprep.subr.mxu0 0.0
        %4065 = vmatpush1.msra.mxu0 0.0
        %4066 = vmatprep.subr.mxu0 0.0
        %4067 = vmatpush1.msra.mxu0 0.0
        %4068 = vmatprep.subr.mxu0 0.0
        %4069 = vmatpush1.msra.mxu0 0.0
        %4070 = vmatprep.subr.mxu0 0.0
        %4071 = vmatpush1.msra.mxu0 0.0
        %4072 = vmatprep.mubr.f32.mxu0 0.0
        %4073 = vmatmul.mubr.f32.gmra.mrb[0].mxu0 %v4006
        %v4074 = vpop.f32.mrb[0].mxu0
        %v4075 = vadd.f32 0.0, %v4074
        %v4076 = vpop.f32.mrb[0].mxu0
        %4077 = vdwg.mxu0
        %vm4078 = vcmask 516096
        %4079 = vst.msk [vmem:[%s350] sm:$0x1] %vm4078, %v4075
        %s4080 = sand.u32 %s235, 1
        %s4081 = scalar_lea.sflag [#allocation3], %s4080
        %s4082 = sand.u32 %s235, 1
        %s4083 = scalar_lea.vmem [#allocation2], %s4082
        // Predicated region
        $region57: #{fuse_model_forward.1} parent=55 // pred_check
          %p4084 = pneg %p245
        $region58: #{fuse_model_forward.1} parent=55 // pred_check_branch
          %4086 = sbr.rel (%p4084) target = $region60
        $region59: #{fuse_model_forward.1} parent=55 // pred_region
          %s4088 = ssub.s32 16, 16
          %4089 = vsyncadd %s4081, %s4088
          %s4090 = smul.addr %s23, 16
          %s4091 = scalar_lea.hbm %s9, %s4090
          %s4093 = sshll.u32 %s4083, 4
          %s4094 = int_to_ptr.vmem [resolvable:$true] %s4093
          %4096 = dma.vmem_to_hbm [thread:$0]  %s4094, 16, %s4091, %s4081
        $region60: #{fuse_model_forward.1} parent=55 // pred_fallthru
          _
      $region56: #{fuse_model_forward.1} parent=5 // pred_fallthru
        _
      %p4097 = scmp.le.s32.totalorder 2, %s18
      // Predicated region
      $region61: #{fuse_model_forward.1} parent=5 // pred_check
        %p4098 = pneg %p4097
      $region62: #{fuse_model_forward.1} parent=5 // pred_check_branch
        %4100 = sbr.rel (%p4098) target = $region64
      $region63: #{fuse_model_forward.1} parent=5 // pred_region
        %s4101 = ssub.s32 %s18, 2
        // Predicated region
        $region65: #{fuse_model_forward.1} parent=63 // pred_check
          %p4102 = pneg %p251
        $region66: #{fuse_model_forward.1} parent=63 // pred_check_branch
          %4104 = sbr.rel (%p4102) target = $region68
        $region67: #{fuse_model_forward.1} parent=63 // pred_region
          %s4105 = sand.u32 %s236, 1
          %s4106 = scalar_lea.sflag [#allocation3], %s4105
          %s4107 = sand.u32 %s236, 1
          %s4108 = scalar_lea.vmem [#allocation2], %s4107
          %4109 = dma.done %s4106, 16
        $region68: #{fuse_model_forward.1} parent=63 // pred_fallthru
          _
      $region64: #{fuse_model_forward.1} parent=5 // pred_fallthru
        _
    $region6: #{fuse_model_forward.1} parent=1 // loop_footer
      %s22 = sadd.s32 1, %s18
    $region7: #{fuse_model_forward.1} parent=1 // loop_footer_branch
      %17 = sbr.rel target = $region3
    $region8: #{fuse_model_forward.1} parent=1 // loop_exit
      _
    %4110 = vsyncpa [#allocation3], 1
    %s4111 = scalar_lea.sflag [#allocation3], 1
    %4112 = vsyncpa %s4111, 1

</llo_original>
